<compile_context>
chip_gen: v7x
topology: tpu7x:2x2x1
jax: 0.10.0
libtpu: 0.0.40
codegen_flags: <defaults>
</compile_context>

<pallas_src>
import functools
import math

import jax
import jax.numpy as jnp
from jax.experimental import pallas as pl
from jax.experimental.pallas import tpu as pltpu


# --------------------- Kernel 1: trilinear upsample x2 (align_corners=False) ---------------------

def _upsample2x_kernel(x_ref, o_ref, pad_ref):
    """x_ref: (1, D, H, W, C) f32.
    o_ref: (1, 8, D, H, W, C); parity p = rd*4 + rh*2 + rw, out[2d+rd, 2h+rh, 2w+rw] == o[p, d, h, w].
    pad_ref: (D+2, H+2, W+2, C) f32 scratch (edge-replicated copy == index clamping)."""
    _, D, H, W, C = x_ref.shape
    x = x_ref[0]

    # Build edge-replicated padded copy axis by axis (corners/edges become correct too).
    pad_ref[1:D + 1, 1:H + 1, 1:W + 1, :] = x
    pad_ref[0:1, 1:H + 1, 1:W + 1, :] = x[0:1]
    pad_ref[D + 1:D + 2, 1:H + 1, 1:W + 1, :] = x[D - 1:D]
    pad_ref[:, 0:1, 1:W + 1, :] = pad_ref[:, 1:2, 1:W + 1, :]
    pad_ref[:, H + 1:H + 2, 1:W + 1, :] = pad_ref[:, H:H + 1, 1:W + 1, :]
    pad_ref[:, :, 0:1, :] = pad_ref[:, :, 1:2, :]
    pad_ref[:, :, W + 1:W + 2, :] = pad_ref[:, :, W:W + 1, :]

    # Per axis: out[2m + r] = 0.75*in[m] + 0.25*in[clamp(m + (2r-1))]; trilinear is separable,
    # so each parity combo is an 8-term weighted sum of shifted (clamped) slices.
    for rd in range(2):
        sd = 2 * rd - 1
        for rh in range(2):
            sh = 2 * rh - 1
            for rw in range(2):
                sw = 2 * rw - 1
                acc = None
                for a in range(2):          # 0 -> center (0.75), 1 -> neighbor (0.25)
                    od = 1 + a * sd
                    for b in range(2):
                        oh = 1 + b * sh
                        for c in range(2):
                            ow = 1 + c * sw
                            wgt = ((0.75 if a == 0 else 0.25)
                                   * (0.75 if b == 0 else 0.25)
                                   * (0.75 if c == 0 else 0.25))
                            term = wgt * pad_ref[od:od + D, oh:oh + H, ow:ow + W, :]
                            acc = term if acc is None else acc + term
                o_ref[0, rd * 4 + rh * 2 + rw] = acc.astype(o_ref.dtype)


def upsample_trilinear2x(x_cl, out_dtype):
    """x_cl: (B, D, H, W, C) f32 -> (B, 2D, 2H, 2W, C) in out_dtype."""
    B, D, H, W, C = x_cl.shape
    u8 = pl.pallas_call(
        _upsample2x_kernel,
        out_shape=jax.ShapeDtypeStruct((B, 8, D, H, W, C), out_dtype),
        grid=(B,),
        in_specs=[pl.BlockSpec((1, D, H, W, C), lambda b: (b, 0, 0, 0, 0))],
        out_specs=pl.BlockSpec((1, 8, D, H, W, C), lambda b: (b, 0, 0, 0, 0, 0)),
        scratch_shapes=[pltpu.VMEM((D + 2, H + 2, W + 2, C), jnp.float32)],
        compiler_params=pltpu.CompilerParams(dimension_semantics=("parallel",)),
    )(x_cl)
    # (B, rd, rh, rw, D, H, W, C) -> interleave parities (cheap XLA-side reshuffle).
    u8 = u8.reshape(B, 2, 2, 2, D, H, W, C).transpose(0, 4, 1, 5, 2, 6, 3, 7)
    return u8.reshape(B, 2 * D, 2 * H, 2 * W, C)


# ------------- Kernel 2: concat(skip) + conv1+BN+ReLU + conv2+BN+ReLU (fused) -------------

def _convs_kernel(*args, has_skip):
    if has_skip:
        (up_ref, skip_ref, w1u_ref, w1s_ref, s1_ref, b1_ref,
         w2_ref, s2_ref, b2_ref, o_ref, pad_u, pad_s, pad_m) = args
    else:
        (up_ref, w1u_ref, s1_ref, b1_ref,
         w2_ref, s2_ref, b2_ref, o_ref, pad_u, pad_m) = args
        skip_ref = w1s_ref = pad_s = None

    _, D2, H2, W2, c_up = up_ref.shape
    c_out = o_ref.shape[4]
    N = D2 * H2 * W2
    cdt = pad_u.dtype  # bf16 compute dtype for the MXU operands

    # Stage conv1 inputs into zero-padded VMEM scratch (padding=1 each side).
    pad_u[...] = jnp.zeros(pad_u.shape, cdt)
    pad_u[1:D2 + 1, 1:H2 + 1, 1:W2 + 1, :] = up_ref[0].astype(cdt)
    if has_skip:
        pad_s[...] = jnp.zeros(pad_s.shape, cdt)
        pad_s[1:D2 + 1, 1:H2 + 1, 1:W2 + 1, :] = skip_ref[0].astype(cdt)

    def tap_slice(ref, kd, kh, kw, c):
        return ref[kd:kd + D2, kh:kh + H2, kw:kw + W2, :].reshape(N, c)

    # ---- conv1: 27 shifted matmuls (bf16 x bf16 -> fp32 accumulate) ----
    acc = jnp.zeros((N, c_out), jnp.float32)
    for kd in range(3):
        for kh in range(3):
            for kw in range(3):
                t = kd * 9 + kh * 3 + kw
                acc = acc + jnp.dot(tap_slice(pad_u, kd, kh, kw, c_up), w1u_ref[t],
                                    preferred_element_type=jnp.float32)
                if has_skip:
                    c_sk = pad_s.shape[3]
                    acc = acc + jnp.dot(tap_slice(pad_s, kd, kh, kw, c_sk), w1s_ref[t],
                                        preferred_element_type=jnp.float32)
    # folded eval-mode BatchNorm + ReLU (fp32)
    y = jnp.maximum(acc * s1_ref[...] + b1_ref[...], 0.0)

    # ---- conv2 (intermediate stays in VMEM) ----
    pad_m[...] = jnp.zeros(pad_m.shape, cdt)
    pad_m[1:D2 + 1, 1:H2 + 1, 1:W2 + 1, :] = y.reshape(D2, H2, W2, c_out).astype(cdt)

    acc2 = jnp.zeros((N, c_out), jnp.float32)
    for kd in range(3):
        for kh in range(3):
            for kw in range(3):
                t = kd * 9 + kh * 3 + kw
                acc2 = acc2 + jnp.dot(tap_slice(pad_m, kd, kh, kw, c_out), w2_ref[t],
                                      preferred_element_type=jnp.float32)
    z = jnp.maximum(acc2 * s2_ref[...] + b2_ref[...], 0.0)
    o_ref[0] = z.reshape(D2, H2, W2, c_out).astype(o_ref.dtype)


def _replicated_spec(arr):
    n = arr.ndim
    return pl.BlockSpec(arr.shape, lambda b, _n=n: (0,) * _n)


# --------------------------------------- wrapper ---------------------------------------

def decoder_block_forward(x, skip, params, *, compute_dtype=jnp.bfloat16):
    """Pallas forward of DecoderBlock (eval mode).

    x:    (B, Cin, D, H, W) float32  (PyTorch NCDHW layout)
    skip: (B, Cskip, 2D, 2H, 2W) float32 or None
    returns (B, Cout, 2D, 2H, 2W) float32
    """
    B, c_in, D, H, W = x.shape
    D2, H2, W2 = 2 * D, 2 * H, 2 * W
    c_out = params["w1"].shape[0]
    has_skip = skip is not None
    c_skip = skip.shape[1] if has_skip else 0
    assert params["w1"].shape[1] == c_in + c_skip

    # --- trilinear x2 upsample (Pallas kernel), channels-last ---
    x_cl = jnp.transpose(x, (0, 2, 3, 4, 1)).astype(jnp.float32)
    up = upsample_trilinear2x(x_cl, compute_dtype)               # (B, D2, H2, W2, Cin)

    # --- fold eval-mode BatchNorm into per-channel scale/bias ---
    eps = 1e-5
    s1 = params["bn1_gamma"] * jax.lax.rsqrt(params["bn1_var"] + eps)
    b1 = params["bn1_beta"] - params["bn1_mean"] * s1
    s2 = params["bn2_gamma"] * jax.lax.rsqrt(params["bn2_var"] + eps)
    b2 = params["bn2_beta"] - params["bn2_mean"] * s2

    # conv weights: torch (O, I, 3, 3, 3) -> (27, I, O), bf16 for the MXU
    def prep_w(w):
        o, i = w.shape[0], w.shape[1]
        return jnp.transpose(w, (2, 3, 4, 1, 0)).reshape(27, i, o).astype(compute_dtype)

    w1 = prep_w(params["w1"])
    w1u, w1s = w1[:, :c_in, :], w1[:, c_in:, :]
    w2 = prep_w(params["w2"])
    s1 = s1.reshape(1, c_out).astype(jnp.float32)
    b1 = b1.reshape(1, c_out).astype(jnp.float32)
    s2 = s2.reshape(1, c_out).astype(jnp.float32)
    b2 = b2.reshape(1, c_out).astype(jnp.float32)

    inputs = [up]
    in_specs = [pl.BlockSpec((1, D2, H2, W2, c_in), lambda b: (b, 0, 0, 0, 0))]
    scratch = [pltpu.VMEM((D2 + 2, H2 + 2, W2 + 2, c_in), compute_dtype)]
    if has_skip:
        skip_cl = jnp.transpose(skip, (0, 2, 3, 4, 1)).astype(compute_dtype)
        inputs.append(skip_cl)
        in_specs.append(pl.BlockSpec((1, D2, H2, W2, c_skip), lambda b: (b, 0, 0, 0, 0)))
        scratch.append(pltpu.VMEM((D2 + 2, H2 + 2, W2 + 2, c_skip), compute_dtype))
        weights = [w1u, w1s, s1, b1, w2, s2, b2]
    else:
        weights = [w1u, s1, b1, w2, s2, b2]
    inputs += weights
    in_specs += [_replicated_spec(w) for w in weights]
    scratch.append(pltpu.VMEM((D2 + 2, H2 + 2, W2 + 2, c_out), compute_dtype))

    N = D2 * H2 * W2
    c1 = c_in + c_skip
    flops = int(2 * B * 27 * N * (c1 * c_out + c_out * c_out))
    bytes_accessed = int(sum(a.size * a.dtype.itemsize for a in inputs) + B * N * c_out * 4)

    out_cl = pl.pallas_call(
        functools.partial(_convs_kernel, has_skip=has_skip),
        out_shape=jax.ShapeDtypeStruct((B, D2, H2, W2, c_out), jnp.float32),
        grid=(B,),
        in_specs=in_specs,
        out_specs=pl.BlockSpec((1, D2, H2, W2, c_out), lambda b: (b, 0, 0, 0, 0)),
        scratch_shapes=scratch,
        compiler_params=pltpu.CompilerParams(dimension_semantics=("parallel",)),
        cost_estimate=pl.CostEstimate(flops=flops, transcendentals=0,
                                      bytes_accessed=bytes_accessed),
    )(*inputs)
    return jnp.transpose(out_cl, (0, 4, 1, 2, 3))


# --------------------------- pure-JAX reference (sanity check) ---------------------------

def _upsample_ref(x):
    """nn.Upsample(scale_factor=2, mode='trilinear', align_corners=False) semantics."""
    def up_axis(v, axis):
        n = v.shape[axis]
        idx = jnp.arange(n)
        minus = jnp.take(v, jnp.clip(idx - 1, 0, n - 1), axis=axis)
        plus = jnp.take(v, jnp.clip(idx + 1, 0, n - 1), axis=axis)
        even = 0.75 * v + 0.25 * minus
        odd = 0.75 * v + 0.25 * plus
        out = jnp.stack([even, odd], axis=axis + 1)
        shp = list(v.shape)
        shp[axis] = 2 * n
        return out.reshape(shp)
    for ax in (2, 3, 4):
        x = up_axis(x, ax)
    return x


def decoder_block_ref(x, skip, params):
    eps = 1e-5
    h = _upsample_ref(x)
    if skip is not None:
        h = jnp.concatenate([h, skip], axis=1)

    def conv_bn_relu(v, w, g, bta, mu, var):
        y = jax.lax.conv_general_dilated(
            v, w, window_strides=(1, 1, 1), padding=((1, 1), (1, 1), (1, 1)),
            dimension_numbers=("NCDHW", "OIDHW", "NCDHW"))
        shp = (1, -1, 1, 1, 1)
        y = (y - mu.reshape(shp)) * jax.lax.rsqrt(var.reshape(shp) + eps) * g.reshape(shp) + bta.reshape(shp)
        return jnp.maximum(y, 0.0)

    h = conv_bn_relu(h, params["w1"], params["bn1_gamma"], params["bn1_beta"],
                     params["bn1_mean"], params["bn1_var"])
    h = conv_bn_relu(h, params["w2"], params["bn2_gamma"], params["bn2_beta"],
                     params["bn2_mean"], params["bn2_var"])
    return h


# ------------------------------------ param init ------------------------------------

def init_params(key, c_in, c_skip, c_out):
    ks = jax.random.split(key, 10)
    c1 = c_in + c_skip

    def conv_w(k, o, i):
        lim = 1.0 / math.sqrt(i * 27)
        return jax.random.uniform(k, (o, i, 3, 3, 3), jnp.float32, -lim, lim)

    return {
        "w1": conv_w(ks[0], c_out, c1),
        "bn1_gamma": jax.random.uniform(ks[1], (c_out,), jnp.float32, 0.5, 1.5),
        "bn1_beta": jax.random.uniform(ks[2], (c_out,), jnp.float32, -0.5, 0.5),
        "bn1_mean": jax.random.uniform(ks[3], (c_out,), jnp.float32, -0.5, 0.5),
        "bn1_var": jax.random.uniform(ks[4], (c_out,), jnp.float32, 0.5, 1.5),
        "w2": conv_w(ks[5], c_out, c_out),
        "bn2_gamma": jax.random.uniform(ks[6], (c_out,), jnp.float32, 0.5, 1.5),
        "bn2_beta": jax.random.uniform(ks[7], (c_out,), jnp.float32, -0.5, 0.5),
        "bn2_mean": jax.random.uniform(ks[8], (c_out,), jnp.float32, -0.5, 0.5),
        "bn2_var": jax.random.uniform(ks[9], (c_out,), jnp.float32, 0.5, 1.5),
    }


# ---------------------------------------- main ----------------------------------------

if __name__ == "__main__":
    B, C_IN, C_SKIP, C_OUT = 2, 8, 4, 16
    D = H = W = 4

    key = jax.random.PRNGKey(0)
    kx, ksk, kp1, kp2 = jax.random.split(key, 4)
    x = jax.random.normal(kx, (B, C_IN, D, H, W), jnp.float32)
    skip = jax.random.normal(ksk, (B, C_SKIP, 2 * D, 2 * H, 2 * W), jnp.float32)

    # with skip connection
    params = init_params(kp1, C_IN, C_SKIP, C_OUT)
    out = jax.block_until_ready(decoder_block_forward(x, skip, params))
    ref = decoder_block_ref(x, skip, params)
    assert out.shape == (B, C_OUT, 2 * D, 2 * H, 2 * W)
    err = float(jnp.max(jnp.abs(out - ref)))
    assert jnp.allclose(out, ref, atol=5e-2, rtol=5e-2), f"skip-path mismatch, max|diff|={err}"

    # without skip connection
    params_ns = init_params(kp2, C_IN, 0, C_OUT)
    out_ns = jax.block_until_ready(decoder_block_forward(x, None, params_ns))
    ref_ns = decoder_block_ref(x, None, params_ns)
    err_ns = float(jnp.max(jnp.abs(out_ns - ref_ns)))
    assert jnp.allclose(out_ns, ref_ns, atol=5e-2, rtol=5e-2), f"no-skip mismatch, max|diff|={err_ns}"

    # TODO(synk): BatchNorm is eval-mode only (running stats folded into scale/bias);
    # training-mode batch statistics / running-stat updates are not implemented in-kernel.
    print("KERNEL_OK")
</pallas_src>

<mosaic_0001>
module attributes {stable_mosaic.version = 11 : i64} {
  func.func @_upsample2x_kernel(%arg0: i32, %arg1: memref<1x4x4x4x8xf32, #tpu.memory_space<vmem>>, %arg2: memref<1x8x4x4x4x8xbf16, #tpu.memory_space<vmem>>, %arg3: memref<6x6x6x8xf32, #tpu.memory_space<vmem>>) attributes {dimension_semantics = [#tpu.dimension_semantics<parallel>], iteration_bounds = array<i64: 2>, scalar_prefetch = 0 : i64, scratch_operands = 1 : i64, tpu.core_type = #tpu.core_type<tc>, window_params = [{transform_indices = @transform_0, window_bounds = array<i64: 1, 4, 4, 4, 8>}, {transform_indices = @transform_1, window_bounds = array<i64: 1, 8, 4, 4, 4, 8>}]} {
    %c0 = arith.constant 0 : index
    %c0_0 = arith.constant 0 : index
    %c0_1 = arith.constant 0 : index
    %c0_2 = arith.constant 0 : index
    %c0_3 = arith.constant 0 : index
    %0 = vector.load %arg1[%c0, %c0_0, %c0_1, %c0_2, %c0_3] : memref<1x4x4x4x8xf32, #tpu.memory_space<vmem>>, vector<1x4x4x4x8xf32>
    %1 = vector.shape_cast %0 : vector<1x4x4x4x8xf32> to vector<4x4x4x8xf32>
    %c1 = arith.constant 1 : index
    %c1_4 = arith.constant 1 : index
    %c1_5 = arith.constant 1 : index
    %c0_6 = arith.constant 0 : index
    %2 = vector.load %arg3[%c1, %c1_4, %c1_5, %c0_6] : memref<6x6x6x8xf32, #tpu.memory_space<vmem>>, vector<4x4x4x8xf32>
    tpu.vector_store %arg3[%c1, %c1_4, %c1_5, %c0_6], %1 {strides = array<i32>} : memref<6x6x6x8xf32, #tpu.memory_space<vmem>>, vector<4x4x4x8xf32>,
    %3 = vector.extract_strided_slice %1 {offsets = [0, 0, 0, 0], sizes = [1, 4, 4, 8], strides = [1, 1, 1, 1]} : vector<4x4x4x8xf32> to vector<1x4x4x8xf32>
    %c0_7 = arith.constant 0 : index
    %c1_8 = arith.constant 1 : index
    %c1_9 = arith.constant 1 : index
    %c0_10 = arith.constant 0 : index
    %4 = vector.load %arg3[%c0_7, %c1_8, %c1_9, %c0_10] : memref<6x6x6x8xf32, #tpu.memory_space<vmem>>, vector<1x4x4x8xf32>
    tpu.vector_store %arg3[%c0_7, %c1_8, %c1_9, %c0_10], %3 {strides = array<i32>} : memref<6x6x6x8xf32, #tpu.memory_space<vmem>>, vector<1x4x4x8xf32>,
    %5 = vector.extract_strided_slice %1 {offsets = [3, 0, 0, 0], sizes = [1, 4, 4, 8], strides = [1, 1, 1, 1]} : vector<4x4x4x8xf32> to vector<1x4x4x8xf32>
    %c5 = arith.constant 5 : index
    %c1_11 = arith.constant 1 : index
    %c1_12 = arith.constant 1 : index
    %c0_13 = arith.constant 0 : index
    %6 = vector.load %arg3[%c5, %c1_11, %c1_12, %c0_13] : memref<6x6x6x8xf32, #tpu.memory_space<vmem>>, vector<1x4x4x8xf32>
    tpu.vector_store %arg3[%c5, %c1_11, %c1_12, %c0_13], %5 {strides = array<i32>} : memref<6x6x6x8xf32, #tpu.memory_space<vmem>>, vector<1x4x4x8xf32>,
    %c0_14 = arith.constant 0 : index
    %c1_15 = arith.constant 1 : index
    %c1_16 = arith.constant 1 : index
    %c0_17 = arith.constant 0 : index
    %7 = vector.load %arg3[%c0_14, %c1_15, %c1_16, %c0_17] : memref<6x6x6x8xf32, #tpu.memory_space<vmem>>, vector<6x1x4x8xf32>
    %c0_18 = arith.constant 0 : index
    %c0_19 = arith.constant 0 : index
    %c1_20 = arith.constant 1 : index
    %c0_21 = arith.constant 0 : index
    %8 = vector.load %arg3[%c0_18, %c0_19, %c1_20, %c0_21] : memref<6x6x6x8xf32, #tpu.memory_space<vmem>>, vector<6x1x4x8xf32>
    tpu.vector_store %arg3[%c0_18, %c0_19, %c1_20, %c0_21], %7 {strides = array<i32>} : memref<6x6x6x8xf32, #tpu.memory_space<vmem>>, vector<6x1x4x8xf32>,
    %c0_22 = arith.constant 0 : index
    %c4 = arith.constant 4 : index
    %c1_23 = arith.constant 1 : index
    %c0_24 = arith.constant 0 : index
    %9 = vector.load %arg3[%c0_22, %c4, %c1_23, %c0_24] : memref<6x6x6x8xf32, #tpu.memory_space<vmem>>, vector<6x1x4x8xf32>
    %c0_25 = arith.constant 0 : index
    %c5_26 = arith.constant 5 : index
    %c1_27 = arith.constant 1 : index
    %c0_28 = arith.constant 0 : index
    %10 = vector.load %arg3[%c0_25, %c5_26, %c1_27, %c0_28] : memref<6x6x6x8xf32, #tpu.memory_space<vmem>>, vector<6x1x4x8xf32>
    tpu.vector_store %arg3[%c0_25, %c5_26, %c1_27, %c0_28], %9 {strides = array<i32>} : memref<6x6x6x8xf32, #tpu.memory_space<vmem>>, vector<6x1x4x8xf32>,
    %c0_29 = arith.constant 0 : index
    %c0_30 = arith.constant 0 : index
    %c1_31 = arith.constant 1 : index
    %c0_32 = arith.constant 0 : index
    %11 = vector.load %arg3[%c0_29, %c0_30, %c1_31, %c0_32] : memref<6x6x6x8xf32, #tpu.memory_space<vmem>>, vector<6x6x1x8xf32>
    %c0_33 = arith.constant 0 : index
    %c0_34 = arith.constant 0 : index
    %c0_35 = arith.constant 0 : index
    %c0_36 = arith.constant 0 : index
    %12 = vector.load %arg3[%c0_33, %c0_34, %c0_35, %c0_36] : memref<6x6x6x8xf32, #tpu.memory_space<vmem>>, vector<6x6x1x8xf32>
    tpu.vector_store %arg3[%c0_33, %c0_34, %c0_35, %c0_36], %11 {strides = array<i32>} : memref<6x6x6x8xf32, #tpu.memory_space<vmem>>, vector<6x6x1x8xf32>,
    %c0_37 = arith.constant 0 : index
    %c0_38 = arith.constant 0 : index
    %c4_39 = arith.constant 4 : index
    %c0_40 = arith.constant 0 : index
    %13 = vector.load %arg3[%c0_37, %c0_38, %c4_39, %c0_40] : memref<6x6x6x8xf32, #tpu.memory_space<vmem>>, vector<6x6x1x8xf32>
    %c0_41 = arith.constant 0 : index
    %c0_42 = arith.constant 0 : index
    %c5_43 = arith.constant 5 : index
    %c0_44 = arith.constant 0 : index
    %14 = vector.load %arg3[%c0_41, %c0_42, %c5_43, %c0_44] : memref<6x6x6x8xf32, #tpu.memory_space<vmem>>, vector<6x6x1x8xf32>
    tpu.vector_store %arg3[%c0_41, %c0_42, %c5_43, %c0_44], %13 {strides = array<i32>} : memref<6x6x6x8xf32, #tpu.memory_space<vmem>>, vector<6x6x1x8xf32>,
    %c1_45 = arith.constant 1 : index
    %c1_46 = arith.constant 1 : index
    %c1_47 = arith.constant 1 : index
    %c0_48 = arith.constant 0 : index
    %15 = vector.load %arg3[%c1_45, %c1_46, %c1_47, %c0_48] : memref<6x6x6x8xf32, #tpu.memory_space<vmem>>, vector<4x4x4x8xf32>
    %cst = arith.constant 4.218750e-01 : f32
    %16 = vector.broadcast %cst : f32 to vector<4x4x4x8xf32>
    %17 = arith.mulf %16, %15 : vector<4x4x4x8xf32>
    %c1_49 = arith.constant 1 : index
    %c1_50 = arith.constant 1 : index
    %c0_51 = arith.constant 0 : index
    %c0_52 = arith.constant 0 : index
    %18 = vector.load %arg3[%c1_49, %c1_50, %c0_51, %c0_52] : memref<6x6x6x8xf32, #tpu.memory_space<vmem>>, vector<4x4x4x8xf32>
    %cst_53 = arith.constant 1.406250e-01 : f32
    %19 = vector.broadcast %cst_53 : f32 to vector<4x4x4x8xf32>
    %20 = arith.mulf %19, %18 : vector<4x4x4x8xf32>
    %21 = arith.addf %17, %20 : vector<4x4x4x8xf32>
    %c1_54 = arith.constant 1 : index
    %c0_55 = arith.constant 0 : index
    %c1_56 = arith.constant 1 : index
    %c0_57 = arith.constant 0 : index
    %22 = vector.load %arg3[%c1_54, %c0_55, %c1_56, %c0_57] : memref<6x6x6x8xf32, #tpu.memory_space<vmem>>, vector<4x4x4x8xf32>
    %cst_58 = arith.constant 1.406250e-01 : f32
    %23 = vector.broadcast %cst_58 : f32 to vector<4x4x4x8xf32>
    %24 = arith.mulf %23, %22 : vector<4x4x4x8xf32>
    %25 = arith.addf %21, %24 : vector<4x4x4x8xf32>
    %c1_59 = arith.constant 1 : index
    %c0_60 = arith.constant 0 : index
    %c0_61 = arith.constant 0 : index
    %c0_62 = arith.constant 0 : index
    %26 = vector.load %arg3[%c1_59, %c0_60, %c0_61, %c0_62] : memref<6x6x6x8xf32, #tpu.memory_space<vmem>>, vector<4x4x4x8xf32>
    %cst_63 = arith.constant 4.687500e-02 : f32
    %27 = vector.broadcast %cst_63 : f32 to vector<4x4x4x8xf32>
    %28 = arith.mulf %27, %26 : vector<4x4x4x8xf32>
    %29 = arith.addf %25, %28 : vector<4x4x4x8xf32>
    %c0_64 = arith.constant 0 : index
    %c1_65 = arith.constant 1 : index
    %c1_66 = arith.constant 1 : index
    %c0_67 = arith.constant 0 : index
    %30 = vector.load %arg3[%c0_64, %c1_65, %c1_66, %c0_67] : memref<6x6x6x8xf32, #tpu.memory_space<vmem>>, vector<4x4x4x8xf32>
    %cst_68 = arith.constant 1.406250e-01 : f32
    %31 = vector.broadcast %cst_68 : f32 to vector<4x4x4x8xf32>
    %32 = arith.mulf %31, %30 : vector<4x4x4x8xf32>
    %33 = arith.addf %29, %32 : vector<4x4x4x8xf32>
    %c0_69 = arith.constant 0 : index
    %c1_70 = arith.constant 1 : index
    %c0_71 = arith.constant 0 : index
    %c0_72 = arith.constant 0 : index
    %34 = vector.load %arg3[%c0_69, %c1_70, %c0_71, %c0_72] : memref<6x6x6x8xf32, #tpu.memory_space<vmem>>, vector<4x4x4x8xf32>
    %cst_73 = arith.constant 4.687500e-02 : f32
    %35 = vector.broadcast %cst_73 : f32 to vector<4x4x4x8xf32>
    %36 = arith.mulf %35, %34 : vector<4x4x4x8xf32>
    %37 = arith.addf %33, %36 : vector<4x4x4x8xf32>
    %c0_74 = arith.constant 0 : index
    %c0_75 = arith.constant 0 : index
    %c1_76 = arith.constant 1 : index
    %c0_77 = arith.constant 0 : index
    %38 = vector.load %arg3[%c0_74, %c0_75, %c1_76, %c0_77] : memref<6x6x6x8xf32, #tpu.memory_space<vmem>>, vector<4x4x4x8xf32>
    %cst_78 = arith.constant 4.687500e-02 : f32
    %39 = vector.broadcast %cst_78 : f32 to vector<4x4x4x8xf32>
    %40 = arith.mulf %39, %38 : vector<4x4x4x8xf32>
    %41 = arith.addf %37, %40 : vector<4x4x4x8xf32>
    %c0_79 = arith.constant 0 : index
    %c0_80 = arith.constant 0 : index
    %c0_81 = arith.constant 0 : index
    %c0_82 = arith.constant 0 : index
    %42 = vector.load %arg3[%c0_79, %c0_80, %c0_81, %c0_82] : memref<6x6x6x8xf32, #tpu.memory_space<vmem>>, vector<4x4x4x8xf32>
    %cst_83 = arith.constant 1.562500e-02 : f32
    %43 = vector.broadcast %cst_83 : f32 to vector<4x4x4x8xf32>
    %44 = arith.mulf %43, %42 : vector<4x4x4x8xf32>
    %45 = arith.addf %41, %44 : vector<4x4x4x8xf32>
    %46 = arith.truncf %45 : vector<4x4x4x8xf32> to vector<4x4x4x8xbf16>
    %c0_84 = arith.constant 0 : index
    %c0_85 = arith.constant 0 : index
    %c0_86 = arith.constant 0 : index
    %c0_87 = arith.constant 0 : index
    %c0_88 = arith.constant 0 : index
    %c0_89 = arith.constant 0 : index
    %47 = vector.load %arg2[%c0_84, %c0_85, %c0_86, %c0_87, %c0_88, %c0_89] : memref<1x8x4x4x4x8xbf16, #tpu.memory_space<vmem>>, vector<1x1x4x4x4x8xbf16>
    %48 = vector.shape_cast %47 : vector<1x1x4x4x4x8xbf16> to vector<4x4x4x8xbf16>
    %49 = vector.shape_cast %46 : vector<4x4x4x8xbf16> to vector<1x1x4x4x4x8xbf16>
    tpu.vector_store %arg2[%c0_84, %c0_85, %c0_86, %c0_87, %c0_88, %c0_89], %49 {strides = array<i32>} : memref<1x8x4x4x4x8xbf16, #tpu.memory_space<vmem>>, vector<1x1x4x4x4x8xbf16>,
    %c1_90 = arith.constant 1 : index
    %c1_91 = arith.constant 1 : index
    %c1_92 = arith.constant 1 : index
    %c0_93 = arith.constant 0 : index
    %50 = vector.load %arg3[%c1_90, %c1_91, %c1_92, %c0_93] : memref<6x6x6x8xf32, #tpu.memory_space<vmem>>, vector<4x4x4x8xf32>
    %cst_94 = arith.constant 4.218750e-01 : f32
    %51 = vector.broadcast %cst_94 : f32 to vector<4x4x4x8xf32>
    %52 = arith.mulf %51, %50 : vector<4x4x4x8xf32>
    %c1_95 = arith.constant 1 : index
    %c1_96 = arith.constant 1 : index
    %c2 = arith.constant 2 : index
    %c0_97 = arith.constant 0 : index
    %53 = vector.load %arg3[%c1_95, %c1_96, %c2, %c0_97] : memref<6x6x6x8xf32, #tpu.memory_space<vmem>>, vector<4x4x4x8xf32>
    %cst_98 = arith.constant 1.406250e-01 : f32
    %54 = vector.broadcast %cst_98 : f32 to vector<4x4x4x8xf32>
    %55 = arith.mulf %54, %53 : vector<4x4x4x8xf32>
    %56 = arith.addf %52, %55 : vector<4x4x4x8xf32>
    %c1_99 = arith.constant 1 : index
    %c0_100 = arith.constant 0 : index
    %c1_101 = arith.constant 1 : index
    %c0_102 = arith.constant 0 : index
    %57 = vector.load %arg3[%c1_99, %c0_100, %c1_101, %c0_102] : memref<6x6x6x8xf32, #tpu.memory_space<vmem>>, vector<4x4x4x8xf32>
    %cst_103 = arith.constant 1.406250e-01 : f32
    %58 = vector.broadcast %cst_103 : f32 to vector<4x4x4x8xf32>
    %59 = arith.mulf %58, %57 : vector<4x4x4x8xf32>
    %60 = arith.addf %56, %59 : vector<4x4x4x8xf32>
    %c1_104 = arith.constant 1 : index
    %c0_105 = arith.constant 0 : index
    %c2_106 = arith.constant 2 : index
    %c0_107 = arith.constant 0 : index
    %61 = vector.load %arg3[%c1_104, %c0_105, %c2_106, %c0_107] : memref<6x6x6x8xf32, #tpu.memory_space<vmem>>, vector<4x4x4x8xf32>
    %cst_108 = arith.constant 4.687500e-02 : f32
    %62 = vector.broadcast %cst_108 : f32 to vector<4x4x4x8xf32>
    %63 = arith.mulf %62, %61 : vector<4x4x4x8xf32>
    %64 = arith.addf %60, %63 : vector<4x4x4x8xf32>
    %c0_109 = arith.constant 0 : index
    %c1_110 = arith.constant 1 : index
    %c1_111 = arith.constant 1 : index
    %c0_112 = arith.constant 0 : index
    %65 = vector.load %arg3[%c0_109, %c1_110, %c1_111, %c0_112] : memref<6x6x6x8xf32, #tpu.memory_space<vmem>>, vector<4x4x4x8xf32>
    %cst_113 = arith.constant 1.406250e-01 : f32
    %66 = vector.broadcast %cst_113 : f32 to vector<4x4x4x8xf32>
    %67 = arith.mulf %66, %65 : vector<4x4x4x8xf32>
    %68 = arith.addf %64, %67 : vector<4x4x4x8xf32>
    %c0_114 = arith.constant 0 : index
    %c1_115 = arith.constant 1 : index
    %c2_116 = arith.constant 2 : index
    %c0_117 = arith.constant 0 : index
    %69 = vector.load %arg3[%c0_114, %c1_115, %c2_116, %c0_117] : memref<6x6x6x8xf32, #tpu.memory_space<vmem>>, vector<4x4x4x8xf32>
    %cst_118 = arith.constant 4.687500e-02 : f32
    %70 = vector.broadcast %cst_118 : f32 to vector<4x4x4x8xf32>
    %71 = arith.mulf %70, %69 : vector<4x4x4x8xf32>
    %72 = arith.addf %68, %71 : vector<4x4x4x8xf32>
    %c0_119 = arith.constant 0 : index
    %c0_120 = arith.constant 0 : index
    %c1_121 = arith.constant 1 : index
    %c0_122 = arith.constant 0 : index
    %73 = vector.load %arg3[%c0_119, %c0_120, %c1_121, %c0_122] : memref<6x6x6x8xf32, #tpu.memory_space<vmem>>, vector<4x4x4x8xf32>
    %cst_123 = arith.constant 4.687500e-02 : f32
    %74 = vector.broadcast %cst_123 : f32 to vector<4x4x4x8xf32>
    %75 = arith.mulf %74, %73 : vector<4x4x4x8xf32>
    %76 = arith.addf %72, %75 : vector<4x4x4x8xf32>
    %c0_124 = arith.constant 0 : index
    %c0_125 = arith.constant 0 : index
    %c2_126 = arith.constant 2 : index
    %c0_127 = arith.constant 0 : index
    %77 = vector.load %arg3[%c0_124, %c0_125, %c2_126, %c0_127] : memref<6x6x6x8xf32, #tpu.memory_space<vmem>>, vector<4x4x4x8xf32>
    %cst_128 = arith.constant 1.562500e-02 : f32
    %78 = vector.broadcast %cst_128 : f32 to vector<4x4x4x8xf32>
    %79 = arith.mulf %78, %77 : vector<4x4x4x8xf32>
    %80 = arith.addf %76, %79 : vector<4x4x4x8xf32>
    %81 = arith.truncf %80 : vector<4x4x4x8xf32> to vector<4x4x4x8xbf16>
    %c0_129 = arith.constant 0 : index
    %c1_130 = arith.constant 1 : index
    %c0_131 = arith.constant 0 : index
    %c0_132 = arith.constant 0 : index
    %c0_133 = arith.constant 0 : index
    %c0_134 = arith.constant 0 : index
    %82 = vector.load %arg2[%c0_129, %c1_130, %c0_131, %c0_132, %c0_133, %c0_134] : memref<1x8x4x4x4x8xbf16, #tpu.memory_space<vmem>>, vector<1x1x4x4x4x8xbf16>
    %83 = vector.shape_cast %82 : vector<1x1x4x4x4x8xbf16> to vector<4x4x4x8xbf16>
    %84 = vector.shape_cast %81 : vector<4x4x4x8xbf16> to vector<1x1x4x4x4x8xbf16>
    tpu.vector_store %arg2[%c0_129, %c1_130, %c0_131, %c0_132, %c0_133, %c0_134], %84 {strides = array<i32>} : memref<1x8x4x4x4x8xbf16, #tpu.memory_space<vmem>>, vector<1x1x4x4x4x8xbf16>,
    %c1_135 = arith.constant 1 : index
    %c1_136 = arith.constant 1 : index
    %c1_137 = arith.constant 1 : index
    %c0_138 = arith.constant 0 : index
    %85 = vector.load %arg3[%c1_135, %c1_136, %c1_137, %c0_138] : memref<6x6x6x8xf32, #tpu.memory_space<vmem>>, vector<4x4x4x8xf32>
    %cst_139 = arith.constant 4.218750e-01 : f32
    %86 = vector.broadcast %cst_139 : f32 to vector<4x4x4x8xf32>
    %87 = arith.mulf %86, %85 : vector<4x4x4x8xf32>
    %c1_140 = arith.constant 1 : index
    %c1_141 = arith.constant 1 : index
    %c0_142 = arith.constant 0 : index
    %c0_143 = arith.constant 0 : index
    %88 = vector.load %arg3[%c1_140, %c1_141, %c0_142, %c0_143] : memref<6x6x6x8xf32, #tpu.memory_space<vmem>>, vector<4x4x4x8xf32>
    %cst_144 = arith.constant 1.406250e-01 : f32
    %89 = vector.broadcast %cst_144 : f32 to vector<4x4x4x8xf32>
    %90 = arith.mulf %89, %88 : vector<4x4x4x8xf32>
    %91 = arith.addf %87, %90 : vector<4x4x4x8xf32>
    %c1_145 = arith.constant 1 : index
    %c2_146 = arith.constant 2 : index
    %c1_147 = arith.constant 1 : index
    %c0_148 = arith.constant 0 : index
    %92 = vector.load %arg3[%c1_145, %c2_146, %c1_147, %c0_148] : memref<6x6x6x8xf32, #tpu.memory_space<vmem>>, vector<4x4x4x8xf32>
    %cst_149 = arith.constant 1.406250e-01 : f32
    %93 = vector.broadcast %cst_149 : f32 to vector<4x4x4x8xf32>
    %94 = arith.mulf %93, %92 : vector<4x4x4x8xf32>
    %95 = arith.addf %91, %94 : vector<4x4x4x8xf32>
    %c1_150 = arith.constant 1 : index
    %c2_151 = arith.constant 2 : index
    %c0_152 = arith.constant 0 : index
    %c0_153 = arith.constant 0 : index
    %96 = vector.load %arg3[%c1_150, %c2_151, %c0_152, %c0_153] : memref<6x6x6x8xf32, #tpu.memory_space<vmem>>, vector<4x4x4x8xf32>
    %cst_154 = arith.constant 4.687500e-02 : f32
    %97 = vector.broadcast %cst_154 : f32 to vector<4x4x4x8xf32>
    %98 = arith.mulf %97, %96 : vector<4x4x4x8xf32>
    %99 = arith.addf %95, %98 : vector<4x4x4x8xf32>
    %c0_155 = arith.constant 0 : index
    %c1_156 = arith.constant 1 : index
    %c1_157 = arith.constant 1 : index
    %c0_158 = arith.constant 0 : index
    %100 = vector.load %arg3[%c0_155, %c1_156, %c1_157, %c0_158] : memref<6x6x6x8xf32, #tpu.memory_space<vmem>>, vector<4x4x4x8xf32>
    %cst_159 = arith.constant 1.406250e-01 : f32
    %101 = vector.broadcast %cst_159 : f32 to vector<4x4x4x8xf32>
    %102 = arith.mulf %101, %100 : vector<4x4x4x8xf32>
    %103 = arith.addf %99, %102 : vector<4x4x4x8xf32>
    %c0_160 = arith.constant 0 : index
    %c1_161 = arith.constant 1 : index
    %c0_162 = arith.constant 0 : index
    %c0_163 = arith.constant 0 : index
    %104 = vector.load %arg3[%c0_160, %c1_161, %c0_162, %c0_163] : memref<6x6x6x8xf32, #tpu.memory_space<vmem>>, vector<4x4x4x8xf32>
    %cst_164 = arith.constant 4.687500e-02 : f32
    %105 = vector.broadcast %cst_164 : f32 to vector<4x4x4x8xf32>
    %106 = arith.mulf %105, %104 : vector<4x4x4x8xf32>
    %107 = arith.addf %103, %106 : vector<4x4x4x8xf32>
    %c0_165 = arith.constant 0 : index
    %c2_166 = arith.constant 2 : index
    %c1_167 = arith.constant 1 : index
    %c0_168 = arith.constant 0 : index
    %108 = vector.load %arg3[%c0_165, %c2_166, %c1_167, %c0_168] : memref<6x6x6x8xf32, #tpu.memory_space<vmem>>, vector<4x4x4x8xf32>
    %cst_169 = arith.constant 4.687500e-02 : f32
    %109 = vector.broadcast %cst_169 : f32 to vector<4x4x4x8xf32>
    %110 = arith.mulf %109, %108 : vector<4x4x4x8xf32>
    %111 = arith.addf %107, %110 : vector<4x4x4x8xf32>
    %c0_170 = arith.constant 0 : index
    %c2_171 = arith.constant 2 : index
    %c0_172 = arith.constant 0 : index
    %c0_173 = arith.constant 0 : index
    %112 = vector.load %arg3[%c0_170, %c2_171, %c0_172, %c0_173] : memref<6x6x6x8xf32, #tpu.memory_space<vmem>>, vector<4x4x4x8xf32>
    %cst_174 = arith.constant 1.562500e-02 : f32
    %113 = vector.broadcast %cst_174 : f32 to vector<4x4x4x8xf32>
    %114 = arith.mulf %113, %112 : vector<4x4x4x8xf32>
    %115 = arith.addf %111, %114 : vector<4x4x4x8xf32>
    %116 = arith.truncf %115 : vector<4x4x4x8xf32> to vector<4x4x4x8xbf16>
    %c0_175 = arith.constant 0 : index
    %c2_176 = arith.constant 2 : index
    %c0_177 = arith.constant 0 : index
    %c0_178 = arith.constant 0 : index
    %c0_179 = arith.constant 0 : index
    %c0_180 = arith.constant 0 : index
    %117 = vector.load %arg2[%c0_175, %c2_176, %c0_177, %c0_178, %c0_179, %c0_180] : memref<1x8x4x4x4x8xbf16, #tpu.memory_space<vmem>>, vector<1x1x4x4x4x8xbf16>
    %118 = vector.shape_cast %117 : vector<1x1x4x4x4x8xbf16> to vector<4x4x4x8xbf16>
    %119 = vector.shape_cast %116 : vector<4x4x4x8xbf16> to vector<1x1x4x4x4x8xbf16>
    tpu.vector_store %arg2[%c0_175, %c2_176, %c0_177, %c0_178, %c0_179, %c0_180], %119 {strides = array<i32>} : memref<1x8x4x4x4x8xbf16, #tpu.memory_space<vmem>>, vector<1x1x4x4x4x8xbf16>,
    %c1_181 = arith.constant 1 : index
    %c1_182 = arith.constant 1 : index
    %c1_183 = arith.constant 1 : index
    %c0_184 = arith.constant 0 : index
    %120 = vector.load %arg3[%c1_181, %c1_182, %c1_183, %c0_184] : memref<6x6x6x8xf32, #tpu.memory_space<vmem>>, vector<4x4x4x8xf32>
    %cst_185 = arith.constant 4.218750e-01 : f32
    %121 = vector.broadcast %cst_185 : f32 to vector<4x4x4x8xf32>
    %122 = arith.mulf %121, %120 : vector<4x4x4x8xf32>
    %c1_186 = arith.constant 1 : index
    %c1_187 = arith.constant 1 : index
    %c2_188 = arith.constant 2 : index
    %c0_189 = arith.constant 0 : index
    %123 = vector.load %arg3[%c1_186, %c1_187, %c2_188, %c0_189] : memref<6x6x6x8xf32, #tpu.memory_space<vmem>>, vector<4x4x4x8xf32>
    %cst_190 = arith.constant 1.406250e-01 : f32
    %124 = vector.broadcast %cst_190 : f32 to vector<4x4x4x8xf32>
    %125 = arith.mulf %124, %123 : vector<4x4x4x8xf32>
    %126 = arith.addf %122, %125 : vector<4x4x4x8xf32>
    %c1_191 = arith.constant 1 : index
    %c2_192 = arith.constant 2 : index
    %c1_193 = arith.constant 1 : index
    %c0_194 = arith.constant 0 : index
    %127 = vector.load %arg3[%c1_191, %c2_192, %c1_193, %c0_194] : memref<6x6x6x8xf32, #tpu.memory_space<vmem>>, vector<4x4x4x8xf32>
    %cst_195 = arith.constant 1.406250e-01 : f32
    %128 = vector.broadcast %cst_195 : f32 to vector<4x4x4x8xf32>
    %129 = arith.mulf %128, %127 : vector<4x4x4x8xf32>
    %130 = arith.addf %126, %129 : vector<4x4x4x8xf32>
    %c1_196 = arith.constant 1 : index
    %c2_197 = arith.constant 2 : index
    %c2_198 = arith.constant 2 : index
    %c0_199 = arith.constant 0 : index
    %131 = vector.load %arg3[%c1_196, %c2_197, %c2_198, %c0_199] : memref<6x6x6x8xf32, #tpu.memory_space<vmem>>, vector<4x4x4x8xf32>
    %cst_200 = arith.constant 4.687500e-02 : f32
    %132 = vector.broadcast %cst_200 : f32 to vector<4x4x4x8xf32>
    %133 = arith.mulf %132, %131 : vector<4x4x4x8xf32>
    %134 = arith.addf %130, %133 : vector<4x4x4x8xf32>
    %c0_201 = arith.constant 0 : index
    %c1_202 = arith.constant 1 : index
    %c1_203 = arith.constant 1 : index
    %c0_204 = arith.constant 0 : index
    %135 = vector.load %arg3[%c0_201, %c1_202, %c1_203, %c0_204] : memref<6x6x6x8xf32, #tpu.memory_space<vmem>>, vector<4x4x4x8xf32>
    %cst_205 = arith.constant 1.406250e-01 : f32
    %136 = vector.broadcast %cst_205 : f32 to vector<4x4x4x8xf32>
    %137 = arith.mulf %136, %135 : vector<4x4x4x8xf32>
    %138 = arith.addf %134, %137 : vector<4x4x4x8xf32>
    %c0_206 = arith.constant 0 : index
    %c1_207 = arith.constant 1 : index
    %c2_208 = arith.constant 2 : index
    %c0_209 = arith.constant 0 : index
    %139 = vector.load %arg3[%c0_206, %c1_207, %c2_208, %c0_209] : memref<6x6x6x8xf32, #tpu.memory_space<vmem>>, vector<4x4x4x8xf32>
    %cst_210 = arith.constant 4.687500e-02 : f32
    %140 = vector.broadcast %cst_210 : f32 to vector<4x4x4x8xf32>
    %141 = arith.mulf %140, %139 : vector<4x4x4x8xf32>
    %142 = arith.addf %138, %141 : vector<4x4x4x8xf32>
    %c0_211 = arith.constant 0 : index
    %c2_212 = arith.constant 2 : index
    %c1_213 = arith.constant 1 : index
    %c0_214 = arith.constant 0 : index
    %143 = vector.load %arg3[%c0_211, %c2_212, %c1_213, %c0_214] : memref<6x6x6x8xf32, #tpu.memory_space<vmem>>, vector<4x4x4x8xf32>
    %cst_215 = arith.constant 4.687500e-02 : f32
    %144 = vector.broadcast %cst_215 : f32 to vector<4x4x4x8xf32>
    %145 = arith.mulf %144, %143 : vector<4x4x4x8xf32>
    %146 = arith.addf %142, %145 : vector<4x4x4x8xf32>
    %c0_216 = arith.constant 0 : index
    %c2_217 = arith.constant 2 : index
    %c2_218 = arith.constant 2 : index
    %c0_219 = arith.constant 0 : index
    %147 = vector.load %arg3[%c0_216, %c2_217, %c2_218, %c0_219] : memref<6x6x6x8xf32, #tpu.memory_space<vmem>>, vector<4x4x4x8xf32>
    %cst_220 = arith.constant 1.562500e-02 : f32
    %148 = vector.broadcast %cst_220 : f32 to vector<4x4x4x8xf32>
    %149 = arith.mulf %148, %147 : vector<4x4x4x8xf32>
    %150 = arith.addf %146, %149 : vector<4x4x4x8xf32>
    %151 = arith.truncf %150 : vector<4x4x4x8xf32> to vector<4x4x4x8xbf16>
    %c0_221 = arith.constant 0 : index
    %c3 = arith.constant 3 : index
    %c0_222 = arith.constant 0 : index
    %c0_223 = arith.constant 0 : index
    %c0_224 = arith.constant 0 : index
    %c0_225 = arith.constant 0 : index
    %152 = vector.load %arg2[%c0_221, %c3, %c0_222, %c0_223, %c0_224, %c0_225] : memref<1x8x4x4x4x8xbf16, #tpu.memory_space<vmem>>, vector<1x1x4x4x4x8xbf16>
    %153 = vector.shape_cast %152 : vector<1x1x4x4x4x8xbf16> to vector<4x4x4x8xbf16>
    %154 = vector.shape_cast %151 : vector<4x4x4x8xbf16> to vector<1x1x4x4x4x8xbf16>
    tpu.vector_store %arg2[%c0_221, %c3, %c0_222, %c0_223, %c0_224, %c0_225], %154 {strides = array<i32>} : memref<1x8x4x4x4x8xbf16, #tpu.memory_space<vmem>>, vector<1x1x4x4x4x8xbf16>,
    %c1_226 = arith.constant 1 : index
    %c1_227 = arith.constant 1 : index
    %c1_228 = arith.constant 1 : index
    %c0_229 = arith.constant 0 : index
    %155 = vector.load %arg3[%c1_226, %c1_227, %c1_228, %c0_229] : memref<6x6x6x8xf32, #tpu.memory_space<vmem>>, vector<4x4x4x8xf32>
    %cst_230 = arith.constant 4.218750e-01 : f32
    %156 = vector.broadcast %cst_230 : f32 to vector<4x4x4x8xf32>
    %157 = arith.mulf %156, %155 : vector<4x4x4x8xf32>
    %c1_231 = arith.constant 1 : index
    %c1_232 = arith.constant 1 : index
    %c0_233 = arith.constant 0 : index
    %c0_234 = arith.constant 0 : index
    %158 = vector.load %arg3[%c1_231, %c1_232, %c0_233, %c0_234] : memref<6x6x6x8xf32, #tpu.memory_space<vmem>>, vector<4x4x4x8xf32>
    %cst_235 = arith.constant 1.406250e-01 : f32
    %159 = vector.broadcast %cst_235 : f32 to vector<4x4x4x8xf32>
    %160 = arith.mulf %159, %158 : vector<4x4x4x8xf32>
    %161 = arith.addf %157, %160 : vector<4x4x4x8xf32>
    %c1_236 = arith.constant 1 : index
    %c0_237 = arith.constant 0 : index
    %c1_238 = arith.constant 1 : index
    %c0_239 = arith.constant 0 : index
    %162 = vector.load %arg3[%c1_236, %c0_237, %c1_238, %c0_239] : memref<6x6x6x8xf32, #tpu.memory_space<vmem>>, vector<4x4x4x8xf32>
    %cst_240 = arith.constant 1.406250e-01 : f32
    %163 = vector.broadcast %cst_240 : f32 to vector<4x4x4x8xf32>
    %164 = arith.mulf %163, %162 : vector<4x4x4x8xf32>
    %165 = arith.addf %161, %164 : vector<4x4x4x8xf32>
    %c1_241 = arith.constant 1 : index
    %c0_242 = arith.constant 0 : index
    %c0_243 = arith.constant 0 : index
    %c0_244 = arith.constant 0 : index
    %166 = vector.load %arg3[%c1_241, %c0_242, %c0_243, %c0_244] : memref<6x6x6x8xf32, #tpu.memory_space<vmem>>, vector<4x4x4x8xf32>
    %cst_245 = arith.constant 4.687500e-02 : f32
    %167 = vector.broadcast %cst_245 : f32 to vector<4x4x4x8xf32>
    %168 = arith.mulf %167, %166 : vector<4x4x4x8xf32>
    %169 = arith.addf %165, %168 : vector<4x4x4x8xf32>
    %c2_246 = arith.constant 2 : index
    %c1_247 = arith.constant 1 : index
    %c1_248 = arith.constant 1 : index
    %c0_249 = arith.constant 0 : index
    %170 = vector.load %arg3[%c2_246, %c1_247, %c1_248, %c0_249] : memref<6x6x6x8xf32, #tpu.memory_space<vmem>>, vector<4x4x4x8xf32>
    %cst_250 = arith.constant 1.406250e-01 : f32
    %171 = vector.broadcast %cst_250 : f32 to vector<4x4x4x8xf32>
    %172 = arith.mulf %171, %170 : vector<4x4x4x8xf32>
    %173 = arith.addf %169, %172 : vector<4x4x4x8xf32>
    %c2_251 = arith.constant 2 : index
    %c1_252 = arith.constant 1 : index
    %c0_253 = arith.constant 0 : index
    %c0_254 = arith.constant 0 : index
    %174 = vector.load %arg3[%c2_251, %c1_252, %c0_253, %c0_254] : memref<6x6x6x8xf32, #tpu.memory_space<vmem>>, vector<4x4x4x8xf32>
    %cst_255 = arith.constant 4.687500e-02 : f32
    %175 = vector.broadcast %cst_255 : f32 to vector<4x4x4x8xf32>
    %176 = arith.mulf %175, %174 : vector<4x4x4x8xf32>
    %177 = arith.addf %173, %176 : vector<4x4x4x8xf32>
    %c2_256 = arith.constant 2 : index
    %c0_257 = arith.constant 0 : index
    %c1_258 = arith.constant 1 : index
    %c0_259 = arith.constant 0 : index
    %178 = vector.load %arg3[%c2_256, %c0_257, %c1_258, %c0_259] : memref<6x6x6x8xf32, #tpu.memory_space<vmem>>, vector<4x4x4x8xf32>
    %cst_260 = arith.constant 4.687500e-02 : f32
    %179 = vector.broadcast %cst_260 : f32 to vector<4x4x4x8xf32>
    %180 = arith.mulf %179, %178 : vector<4x4x4x8xf32>
    %181 = arith.addf %177, %180 : vector<4x4x4x8xf32>
    %c2_261 = arith.constant 2 : index
    %c0_262 = arith.constant 0 : index
    %c0_263 = arith.constant 0 : index
    %c0_264 = arith.constant 0 : index
    %182 = vector.load %arg3[%c2_261, %c0_262, %c0_263, %c0_264] : memref<6x6x6x8xf32, #tpu.memory_space<vmem>>, vector<4x4x4x8xf32>
    %cst_265 = arith.constant 1.562500e-02 : f32
    %183 = vector.broadcast %cst_265 : f32 to vector<4x4x4x8xf32>
    %184 = arith.mulf %183, %182 : vector<4x4x4x8xf32>
    %185 = arith.addf %181, %184 : vector<4x4x4x8xf32>
    %186 = arith.truncf %185 : vector<4x4x4x8xf32> to vector<4x4x4x8xbf16>
    %c0_266 = arith.constant 0 : index
    %c4_267 = arith.constant 4 : index
    %c0_268 = arith.constant 0 : index
    %c0_269 = arith.constant 0 : index
    %c0_270 = arith.constant 0 : index
    %c0_271 = arith.constant 0 : index
    %187 = vector.load %arg2[%c0_266, %c4_267, %c0_268, %c0_269, %c0_270, %c0_271] : memref<1x8x4x4x4x8xbf16, #tpu.memory_space<vmem>>, vector<1x1x4x4x4x8xbf16>
    %188 = vector.shape_cast %187 : vector<1x1x4x4x4x8xbf16> to vector<4x4x4x8xbf16>
    %189 = vector.shape_cast %186 : vector<4x4x4x8xbf16> to vector<1x1x4x4x4x8xbf16>
    tpu.vector_store %arg2[%c0_266, %c4_267, %c0_268, %c0_269, %c0_270, %c0_271], %189 {strides = array<i32>} : memref<1x8x4x4x4x8xbf16, #tpu.memory_space<vmem>>, vector<1x1x4x4x4x8xbf16>,
    %c1_272 = arith.constant 1 : index
    %c1_273 = arith.constant 1 : index
    %c1_274 = arith.constant 1 : index
    %c0_275 = arith.constant 0 : index
    %190 = vector.load %arg3[%c1_272, %c1_273, %c1_274, %c0_275] : memref<6x6x6x8xf32, #tpu.memory_space<vmem>>, vector<4x4x4x8xf32>
    %cst_276 = arith.constant 4.218750e-01 : f32
    %191 = vector.broadcast %cst_276 : f32 to vector<4x4x4x8xf32>
    %192 = arith.mulf %191, %190 : vector<4x4x4x8xf32>
    %c1_277 = arith.constant 1 : index
    %c1_278 = arith.constant 1 : index
    %c2_279 = arith.constant 2 : index
    %c0_280 = arith.constant 0 : index
    %193 = vector.load %arg3[%c1_277, %c1_278, %c2_279, %c0_280] : memref<6x6x6x8xf32, #tpu.memory_space<vmem>>, vector<4x4x4x8xf32>
    %cst_281 = arith.constant 1.406250e-01 : f32
    %194 = vector.broadcast %cst_281 : f32 to vector<4x4x4x8xf32>
    %195 = arith.mulf %194, %193 : vector<4x4x4x8xf32>
    %196 = arith.addf %192, %195 : vector<4x4x4x8xf32>
    %c1_282 = arith.constant 1 : index
    %c0_283 = arith.constant 0 : index
    %c1_284 = arith.constant 1 : index
    %c0_285 = arith.constant 0 : index
    %197 = vector.load %arg3[%c1_282, %c0_283, %c1_284, %c0_285] : memref<6x6x6x8xf32, #tpu.memory_space<vmem>>, vector<4x4x4x8xf32>
    %cst_286 = arith.constant 1.406250e-01 : f32
    %198 = vector.broadcast %cst_286 : f32 to vector<4x4x4x8xf32>
    %199 = arith.mulf %198, %197 : vector<4x4x4x8xf32>
    %200 = arith.addf %196, %199 : vector<4x4x4x8xf32>
    %c1_287 = arith.constant 1 : index
    %c0_288 = arith.constant 0 : index
    %c2_289 = arith.constant 2 : index
    %c0_290 = arith.constant 0 : index
    %201 = vector.load %arg3[%c1_287, %c0_288, %c2_289, %c0_290] : memref<6x6x6x8xf32, #tpu.memory_space<vmem>>, vector<4x4x4x8xf32>
    %cst_291 = arith.constant 4.687500e-02 : f32
    %202 = vector.broadcast %cst_291 : f32 to vector<4x4x4x8xf32>
    %203 = arith.mulf %202, %201 : vector<4x4x4x8xf32>
    %204 = arith.addf %200, %203 : vector<4x4x4x8xf32>
    %c2_292 = arith.constant 2 : index
    %c1_293 = arith.constant 1 : index
    %c1_294 = arith.constant 1 : index
    %c0_295 = arith.constant 0 : index
    %205 = vector.load %arg3[%c2_292, %c1_293, %c1_294, %c0_295] : memref<6x6x6x8xf32, #tpu.memory_space<vmem>>, vector<4x4x4x8xf32>
    %cst_296 = arith.constant 1.406250e-01 : f32
    %206 = vector.broadcast %cst_296 : f32 to vector<4x4x4x8xf32>
    %207 = arith.mulf %206, %205 : vector<4x4x4x8xf32>
    %208 = arith.addf %204, %207 : vector<4x4x4x8xf32>
    %c2_297 = arith.constant 2 : index
    %c1_298 = arith.constant 1 : index
    %c2_299 = arith.constant 2 : index
    %c0_300 = arith.constant 0 : index
    %209 = vector.load %arg3[%c2_297, %c1_298, %c2_299, %c0_300] : memref<6x6x6x8xf32, #tpu.memory_space<vmem>>, vector<4x4x4x8xf32>
    %cst_301 = arith.constant 4.687500e-02 : f32
    %210 = vector.broadcast %cst_301 : f32 to vector<4x4x4x8xf32>
    %211 = arith.mulf %210, %209 : vector<4x4x4x8xf32>
    %212 = arith.addf %208, %211 : vector<4x4x4x8xf32>
    %c2_302 = arith.constant 2 : index
    %c0_303 = arith.constant 0 : index
    %c1_304 = arith.constant 1 : index
    %c0_305 = arith.constant 0 : index
    %213 = vector.load %arg3[%c2_302, %c0_303, %c1_304, %c0_305] : memref<6x6x6x8xf32, #tpu.memory_space<vmem>>, vector<4x4x4x8xf32>
    %cst_306 = arith.constant 4.687500e-02 : f32
    %214 = vector.broadcast %cst_306 : f32 to vector<4x4x4x8xf32>
    %215 = arith.mulf %214, %213 : vector<4x4x4x8xf32>
    %216 = arith.addf %212, %215 : vector<4x4x4x8xf32>
    %c2_307 = arith.constant 2 : index
    %c0_308 = arith.constant 0 : index
    %c2_309 = arith.constant 2 : index
    %c0_310 = arith.constant 0 : index
    %217 = vector.load %arg3[%c2_307, %c0_308, %c2_309, %c0_310] : memref<6x6x6x8xf32, #tpu.memory_space<vmem>>, vector<4x4x4x8xf32>
    %cst_311 = arith.constant 1.562500e-02 : f32
    %218 = vector.broadcast %cst_311 : f32 to vector<4x4x4x8xf32>
    %219 = arith.mulf %218, %217 : vector<4x4x4x8xf32>
    %220 = arith.addf %216, %219 : vector<4x4x4x8xf32>
    %221 = arith.truncf %220 : vector<4x4x4x8xf32> to vector<4x4x4x8xbf16>
    %c0_312 = arith.constant 0 : index
    %c5_313 = arith.constant 5 : index
    %c0_314 = arith.constant 0 : index
    %c0_315 = arith.constant 0 : index
    %c0_316 = arith.constant 0 : index
    %c0_317 = arith.constant 0 : index
    %222 = vector.load %arg2[%c0_312, %c5_313, %c0_314, %c0_315, %c0_316, %c0_317] : memref<1x8x4x4x4x8xbf16, #tpu.memory_space<vmem>>, vector<1x1x4x4x4x8xbf16>
    %223 = vector.shape_cast %222 : vector<1x1x4x4x4x8xbf16> to vector<4x4x4x8xbf16>
    %224 = vector.shape_cast %221 : vector<4x4x4x8xbf16> to vector<1x1x4x4x4x8xbf16>
    tpu.vector_store %arg2[%c0_312, %c5_313, %c0_314, %c0_315, %c0_316, %c0_317], %224 {strides = array<i32>} : memref<1x8x4x4x4x8xbf16, #tpu.memory_space<vmem>>, vector<1x1x4x4x4x8xbf16>,
    %c1_318 = arith.constant 1 : index
    %c1_319 = arith.constant 1 : index
    %c1_320 = arith.constant 1 : index
    %c0_321 = arith.constant 0 : index
    %225 = vector.load %arg3[%c1_318, %c1_319, %c1_320, %c0_321] : memref<6x6x6x8xf32, #tpu.memory_space<vmem>>, vector<4x4x4x8xf32>
    %cst_322 = arith.constant 4.218750e-01 : f32
    %226 = vector.broadcast %cst_322 : f32 to vector<4x4x4x8xf32>
    %227 = arith.mulf %226, %225 : vector<4x4x4x8xf32>
    %c1_323 = arith.constant 1 : index
    %c1_324 = arith.constant 1 : index
    %c0_325 = arith.constant 0 : index
    %c0_326 = arith.constant 0 : index
    %228 = vector.load %arg3[%c1_323, %c1_324, %c0_325, %c0_326] : memref<6x6x6x8xf32, #tpu.memory_space<vmem>>, vector<4x4x4x8xf32>
    %cst_327 = arith.constant 1.406250e-01 : f32
    %229 = vector.broadcast %cst_327 : f32 to vector<4x4x4x8xf32>
    %230 = arith.mulf %229, %228 : vector<4x4x4x8xf32>
    %231 = arith.addf %227, %230 : vector<4x4x4x8xf32>
    %c1_328 = arith.constant 1 : index
    %c2_329 = arith.constant 2 : index
    %c1_330 = arith.constant 1 : index
    %c0_331 = arith.constant 0 : index
    %232 = vector.load %arg3[%c1_328, %c2_329, %c1_330, %c0_331] : memref<6x6x6x8xf32, #tpu.memory_space<vmem>>, vector<4x4x4x8xf32>
    %cst_332 = arith.constant 1.406250e-01 : f32
    %233 = vector.broadcast %cst_332 : f32 to vector<4x4x4x8xf32>
    %234 = arith.mulf %233, %232 : vector<4x4x4x8xf32>
    %235 = arith.addf %231, %234 : vector<4x4x4x8xf32>
    %c1_333 = arith.constant 1 : index
    %c2_334 = arith.constant 2 : index
    %c0_335 = arith.constant 0 : index
    %c0_336 = arith.constant 0 : index
    %236 = vector.load %arg3[%c1_333, %c2_334, %c0_335, %c0_336] : memref<6x6x6x8xf32, #tpu.memory_space<vmem>>, vector<4x4x4x8xf32>
    %cst_337 = arith.constant 4.687500e-02 : f32
    %237 = vector.broadcast %cst_337 : f32 to vector<4x4x4x8xf32>
    %238 = arith.mulf %237, %236 : vector<4x4x4x8xf32>
    %239 = arith.addf %235, %238 : vector<4x4x4x8xf32>
    %c2_338 = arith.constant 2 : index
    %c1_339 = arith.constant 1 : index
    %c1_340 = arith.constant 1 : index
    %c0_341 = arith.constant 0 : index
    %240 = vector.load %arg3[%c2_338, %c1_339, %c1_340, %c0_341] : memref<6x6x6x8xf32, #tpu.memory_space<vmem>>, vector<4x4x4x8xf32>
    %cst_342 = arith.constant 1.406250e-01 : f32
    %241 = vector.broadcast %cst_342 : f32 to vector<4x4x4x8xf32>
    %242 = arith.mulf %241, %240 : vector<4x4x4x8xf32>
    %243 = arith.addf %239, %242 : vector<4x4x4x8xf32>
    %c2_343 = arith.constant 2 : index
    %c1_344 = arith.constant 1 : index
    %c0_345 = arith.constant 0 : index
    %c0_346 = arith.constant 0 : index
    %244 = vector.load %arg3[%c2_343, %c1_344, %c0_345, %c0_346] : memref<6x6x6x8xf32, #tpu.memory_space<vmem>>, vector<4x4x4x8xf32>
    %cst_347 = arith.constant 4.687500e-02 : f32
    %245 = vector.broadcast %cst_347 : f32 to vector<4x4x4x8xf32>
    %246 = arith.mulf %245, %244 : vector<4x4x4x8xf32>
    %247 = arith.addf %243, %246 : vector<4x4x4x8xf32>
    %c2_348 = arith.constant 2 : index
    %c2_349 = arith.constant 2 : index
    %c1_350 = arith.constant 1 : index
    %c0_351 = arith.constant 0 : index
    %248 = vector.load %arg3[%c2_348, %c2_349, %c1_350, %c0_351] : memref<6x6x6x8xf32, #tpu.memory_space<vmem>>, vector<4x4x4x8xf32>
    %cst_352 = arith.constant 4.687500e-02 : f32
    %249 = vector.broadcast %cst_352 : f32 to vector<4x4x4x8xf32>
    %250 = arith.mulf %249, %248 : vector<4x4x4x8xf32>
    %251 = arith.addf %247, %250 : vector<4x4x4x8xf32>
    %c2_353 = arith.constant 2 : index
    %c2_354 = arith.constant 2 : index
    %c0_355 = arith.constant 0 : index
    %c0_356 = arith.constant 0 : index
    %252 = vector.load %arg3[%c2_353, %c2_354, %c0_355, %c0_356] : memref<6x6x6x8xf32, #tpu.memory_space<vmem>>, vector<4x4x4x8xf32>
    %cst_357 = arith.constant 1.562500e-02 : f32
    %253 = vector.broadcast %cst_357 : f32 to vector<4x4x4x8xf32>
    %254 = arith.mulf %253, %252 : vector<4x4x4x8xf32>
    %255 = arith.addf %251, %254 : vector<4x4x4x8xf32>
    %256 = arith.truncf %255 : vector<4x4x4x8xf32> to vector<4x4x4x8xbf16>
    %c0_358 = arith.constant 0 : index
    %c6 = arith.constant 6 : index
    %c0_359 = arith.constant 0 : index
    %c0_360 = arith.constant 0 : index
    %c0_361 = arith.constant 0 : index
    %c0_362 = arith.constant 0 : index
    %257 = vector.load %arg2[%c0_358, %c6, %c0_359, %c0_360, %c0_361, %c0_362] : memref<1x8x4x4x4x8xbf16, #tpu.memory_space<vmem>>, vector<1x1x4x4x4x8xbf16>
    %258 = vector.shape_cast %257 : vector<1x1x4x4x4x8xbf16> to vector<4x4x4x8xbf16>
    %259 = vector.shape_cast %256 : vector<4x4x4x8xbf16> to vector<1x1x4x4x4x8xbf16>
    tpu.vector_store %arg2[%c0_358, %c6, %c0_359, %c0_360, %c0_361, %c0_362], %259 {strides = array<i32>} : memref<1x8x4x4x4x8xbf16, #tpu.memory_space<vmem>>, vector<1x1x4x4x4x8xbf16>,
    %c1_363 = arith.constant 1 : index
    %c1_364 = arith.constant 1 : index
    %c1_365 = arith.constant 1 : index
    %c0_366 = arith.constant 0 : index
    %260 = vector.load %arg3[%c1_363, %c1_364, %c1_365, %c0_366] : memref<6x6x6x8xf32, #tpu.memory_space<vmem>>, vector<4x4x4x8xf32>
    %cst_367 = arith.constant 4.218750e-01 : f32
    %261 = vector.broadcast %cst_367 : f32 to vector<4x4x4x8xf32>
    %262 = arith.mulf %261, %260 : vector<4x4x4x8xf32>
    %c1_368 = arith.constant 1 : index
    %c1_369 = arith.constant 1 : index
    %c2_370 = arith.constant 2 : index
    %c0_371 = arith.constant 0 : index
    %263 = vector.load %arg3[%c1_368, %c1_369, %c2_370, %c0_371] : memref<6x6x6x8xf32, #tpu.memory_space<vmem>>, vector<4x4x4x8xf32>
    %cst_372 = arith.constant 1.406250e-01 : f32
    %264 = vector.broadcast %cst_372 : f32 to vector<4x4x4x8xf32>
    %265 = arith.mulf %264, %263 : vector<4x4x4x8xf32>
    %266 = arith.addf %262, %265 : vector<4x4x4x8xf32>
    %c1_373 = arith.constant 1 : index
    %c2_374 = arith.constant 2 : index
    %c1_375 = arith.constant 1 : index
    %c0_376 = arith.constant 0 : index
    %267 = vector.load %arg3[%c1_373, %c2_374, %c1_375, %c0_376] : memref<6x6x6x8xf32, #tpu.memory_space<vmem>>, vector<4x4x4x8xf32>
    %cst_377 = arith.constant 1.406250e-01 : f32
    %268 = vector.broadcast %cst_377 : f32 to vector<4x4x4x8xf32>
    %269 = arith.mulf %268, %267 : vector<4x4x4x8xf32>
    %270 = arith.addf %266, %269 : vector<4x4x4x8xf32>
    %c1_378 = arith.constant 1 : index
    %c2_379 = arith.constant 2 : index
    %c2_380 = arith.constant 2 : index
    %c0_381 = arith.constant 0 : index
    %271 = vector.load %arg3[%c1_378, %c2_379, %c2_380, %c0_381] : memref<6x6x6x8xf32, #tpu.memory_space<vmem>>, vector<4x4x4x8xf32>
    %cst_382 = arith.constant 4.687500e-02 : f32
    %272 = vector.broadcast %cst_382 : f32 to vector<4x4x4x8xf32>
    %273 = arith.mulf %272, %271 : vector<4x4x4x8xf32>
    %274 = arith.addf %270, %273 : vector<4x4x4x8xf32>
    %c2_383 = arith.constant 2 : index
    %c1_384 = arith.constant 1 : index
    %c1_385 = arith.constant 1 : index
    %c0_386 = arith.constant 0 : index
    %275 = vector.load %arg3[%c2_383, %c1_384, %c1_385, %c0_386] : memref<6x6x6x8xf32, #tpu.memory_space<vmem>>, vector<4x4x4x8xf32>
    %cst_387 = arith.constant 1.406250e-01 : f32
    %276 = vector.broadcast %cst_387 : f32 to vector<4x4x4x8xf32>
    %277 = arith.mulf %276, %275 : vector<4x4x4x8xf32>
    %278 = arith.addf %274, %277 : vector<4x4x4x8xf32>
    %c2_388 = arith.constant 2 : index
    %c1_389 = arith.constant 1 : index
    %c2_390 = arith.constant 2 : index
    %c0_391 = arith.constant 0 : index
    %279 = vector.load %arg3[%c2_388, %c1_389, %c2_390, %c0_391] : memref<6x6x6x8xf32, #tpu.memory_space<vmem>>, vector<4x4x4x8xf32>
    %cst_392 = arith.constant 4.687500e-02 : f32
    %280 = vector.broadcast %cst_392 : f32 to vector<4x4x4x8xf32>
    %281 = arith.mulf %280, %279 : vector<4x4x4x8xf32>
    %282 = arith.addf %278, %281 : vector<4x4x4x8xf32>
    %c2_393 = arith.constant 2 : index
    %c2_394 = arith.constant 2 : index
    %c1_395 = arith.constant 1 : index
    %c0_396 = arith.constant 0 : index
    %283 = vector.load %arg3[%c2_393, %c2_394, %c1_395, %c0_396] : memref<6x6x6x8xf32, #tpu.memory_space<vmem>>, vector<4x4x4x8xf32>
    %cst_397 = arith.constant 4.687500e-02 : f32
    %284 = vector.broadcast %cst_397 : f32 to vector<4x4x4x8xf32>
    %285 = arith.mulf %284, %283 : vector<4x4x4x8xf32>
    %286 = arith.addf %282, %285 : vector<4x4x4x8xf32>
    %c2_398 = arith.constant 2 : index
    %c2_399 = arith.constant 2 : index
    %c2_400 = arith.constant 2 : index
    %c0_401 = arith.constant 0 : index
    %287 = vector.load %arg3[%c2_398, %c2_399, %c2_400, %c0_401] : memref<6x6x6x8xf32, #tpu.memory_space<vmem>>, vector<4x4x4x8xf32>
    %cst_402 = arith.constant 1.562500e-02 : f32
    %288 = vector.broadcast %cst_402 : f32 to vector<4x4x4x8xf32>
    %289 = arith.mulf %288, %287 : vector<4x4x4x8xf32>
    %290 = arith.addf %286, %289 : vector<4x4x4x8xf32>
    %291 = arith.truncf %290 : vector<4x4x4x8xf32> to vector<4x4x4x8xbf16>
    %c0_403 = arith.constant 0 : index
    %c7 = arith.constant 7 : index
    %c0_404 = arith.constant 0 : index
    %c0_405 = arith.constant 0 : index
    %c0_406 = arith.constant 0 : index
    %c0_407 = arith.constant 0 : index
    %292 = vector.load %arg2[%c0_403, %c7, %c0_404, %c0_405, %c0_406, %c0_407] : memref<1x8x4x4x4x8xbf16, #tpu.memory_space<vmem>>, vector<1x1x4x4x4x8xbf16>
    %293 = vector.shape_cast %292 : vector<1x1x4x4x4x8xbf16> to vector<4x4x4x8xbf16>
    %294 = vector.shape_cast %291 : vector<4x4x4x8xbf16> to vector<1x1x4x4x4x8xbf16>
    tpu.vector_store %arg2[%c0_403, %c7, %c0_404, %c0_405, %c0_406, %c0_407], %294 {strides = array<i32>} : memref<1x8x4x4x4x8xbf16, #tpu.memory_space<vmem>>, vector<1x1x4x4x4x8xbf16>,
    return
  }
  func.func @transform_0(%arg0: i32) -> (i32, i32, i32, i32, i32) {
    %c0_i32 = arith.constant 0 : i32
    %c0_i32_0 = arith.constant 0 : i32
    %c0_i32_1 = arith.constant 0 : i32
    %c0_i32_2 = arith.constant 0 : i32
    %c0_i32_3 = arith.constant 0 : i32
    return %arg0, %c0_i32, %c0_i32_0, %c0_i32_1, %c0_i32_2 : i32, i32, i32, i32, i32
  }
  func.func @transform_1(%arg0: i32) -> (i32, i32, i32, i32, i32, i32) {
    %c0_i32 = arith.constant 0 : i32
    %c0_i32_0 = arith.constant 0 : i32
    %c0_i32_1 = arith.constant 0 : i32
    %c0_i32_2 = arith.constant 0 : i32
    %c0_i32_3 = arith.constant 0 : i32
    %c0_i32_4 = arith.constant 0 : i32
    return %arg0, %c0_i32, %c0_i32_0, %c0_i32_1, %c0_i32_2, %c0_i32_3 : i32, i32, i32, i32, i32, i32
  }
}

</mosaic_0001>

<llo_original>
// kernel: tpu_custom_call.1
$region0: #{tpu_custom_call.1}
  #allocation0 [shape = 'u32[]', space=smem, size = 0x4, offset = 0x4, fixed_abs, tag = 'smem constant byte address 0x4 - core index']
  #allocation1 [shape = 'u32[144,128]{1,0:T(1,128)}', space=vmem, size = 0x12000, scoped, tag = 'internal scratch']
  #allocation2 [shape = 'f32[6,6,6,8]{3,2,1,0:T(8,128)}', space=vmem, size = 0x24000, scoped, tag = 'scratch operand']
  %s0 = inlined_call_operand.hbm [shape: f32[2,4,4,4,8], index: 0, kind: input, shape index: {}]
  %s1 = inlined_call_operand.hbm [shape: bf16[2,8,4,4,4,8], index: 1, kind: output, shape index: {}]
  %s2 = sld [smem:[#allocation0]]
  $region41: #{tpu_custom_call.1} parent=0
    _
  %s4 = ssub.s32 1, %s2
  %s5 = scalar_select 0, %s4, %s2
  $region1: #{tpu_custom_call.1} parent=0
    #allocation3 [shape = 'u8[65536]{0}', space=vmem, size = 0x10000, scoped, tag = 'input window, operand 0']
    #allocation4 [shape = 's32[2]{0}', space=sflag, size = 0x8, scoped, tag = 'scoped memory for tpu_custom_call.1']
    #allocation5 [shape = 's32[2]{0}', space=sflag, size = 0x8, scoped, tag = 'scoped memory for tpu_custom_call.1']
    #allocation6 [shape = 'u8[262144]{0}', space=vmem, size = 0x40000, scoped, tag = 'output window, operand 0']
    %6 = vsyncpa [#allocation4], 0
    %s7 = scalar_lea.sflag [#allocation4], 1
    %8 = vsyncpa %s7, 0
    %9 = vsyncpa [#allocation5], 0
    %s10 = scalar_lea.sflag [#allocation5], 1
    %11 = vsyncpa %s10, 0
    loop: start=0, step=1, limit=4
    $region2: #{tpu_custom_call.1} parent=1 // loop_pre_header
      _
    $region3: #{tpu_custom_call.1} parent=1 // loop_header
      %s13 = sphi 0, %s17
      %p14 = scmp.ge.s32.totalorder %s13, 4
      %s23 = sphi 0, %s25
      %s26 = sphi 0, %s23
      %s27 = sphi 0, %s26
      %s43 = sphi 0, %s27
      %s49 = sphi 0, %s51
      %s52 = sphi 0, %s49
      %s53 = sphi 0, %s52
      %s69 = sphi 0, %s53
    $region4: #{tpu_custom_call.1} parent=1 // loop_header_branch
      %16 = sbr.rel (%p14) target = $region8
    $region5: #{tpu_custom_call.1} parent=1 // loop_body
      %s18 = ssub.s32 %s13, 1
      %s19 = ssub.s32 %s13, 2
      %s20 = sadd.s32 %s13, 1
      %s21 = ssub.s32 %s13, %s20
      %p22 = scmp.eq.s32.totalorder %s21, 0
      %s24 = sadd.s32 %s23, 1
      %s25 = scalar_select %p22, %s23, %s24
      %p28 = pneg %p22
      %p29 = scmp.eq.s32.totalorder %s13, 1
      %p30 = por %p28, %p29
      %p31 = scmp.ne.s32.totalorder %s23, %s26
      %p32 = scmp.eq.s32.totalorder %s13, 0
      %p33 = por %p31, %p32
      %p34 = scmp.ne.s32.totalorder %s23, %s26
      %p35 = scmp.eq.s32.totalorder %s18, 1
      %p36 = por %p34, %p35
      %p37 = scmp.ne.s32.totalorder %s26, %s27
      %p38 = scmp.eq.s32.totalorder %s18, 0
      %p39 = por %p37, %p38
      %p40 = scmp.ne.s32.totalorder %s26, %s27
      %p41 = scmp.eq.s32.totalorder %s19, 1
      %p42 = por %p40, %p41
      %p44 = scmp.ne.s32.totalorder %s27, %s43
      %p45 = scmp.eq.s32.totalorder %s19, 0
      %p46 = por %p44, %p45
      %s47 = ssub.s32 %s13, %s20
      %p48 = scmp.eq.s32.totalorder %s47, 0
      %s50 = sadd.s32 %s49, 1
      %s51 = scalar_select %p48, %s49, %s50
      %p54 = pneg %p48
      %p55 = scmp.eq.s32.totalorder %s13, 1
      %p56 = por %p54, %p55
      %p57 = scmp.ne.s32.totalorder %s49, %s52
      %p58 = scmp.eq.s32.totalorder %s13, 0
      %p59 = por %p57, %p58
      %p60 = scmp.ne.s32.totalorder %s49, %s52
      %p61 = scmp.eq.s32.totalorder %s18, 1
      %p62 = por %p60, %p61
      %p63 = scmp.ne.s32.totalorder %s52, %s53
      %p64 = scmp.eq.s32.totalorder %s18, 0
      %p65 = por %p63, %p64
      %p66 = scmp.ne.s32.totalorder %s52, %s53
      %p67 = scmp.eq.s32.totalorder %s19, 1
      %p68 = por %p66, %p67
      %p70 = scmp.ne.s32.totalorder %s53, %s69
      %p71 = scmp.eq.s32.totalorder %s19, 0
      %p72 = por %p70, %p71
      %p73 = scmp.le.s32.totalorder 1, %s13
      %p74 = scmp.lt.s32.totalorder %s13, 3
      %p75 = pnand %p73, %p74
      %p76 = pneg %p75
      // Predicated region
      $region9: #{tpu_custom_call.1} parent=5 // pred_check
        _
      $region10: #{tpu_custom_call.1} parent=5 // pred_check_branch
        %78 = sbr.rel (%p75) target = $region12
      $region11: #{tpu_custom_call.1} parent=5 // pred_region
        %s79 = ssub.s32 %s13, 1
      $region12: #{tpu_custom_call.1} parent=5 // pred_fallthru
        _
      %p80 = scmp.lt.s32.totalorder %s13, 2
      // Predicated region
      $region13: #{tpu_custom_call.1} parent=5 // pred_check
        %p81 = pneg %p80
      $region14: #{tpu_custom_call.1} parent=5 // pred_check_branch
        %83 = sbr.rel (%p81) target = $region16
      $region15: #{tpu_custom_call.1} parent=5 // pred_region
        // Predicated region
        $region17: #{tpu_custom_call.1} parent=15 // pred_check
          %p84 = pneg %p33
        $region18: #{tpu_custom_call.1} parent=15 // pred_check_branch
          %86 = sbr.rel (%p84) target = $region20
        $region19: #{tpu_custom_call.1} parent=15 // pred_region
          %s87 = sand.u32 %s23, 1
          %s88 = scalar_lea.sflag [#allocation4], %s87
          %s89 = sand.u32 %s23, 1
          %s90 = smul.addr %s89, 64
          %s91 = scalar_lea.vmem [#allocation3], %s90
          %s93 = ssub.s32 1024, 1024
          %94 = vsyncadd %s88, %s93
          %s95 = smul.addr %s13, 16
          %s96 = smul.addr %s95, 64
          %s97 = scalar_lea.hbm %s0, %s96
          %s98 = sshll.u32 %s91, 4
          %s99 = int_to_ptr.vmem [resolvable:$true] %s98
          %104 = dma.hbm_to_vmem [thread:$0]  %s97, 1024, %s99, %s88, 64, 64, 4
        $region20: #{tpu_custom_call.1} parent=15 // pred_fallthru
          _
      $region16: #{tpu_custom_call.1} parent=5 // pred_fallthru
        _
      %p105 = scmp.le.s32.totalorder 1, %s13
      %p106 = scmp.lt.s32.totalorder %s13, 3
      %p107 = pnand %p105, %p106
      %p108 = pneg %p107
      // Predicated region
      $region21: #{tpu_custom_call.1} parent=5 // pred_check
        _
      $region22: #{tpu_custom_call.1} parent=5 // pred_check_branch
        %110 = sbr.rel (%p107) target = $region24
      $region23: #{tpu_custom_call.1} parent=5 // pred_region
        %s111 = ssub.s32 %s13, 1
        %s112 = sand.u32 %s26, 1
        %s113 = scalar_lea.sflag [#allocation4], %s112
        %s114 = sand.u32 %s26, 1
        %s115 = smul.addr %s114, 64
        %s116 = scalar_lea.vmem [#allocation3], %s115
        // Predicated region
        $region25: #{tpu_custom_call.1} parent=23 // pred_check
          %p117 = pneg %p39
        $region26: #{tpu_custom_call.1} parent=23 // pred_check_branch
          %119 = sbr.rel (%p117) target = $region28
        $region27: #{tpu_custom_call.1} parent=23 // pred_region
          %120 = dma.done %s113, 1024
        $region28: #{tpu_custom_call.1} parent=23 // pred_fallthru
          _
        %s121 = sand.u32 %s26, 1
        %s122 = scalar_lea.sflag [#allocation4], %s121
        %s123 = sand.u32 %s26, 1
        %s124 = smul.addr %s123, 64
        %s125 = scalar_lea.vmem [#allocation3], %s124
        %p126 = pneg %p39
        %p127 = pneg %p36
        %p128 = pneg %p65
        %p129 = pneg %p62
        %s130 = sand.u32 %s52, 1
        %s131 = scalar_lea.sflag [#allocation5], %s130
        %s132 = sand.u32 %s52, 1
        %s133 = smul.addr %s132, 256
        %s134 = scalar_lea.vmem [#allocation6], %s133
        %v135 = vld [vmem:[%s116] sm:$0xf]
        %v136 = vld [vmem:[%s116 + $0x4] sm:$0xf]
        %v137 = vld [vmem:[%s116 + $0x8] sm:$0xf]
        %v138 = vld [vmem:[%s116 + $0xc] sm:$0xf]
        %v139 = vld [vmem:[%s116 + $0x10] sm:$0xf]
        %v140 = vld [vmem:[%s116 + $0x14] sm:$0xf]
        %v141 = vld [vmem:[%s116 + $0x18] sm:$0xf]
        %v142 = vld [vmem:[%s116 + $0x1c] sm:$0xf]
        %v143 = vld [vmem:[%s116 + $0x20] sm:$0xf]
        %v144 = vld [vmem:[%s116 + $0x24] sm:$0xf]
        %v145 = vld [vmem:[%s116 + $0x28] sm:$0xf]
        %v146 = vld [vmem:[%s116 + $0x2c] sm:$0xf]
        %v147 = vld [vmem:[%s116 + $0x30] sm:$0xf]
        %v148 = vld [vmem:[%s116 + $0x34] sm:$0xf]
        %v149 = vld [vmem:[%s116 + $0x38] sm:$0xf]
        %v150 = vld [vmem:[%s116 + $0x3c] sm:$0xf]
        %s151 = scalar_lea.vmem [#allocation2], 56
        %vm152 = vcmask 60416
        %153 = vst.msk [vmem:[%s151 + $0x1] sm:$0xf] %vm152, %v135
        %154 = vst.msk [vmem:[%s151 + $0x9] sm:$0xf] %vm152, %v136
        %155 = vst.msk [vmem:[%s151 + $0x11] sm:$0xf] %vm152, %v137
        %156 = vst.msk [vmem:[%s151 + $0x19] sm:$0xf] %vm152, %v138
        %157 = vst.msk [vmem:[%s151 + $0x31] sm:$0xf] %vm152, %v139
        %158 = vst.msk [vmem:[%s151 + $0x39] sm:$0xf] %vm152, %v140
        %159 = vst.msk [vmem:[%s151 + $0x41] sm:$0xf] %vm152, %v141
        %160 = vst.msk [vmem:[%s151 + $0x49] sm:$0xf] %vm152, %v142
        %161 = vst.msk [vmem:[%s151 + $0x61] sm:$0xf] %vm152, %v143
        %162 = vst.msk [vmem:[%s151 + $0x69] sm:$0xf] %vm152, %v144
        %163 = vst.msk [vmem:[%s151 + $0x71] sm:$0xf] %vm152, %v145
        %164 = vst.msk [vmem:[%s151 + $0x79] sm:$0xf] %vm152, %v146
        %165 = vst.msk [vmem:[%s151 + $0x91] sm:$0xf] %vm152, %v147
        %166 = vst.msk [vmem:[%s151 + $0x99] sm:$0xf] %vm152, %v148
        %167 = vst.msk [vmem:[%s151 + $0xa1] sm:$0xf] %vm152, %v149
        %168 = vst.msk [vmem:[%s151 + $0xa9] sm:$0xf] %vm152, %v150
        %s169 = scalar_lea.vmem [#allocation2], 8
        %170 = vst.msk [vmem:[%s169 + $0x1] sm:$0xf] %vm152, %v135
        %171 = vst.msk [vmem:[%s169 + $0x9] sm:$0xf] %vm152, %v136
        %172 = vst.msk [vmem:[%s169 + $0x11] sm:$0xf] %vm152, %v137
        %173 = vst.msk [vmem:[%s169 + $0x19] sm:$0xf] %vm152, %v138
        %s174 = scalar_lea.vmem [#allocation2], 248
        %175 = vst.msk [vmem:[%s174 + $0x1] sm:$0xf] %vm152, %v147
        %176 = vst.msk [vmem:[%s174 + $0x9] sm:$0xf] %vm152, %v148
        %177 = vst.msk [vmem:[%s174 + $0x11] sm:$0xf] %vm152, %v149
        %178 = vst.msk [vmem:[%s174 + $0x19] sm:$0xf] %vm152, %v150
        %v179 = vld [vmem:[%s169 + $0x1] sm:$0xf]
        %v180 = vld [vmem:[%s169 + $0x31] sm:$0xf]
        %v181 = vld [vmem:[%s169 + $0x61] sm:$0xf]
        %v182 = vld [vmem:[%s169 + $0x91] sm:$0xf]
        %v183 = vld [vmem:[%s169 + $0xc1] sm:$0xf]
        %v184 = vld [vmem:[%s169 + $0xf1] sm:$0xf]
        %185 = vst.msk [vmem:[#allocation2 + $0x1] sm:$0xf] %vm152, %v179
        %186 = vst.msk [vmem:[#allocation2 + $0x31] sm:$0xf] %vm152, %v180
        %187 = vst.msk [vmem:[#allocation2 + $0x61] sm:$0xf] %vm152, %v181
        %188 = vst.msk [vmem:[#allocation2 + $0x91] sm:$0xf] %vm152, %v182
        %189 = vst.msk [vmem:[#allocation2 + $0xc1] sm:$0xf] %vm152, %v183
        %190 = vst.msk [vmem:[#allocation2 + $0xf1] sm:$0xf] %vm152, %v184
        %s191 = scalar_lea.vmem [#allocation2], 32
        %v192 = vld [vmem:[%s191 + $0x1] sm:$0xf]
        %v193 = vld [vmem:[%s191 + $0x31] sm:$0xf]
        %v194 = vld [vmem:[%s191 + $0x61] sm:$0xf]
        %v195 = vld [vmem:[%s191 + $0x91] sm:$0xf]
        %v196 = vld [vmem:[%s191 + $0xc1] sm:$0xf]
        %v197 = vld [vmem:[%s191 + $0xf1] sm:$0xf]
        %s198 = scalar_lea.vmem [#allocation2], 40
        %199 = vst.msk [vmem:[%s198 + $0x1] sm:$0xf] %vm152, %v192
        %200 = vst.msk [vmem:[%s198 + $0x31] sm:$0xf] %vm152, %v193
        %201 = vst.msk [vmem:[%s198 + $0x61] sm:$0xf] %vm152, %v194
        %202 = vst.msk [vmem:[%s198 + $0x91] sm:$0xf] %vm152, %v195
        %203 = vst.msk [vmem:[%s198 + $0xc1] sm:$0xf] %vm152, %v196
        %204 = vst.msk [vmem:[%s198 + $0xf1] sm:$0xf] %vm152, %v197
        %v205 = vld [vmem:[#allocation2 + $0x1] sm:$0x1]
        %v206 = vld [vmem:[#allocation2 + $0x9] sm:$0x1]
        %v207 = vld [vmem:[#allocation2 + $0x11] sm:$0x1]
        %v208 = vld [vmem:[#allocation2 + $0x19] sm:$0x1]
        %v209 = vld [vmem:[#allocation2 + $0x21] sm:$0x1]
        %v210 = vld [vmem:[#allocation2 + $0x29] sm:$0x1]
        %v211 = vld [vmem:[#allocation2 + $0x31] sm:$0x1]
        %v212 = vld [vmem:[#allocation2 + $0x39] sm:$0x1]
        %v213 = vld [vmem:[#allocation2 + $0x41] sm:$0x1]
        %v214 = vld [vmem:[#allocation2 + $0x49] sm:$0x1]
        %v215 = vld [vmem:[#allocation2 + $0x51] sm:$0x1]
        %v216 = vld [vmem:[#allocation2 + $0x59] sm:$0x1]
        %v217 = vld [vmem:[#allocation2 + $0x61] sm:$0x1]
        %v218 = vld [vmem:[#allocation2 + $0x69] sm:$0x1]
        %v219 = vld [vmem:[#allocation2 + $0x71] sm:$0x1]
        %v220 = vld [vmem:[#allocation2 + $0x79] sm:$0x1]
        %v221 = vld [vmem:[#allocation2 + $0x81] sm:$0x1]
        %v222 = vld [vmem:[#allocation2 + $0x89] sm:$0x1]
        %v223 = vld [vmem:[#allocation2 + $0x91] sm:$0x1]
        %v224 = vld [vmem:[#allocation2 + $0x99] sm:$0x1]
        %v225 = vld [vmem:[#allocation2 + $0xa1] sm:$0x1]
        %v226 = vld [vmem:[#allocation2 + $0xa9] sm:$0x1]
        %v227 = vld [vmem:[#allocation2 + $0xb1] sm:$0x1]
        %v228 = vld [vmem:[#allocation2 + $0xb9] sm:$0x1]
        %v229 = vld [vmem:[#allocation2 + $0xc1] sm:$0x1]
        %v230 = vld [vmem:[#allocation2 + $0xc9] sm:$0x1]
        %v231 = vld [vmem:[#allocation2 + $0xd1] sm:$0x1]
        %v232 = vld [vmem:[#allocation2 + $0xd9] sm:$0x1]
        %v233 = vld [vmem:[#allocation2 + $0xe1] sm:$0x1]
        %v234 = vld [vmem:[#allocation2 + $0xe9] sm:$0x1]
        %v235 = vld [vmem:[#allocation2 + $0xf1] sm:$0x1]
        %v236 = vld [vmem:[#allocation2 + $0xf9] sm:$0x1]
        %v237 = vld [vmem:[#allocation2 + $0x101] sm:$0x1]
        %v238 = vld [vmem:[#allocation2 + $0x109] sm:$0x1]
        %v239 = vld [vmem:[#allocation2 + $0x111] sm:$0x1]
        %v240 = vld [vmem:[#allocation2 + $0x119] sm:$0x1]
        %vm241 = vcmask 57344
        %242 = vst.msk [vmem:[#allocation2] sm:$0x1] %vm241, %v205
        %243 = vst.msk [vmem:[#allocation2 + $0x8] sm:$0x1] %vm241, %v206
        %244 = vst.msk [vmem:[#allocation2 + $0x10] sm:$0x1] %vm241, %v207
        %245 = vst.msk [vmem:[#allocation2 + $0x18] sm:$0x1] %vm241, %v208
        %246 = vst.msk [vmem:[#allocation2 + $0x20] sm:$0x1] %vm241, %v209
        %247 = vst.msk [vmem:[#allocation2 + $0x28] sm:$0x1] %vm241, %v210
        %248 = vst.msk [vmem:[#allocation2 + $0x30] sm:$0x1] %vm241, %v211
        %249 = vst.msk [vmem:[#allocation2 + $0x38] sm:$0x1] %vm241, %v212
        %250 = vst.msk [vmem:[#allocation2 + $0x40] sm:$0x1] %vm241, %v213
        %251 = vst.msk [vmem:[#allocation2 + $0x48] sm:$0x1] %vm241, %v214
        %252 = vst.msk [vmem:[#allocation2 + $0x50] sm:$0x1] %vm241, %v215
        %253 = vst.msk [vmem:[#allocation2 + $0x58] sm:$0x1] %vm241, %v216
        %254 = vst.msk [vmem:[#allocation2 + $0x60] sm:$0x1] %vm241, %v217
        %255 = vst.msk [vmem:[#allocation2 + $0x68] sm:$0x1] %vm241, %v218
        %256 = vst.msk [vmem:[#allocation2 + $0x70] sm:$0x1] %vm241, %v219
        %257 = vst.msk [vmem:[#allocation2 + $0x78] sm:$0x1] %vm241, %v220
        %258 = vst.msk [vmem:[#allocation2 + $0x80] sm:$0x1] %vm241, %v221
        %259 = vst.msk [vmem:[#allocation2 + $0x88] sm:$0x1] %vm241, %v222
        %260 = vst.msk [vmem:[#allocation2 + $0x90] sm:$0x1] %vm241, %v223
        %261 = vst.msk [vmem:[#allocation2 + $0x98] sm:$0x1] %vm241, %v224
        %262 = vst.msk [vmem:[#allocation2 + $0xa0] sm:$0x1] %vm241, %v225
        %263 = vst.msk [vmem:[#allocation2 + $0xa8] sm:$0x1] %vm241, %v226
        %264 = vst.msk [vmem:[#allocation2 + $0xb0] sm:$0x1] %vm241, %v227
        %265 = vst.msk [vmem:[#allocation2 + $0xb8] sm:$0x1] %vm241, %v228
        %266 = vst.msk [vmem:[#allocation2 + $0xc0] sm:$0x1] %vm241, %v229
        %267 = vst.msk [vmem:[#allocation2 + $0xc8] sm:$0x1] %vm241, %v230
        %268 = vst.msk [vmem:[#allocation2 + $0xd0] sm:$0x1] %vm241, %v231
        %269 = vst.msk [vmem:[#allocation2 + $0xd8] sm:$0x1] %vm241, %v232
        %270 = vst.msk [vmem:[#allocation2 + $0xe0] sm:$0x1] %vm241, %v233
        %271 = vst.msk [vmem:[#allocation2 + $0xe8] sm:$0x1] %vm241, %v234
        %272 = vst.msk [vmem:[#allocation2 + $0xf0] sm:$0x1] %vm241, %v235
        %273 = vst.msk [vmem:[#allocation2 + $0xf8] sm:$0x1] %vm241, %v236
        %274 = vst.msk [vmem:[#allocation2 + $0x100] sm:$0x1] %vm241, %v237
        %275 = vst.msk [vmem:[#allocation2 + $0x108] sm:$0x1] %vm241, %v238
        %276 = vst.msk [vmem:[#allocation2 + $0x110] sm:$0x1] %vm241, %v239
        %277 = vst.msk [vmem:[#allocation2 + $0x118] sm:$0x1] %vm241, %v240
        %v278 = vld [vmem:[#allocation2 + $0x4] sm:$0x1]
        %v279 = vld [vmem:[#allocation2 + $0xc] sm:$0x1]
        %v280 = vld [vmem:[#allocation2 + $0x14] sm:$0x1]
        %v281 = vld [vmem:[#allocation2 + $0x1c] sm:$0x1]
        %v282 = vld [vmem:[#allocation2 + $0x24] sm:$0x1]
        %v283 = vld [vmem:[#allocation2 + $0x2c] sm:$0x1]
        %v284 = vld [vmem:[#allocation2 + $0x34] sm:$0x1]
        %v285 = vld [vmem:[#allocation2 + $0x3c] sm:$0x1]
        %v286 = vld [vmem:[#allocation2 + $0x44] sm:$0x1]
        %v287 = vld [vmem:[#allocation2 + $0x4c] sm:$0x1]
        %v288 = vld [vmem:[#allocation2 + $0x54] sm:$0x1]
        %v289 = vld [vmem:[#allocation2 + $0x5c] sm:$0x1]
        %v290 = vld [vmem:[#allocation2 + $0x64] sm:$0x1]
        %v291 = vld [vmem:[#allocation2 + $0x6c] sm:$0x1]
        %v292 = vld [vmem:[#allocation2 + $0x74] sm:$0x1]
        %v293 = vld [vmem:[#allocation2 + $0x7c] sm:$0x1]
        %v294 = vld [vmem:[#allocation2 + $0x84] sm:$0x1]
        %v295 = vld [vmem:[#allocation2 + $0x8c] sm:$0x1]
        %v296 = vld [vmem:[#allocation2 + $0x94] sm:$0x1]
        %v297 = vld [vmem:[#allocation2 + $0x9c] sm:$0x1]
        %v298 = vld [vmem:[#allocation2 + $0xa4] sm:$0x1]
        %v299 = vld [vmem:[#allocation2 + $0xac] sm:$0x1]
        %v300 = vld [vmem:[#allocation2 + $0xb4] sm:$0x1]
        %v301 = vld [vmem:[#allocation2 + $0xbc] sm:$0x1]
        %v302 = vld [vmem:[#allocation2 + $0xc4] sm:$0x1]
        %v303 = vld [vmem:[#allocation2 + $0xcc] sm:$0x1]
        %v304 = vld [vmem:[#allocation2 + $0xd4] sm:$0x1]
        %v305 = vld [vmem:[#allocation2 + $0xdc] sm:$0x1]
        %v306 = vld [vmem:[#allocation2 + $0xe4] sm:$0x1]
        %v307 = vld [vmem:[#allocation2 + $0xec] sm:$0x1]
        %v308 = vld [vmem:[#allocation2 + $0xf4] sm:$0x1]
        %v309 = vld [vmem:[#allocation2 + $0xfc] sm:$0x1]
        %v310 = vld [vmem:[#allocation2 + $0x104] sm:$0x1]
        %v311 = vld [vmem:[#allocation2 + $0x10c] sm:$0x1]
        %v312 = vld [vmem:[#allocation2 + $0x114] sm:$0x1]
        %v313 = vld [vmem:[#allocation2 + $0x11c] sm:$0x1]
        %314 = vst.msk [vmem:[#allocation2 + $0x5] sm:$0x1] %vm241, %v278
        %315 = vst.msk [vmem:[#allocation2 + $0xd] sm:$0x1] %vm241, %v279
        %316 = vst.msk [vmem:[#allocation2 + $0x15] sm:$0x1] %vm241, %v280
        %317 = vst.msk [vmem:[#allocation2 + $0x1d] sm:$0x1] %vm241, %v281
        %318 = vst.msk [vmem:[#allocation2 + $0x25] sm:$0x1] %vm241, %v282
        %319 = vst.msk [vmem:[#allocation2 + $0x2d] sm:$0x1] %vm241, %v283
        %320 = vst.msk [vmem:[#allocation2 + $0x35] sm:$0x1] %vm241, %v284
        %321 = vst.msk [vmem:[#allocation2 + $0x3d] sm:$0x1] %vm241, %v285
        %322 = vst.msk [vmem:[#allocation2 + $0x45] sm:$0x1] %vm241, %v286
        %323 = vst.msk [vmem:[#allocation2 + $0x4d] sm:$0x1] %vm241, %v287
        %324 = vst.msk [vmem:[#allocation2 + $0x55] sm:$0x1] %vm241, %v288
        %325 = vst.msk [vmem:[#allocation2 + $0x5d] sm:$0x1] %vm241, %v289
        %326 = vst.msk [vmem:[#allocation2 + $0x65] sm:$0x1] %vm241, %v290
        %327 = vst.msk [vmem:[#allocation2 + $0x6d] sm:$0x1] %vm241, %v291
        %328 = vst.msk [vmem:[#allocation2 + $0x75] sm:$0x1] %vm241, %v292
        %329 = vst.msk [vmem:[#allocation2 + $0x7d] sm:$0x1] %vm241, %v293
        %330 = vst.msk [vmem:[#allocation2 + $0x85] sm:$0x1] %vm241, %v294
        %331 = vst.msk [vmem:[#allocation2 + $0x8d] sm:$0x1] %vm241, %v295
        %332 = vst.msk [vmem:[#allocation2 + $0x95] sm:$0x1] %vm241, %v296
        %333 = vst.msk [vmem:[#allocation2 + $0x9d] sm:$0x1] %vm241, %v297
        %334 = vst.msk [vmem:[#allocation2 + $0xa5] sm:$0x1] %vm241, %v298
        %335 = vst.msk [vmem:[#allocation2 + $0xad] sm:$0x1] %vm241, %v299
        %336 = vst.msk [vmem:[#allocation2 + $0xb5] sm:$0x1] %vm241, %v300
        %337 = vst.msk [vmem:[#allocation2 + $0xbd] sm:$0x1] %vm241, %v301
        %338 = vst.msk [vmem:[#allocation2 + $0xc5] sm:$0x1] %vm241, %v302
        %339 = vst.msk [vmem:[#allocation2 + $0xcd] sm:$0x1] %vm241, %v303
        %340 = vst.msk [vmem:[#allocation2 + $0xd5] sm:$0x1] %vm241, %v304
        %341 = vst.msk [vmem:[#allocation2 + $0xdd] sm:$0x1] %vm241, %v305
        %342 = vst.msk [vmem:[#allocation2 + $0xe5] sm:$0x1] %vm241, %v306
        %343 = vst.msk [vmem:[#allocation2 + $0xed] sm:$0x1] %vm241, %v307
        %344 = vst.msk [vmem:[#allocation2 + $0xf5] sm:$0x1] %vm241, %v308
        %345 = vst.msk [vmem:[#allocation2 + $0xfd] sm:$0x1] %vm241, %v309
        %346 = vst.msk [vmem:[#allocation2 + $0x105] sm:$0x1] %vm241, %v310
        %347 = vst.msk [vmem:[#allocation2 + $0x10d] sm:$0x1] %vm241, %v311
        %348 = vst.msk [vmem:[#allocation2 + $0x115] sm:$0x1] %vm241, %v312
        %349 = vst.msk [vmem:[#allocation2 + $0x11d] sm:$0x1] %vm241, %v313
        %v350 = vld [vmem:[%s151 + $0x1] sm:$0xf]
        %v351 = vld [vmem:[%s151 + $0x9] sm:$0xf]
        %v352 = vld [vmem:[%s151 + $0x11] sm:$0xf]
        %v353 = vld [vmem:[%s151 + $0x19] sm:$0xf]
        %v354 = vld [vmem:[%s151 + $0x31] sm:$0xf]
        %v355 = vld [vmem:[%s151 + $0x39] sm:$0xf]
        %v356 = vld [vmem:[%s151 + $0x41] sm:$0xf]
        %v357 = vld [vmem:[%s151 + $0x49] sm:$0xf]
        %v358 = vld [vmem:[%s151 + $0x61] sm:$0xf]
        %v359 = vld [vmem:[%s151 + $0x69] sm:$0xf]
        %v360 = vld [vmem:[%s151 + $0x71] sm:$0xf]
        %v361 = vld [vmem:[%s151 + $0x79] sm:$0xf]
        %v362 = vld [vmem:[%s151 + $0x91] sm:$0xf]
        %v363 = vld [vmem:[%s151 + $0x99] sm:$0xf]
        %v364 = vld [vmem:[%s151 + $0xa1] sm:$0xf]
        %v365 = vld [vmem:[%s151 + $0xa9] sm:$0xf]
        %v366 = vmul.f32 %v350, 0.421875
        %v367 = vmul.f32 %v351, 0.421875
        %v368 = vmul.f32 %v352, 0.421875
        %v369 = vmul.f32 %v353, 0.421875
        %v370 = vmul.f32 %v354, 0.421875
        %v371 = vmul.f32 %v355, 0.421875
        %v372 = vmul.f32 %v356, 0.421875
        %v373 = vmul.f32 %v357, 0.421875
        %v374 = vmul.f32 %v358, 0.421875
        %v375 = vmul.f32 %v359, 0.421875
        %v376 = vmul.f32 %v360, 0.421875
        %v377 = vmul.f32 %v361, 0.421875
        %v378 = vmul.f32 %v362, 0.421875
        %v379 = vmul.f32 %v363, 0.421875
        %v380 = vmul.f32 %v364, 0.421875
        %v381 = vmul.f32 %v365, 0.421875
        %v382 = vld [vmem:[%s151] sm:$0xf]
        %v383 = vld [vmem:[%s151 + $0x8] sm:$0xf]
        %v384 = vld [vmem:[%s151 + $0x10] sm:$0xf]
        %v385 = vld [vmem:[%s151 + $0x18] sm:$0xf]
        %v386 = vld [vmem:[%s151 + $0x30] sm:$0xf]
        %v387 = vld [vmem:[%s151 + $0x38] sm:$0xf]
        %v388 = vld [vmem:[%s151 + $0x40] sm:$0xf]
        %v389 = vld [vmem:[%s151 + $0x48] sm:$0xf]
        %v390 = vld [vmem:[%s151 + $0x60] sm:$0xf]
        %v391 = vld [vmem:[%s151 + $0x68] sm:$0xf]
        %v392 = vld [vmem:[%s151 + $0x70] sm:$0xf]
        %v393 = vld [vmem:[%s151 + $0x78] sm:$0xf]
        %v394 = vld [vmem:[%s151 + $0x90] sm:$0xf]
        %v395 = vld [vmem:[%s151 + $0x98] sm:$0xf]
        %v396 = vld [vmem:[%s151 + $0xa0] sm:$0xf]
        %v397 = vld [vmem:[%s151 + $0xa8] sm:$0xf]
        %v398 = vmul.f32 %v382, 0.140625
        %v399 = vmul.f32 %v383, 0.140625
        %v400 = vmul.f32 %v384, 0.140625
        %v401 = vmul.f32 %v385, 0.140625
        %v402 = vmul.f32 %v386, 0.140625
        %v403 = vmul.f32 %v387, 0.140625
        %v404 = vmul.f32 %v388, 0.140625
        %v405 = vmul.f32 %v389, 0.140625
        %v406 = vmul.f32 %v390, 0.140625
        %v407 = vmul.f32 %v391, 0.140625
        %v408 = vmul.f32 %v392, 0.140625
        %v409 = vmul.f32 %v393, 0.140625
        %v410 = vmul.f32 %v394, 0.140625
        %v411 = vmul.f32 %v395, 0.140625
        %v412 = vmul.f32 %v396, 0.140625
        %v413 = vmul.f32 %v397, 0.140625
        %v414 = vadd.f32 %v366, %v398
        %v415 = vadd.f32 %v367, %v399
        %v416 = vadd.f32 %v368, %v400
        %v417 = vadd.f32 %v369, %v401
        %v418 = vadd.f32 %v370, %v402
        %v419 = vadd.f32 %v371, %v403
        %v420 = vadd.f32 %v372, %v404
        %v421 = vadd.f32 %v373, %v405
        %v422 = vadd.f32 %v374, %v406
        %v423 = vadd.f32 %v375, %v407
        %v424 = vadd.f32 %v376, %v408
        %v425 = vadd.f32 %v377, %v409
        %v426 = vadd.f32 %v378, %v410
        %v427 = vadd.f32 %v379, %v411
        %v428 = vadd.f32 %v380, %v412
        %v429 = vadd.f32 %v381, %v413
        %s430 = scalar_lea.vmem [#allocation2], 48
        %v431 = vld [vmem:[%s430 + $0x1] sm:$0xf]
        %v432 = vld [vmem:[%s430 + $0x9] sm:$0xf]
        %v433 = vld [vmem:[%s430 + $0x11] sm:$0xf]
        %v434 = vld [vmem:[%s430 + $0x19] sm:$0xf]
        %v435 = vld [vmem:[%s430 + $0x31] sm:$0xf]
        %v436 = vld [vmem:[%s430 + $0x39] sm:$0xf]
        %v437 = vld [vmem:[%s430 + $0x41] sm:$0xf]
        %v438 = vld [vmem:[%s430 + $0x49] sm:$0xf]
        %v439 = vld [vmem:[%s430 + $0x61] sm:$0xf]
        %v440 = vld [vmem:[%s430 + $0x69] sm:$0xf]
        %v441 = vld [vmem:[%s430 + $0x71] sm:$0xf]
        %v442 = vld [vmem:[%s430 + $0x79] sm:$0xf]
        %v443 = vld [vmem:[%s430 + $0x91] sm:$0xf]
        %v444 = vld [vmem:[%s430 + $0x99] sm:$0xf]
        %v445 = vld [vmem:[%s430 + $0xa1] sm:$0xf]
        %v446 = vld [vmem:[%s430 + $0xa9] sm:$0xf]
        %v447 = vmul.f32 %v431, 0.140625
        %v448 = vmul.f32 %v432, 0.140625
        %v449 = vmul.f32 %v433, 0.140625
        %v450 = vmul.f32 %v434, 0.140625
        %v451 = vmul.f32 %v435, 0.140625
        %v452 = vmul.f32 %v436, 0.140625
        %v453 = vmul.f32 %v437, 0.140625
        %v454 = vmul.f32 %v438, 0.140625
        %v455 = vmul.f32 %v439, 0.140625
        %v456 = vmul.f32 %v440, 0.140625
        %v457 = vmul.f32 %v441, 0.140625
        %v458 = vmul.f32 %v442, 0.140625
        %v459 = vmul.f32 %v443, 0.140625
        %v460 = vmul.f32 %v444, 0.140625
        %v461 = vmul.f32 %v445, 0.140625
        %v462 = vmul.f32 %v446, 0.140625
        %v463 = vadd.f32 %v414, %v447
        %v464 = vadd.f32 %v415, %v448
        %v465 = vadd.f32 %v416, %v449
        %v466 = vadd.f32 %v417, %v450
        %v467 = vadd.f32 %v418, %v451
        %v468 = vadd.f32 %v419, %v452
        %v469 = vadd.f32 %v420, %v453
        %v470 = vadd.f32 %v421, %v454
        %v471 = vadd.f32 %v422, %v455
        %v472 = vadd.f32 %v423, %v456
        %v473 = vadd.f32 %v424, %v457
        %v474 = vadd.f32 %v425, %v458
        %v475 = vadd.f32 %v426, %v459
        %v476 = vadd.f32 %v427, %v460
        %v477 = vadd.f32 %v428, %v461
        %v478 = vadd.f32 %v429, %v462
        %v479 = vld [vmem:[%s430] sm:$0xf]
        %v480 = vld [vmem:[%s430 + $0x8] sm:$0xf]
        %v481 = vld [vmem:[%s430 + $0x10] sm:$0xf]
        %v482 = vld [vmem:[%s430 + $0x18] sm:$0xf]
        %v483 = vld [vmem:[%s430 + $0x30] sm:$0xf]
        %v484 = vld [vmem:[%s430 + $0x38] sm:$0xf]
        %v485 = vld [vmem:[%s430 + $0x40] sm:$0xf]
        %v486 = vld [vmem:[%s430 + $0x48] sm:$0xf]
        %v487 = vld [vmem:[%s430 + $0x60] sm:$0xf]
        %v488 = vld [vmem:[%s430 + $0x68] sm:$0xf]
        %v489 = vld [vmem:[%s430 + $0x70] sm:$0xf]
        %v490 = vld [vmem:[%s430 + $0x78] sm:$0xf]
        %v491 = vld [vmem:[%s430 + $0x90] sm:$0xf]
        %v492 = vld [vmem:[%s430 + $0x98] sm:$0xf]
        %v493 = vld [vmem:[%s430 + $0xa0] sm:$0xf]
        %v494 = vld [vmem:[%s430 + $0xa8] sm:$0xf]
        %v495 = vmul.f32 %v479, 0.046875
        %v496 = vmul.f32 %v480, 0.046875
        %v497 = vmul.f32 %v481, 0.046875
        %v498 = vmul.f32 %v482, 0.046875
        %v499 = vmul.f32 %v483, 0.046875
        %v500 = vmul.f32 %v484, 0.046875
        %v501 = vmul.f32 %v485, 0.046875
        %v502 = vmul.f32 %v486, 0.046875
        %v503 = vmul.f32 %v487, 0.046875
        %v504 = vmul.f32 %v488, 0.046875
        %v505 = vmul.f32 %v489, 0.046875
        %v506 = vmul.f32 %v490, 0.046875
        %v507 = vmul.f32 %v491, 0.046875
        %v508 = vmul.f32 %v492, 0.046875
        %v509 = vmul.f32 %v493, 0.046875
        %v510 = vmul.f32 %v494, 0.046875
        %v511 = vadd.f32 %v463, %v495
        %v512 = vadd.f32 %v464, %v496
        %v513 = vadd.f32 %v465, %v497
        %v514 = vadd.f32 %v466, %v498
        %v515 = vadd.f32 %v467, %v499
        %v516 = vadd.f32 %v468, %v500
        %v517 = vadd.f32 %v469, %v501
        %v518 = vadd.f32 %v470, %v502
        %v519 = vadd.f32 %v471, %v503
        %v520 = vadd.f32 %v472, %v504
        %v521 = vadd.f32 %v473, %v505
        %v522 = vadd.f32 %v474, %v506
        %v523 = vadd.f32 %v475, %v507
        %v524 = vadd.f32 %v476, %v508
        %v525 = vadd.f32 %v477, %v509
        %v526 = vadd.f32 %v478, %v510
        %v527 = vld [vmem:[%s169 + $0x1] sm:$0xf]
        %v528 = vld [vmem:[%s169 + $0x9] sm:$0xf]
        %v529 = vld [vmem:[%s169 + $0x11] sm:$0xf]
        %v530 = vld [vmem:[%s169 + $0x19] sm:$0xf]
        %v531 = vld [vmem:[%s169 + $0x31] sm:$0xf]
        %v532 = vld [vmem:[%s169 + $0x39] sm:$0xf]
        %v533 = vld [vmem:[%s169 + $0x41] sm:$0xf]
        %v534 = vld [vmem:[%s169 + $0x49] sm:$0xf]
        %v535 = vld [vmem:[%s169 + $0x61] sm:$0xf]
        %v536 = vld [vmem:[%s169 + $0x69] sm:$0xf]
        %v537 = vld [vmem:[%s169 + $0x71] sm:$0xf]
        %v538 = vld [vmem:[%s169 + $0x79] sm:$0xf]
        %v539 = vld [vmem:[%s169 + $0x91] sm:$0xf]
        %v540 = vld [vmem:[%s169 + $0x99] sm:$0xf]
        %v541 = vld [vmem:[%s169 + $0xa1] sm:$0xf]
        %v542 = vld [vmem:[%s169 + $0xa9] sm:$0xf]
        %v543 = vmul.f32 %v527, 0.140625
        %v544 = vmul.f32 %v528, 0.140625
        %v545 = vmul.f32 %v529, 0.140625
        %v546 = vmul.f32 %v530, 0.140625
        %v547 = vmul.f32 %v531, 0.140625
        %v548 = vmul.f32 %v532, 0.140625
        %v549 = vmul.f32 %v533, 0.140625
        %v550 = vmul.f32 %v534, 0.140625
        %v551 = vmul.f32 %v535, 0.140625
        %v552 = vmul.f32 %v536, 0.140625
        %v553 = vmul.f32 %v537, 0.140625
        %v554 = vmul.f32 %v538, 0.140625
        %v555 = vmul.f32 %v539, 0.140625
        %v556 = vmul.f32 %v540, 0.140625
        %v557 = vmul.f32 %v541, 0.140625
        %v558 = vmul.f32 %v542, 0.140625
        %v559 = vadd.f32 %v511, %v543
        %v560 = vadd.f32 %v512, %v544
        %v561 = vadd.f32 %v513, %v545
        %v562 = vadd.f32 %v514, %v546
        %v563 = vadd.f32 %v515, %v547
        %v564 = vadd.f32 %v516, %v548
        %v565 = vadd.f32 %v517, %v549
        %v566 = vadd.f32 %v518, %v550
        %v567 = vadd.f32 %v519, %v551
        %v568 = vadd.f32 %v520, %v552
        %v569 = vadd.f32 %v521, %v553
        %v570 = vadd.f32 %v522, %v554
        %v571 = vadd.f32 %v523, %v555
        %v572 = vadd.f32 %v524, %v556
        %v573 = vadd.f32 %v525, %v557
        %v574 = vadd.f32 %v526, %v558
        %v575 = vld [vmem:[%s169] sm:$0xf]
        %v576 = vld [vmem:[%s169 + $0x8] sm:$0xf]
        %v577 = vld [vmem:[%s169 + $0x10] sm:$0xf]
        %v578 = vld [vmem:[%s169 + $0x18] sm:$0xf]
        %v579 = vld [vmem:[%s169 + $0x30] sm:$0xf]
        %v580 = vld [vmem:[%s169 + $0x38] sm:$0xf]
        %v581 = vld [vmem:[%s169 + $0x40] sm:$0xf]
        %v582 = vld [vmem:[%s169 + $0x48] sm:$0xf]
        %v583 = vld [vmem:[%s169 + $0x60] sm:$0xf]
        %v584 = vld [vmem:[%s169 + $0x68] sm:$0xf]
        %v585 = vld [vmem:[%s169 + $0x70] sm:$0xf]
        %v586 = vld [vmem:[%s169 + $0x78] sm:$0xf]
        %v587 = vld [vmem:[%s169 + $0x90] sm:$0xf]
        %v588 = vld [vmem:[%s169 + $0x98] sm:$0xf]
        %v589 = vld [vmem:[%s169 + $0xa0] sm:$0xf]
        %v590 = vld [vmem:[%s169 + $0xa8] sm:$0xf]
        %v591 = vmul.f32 %v575, 0.046875
        %v592 = vmul.f32 %v576, 0.046875
        %v593 = vmul.f32 %v577, 0.046875
        %v594 = vmul.f32 %v578, 0.046875
        %v595 = vmul.f32 %v579, 0.046875
        %v596 = vmul.f32 %v580, 0.046875
        %v597 = vmul.f32 %v581, 0.046875
        %v598 = vmul.f32 %v582, 0.046875
        %v599 = vmul.f32 %v583, 0.046875
        %v600 = vmul.f32 %v584, 0.046875
        %v601 = vmul.f32 %v585, 0.046875
        %v602 = vmul.f32 %v586, 0.046875
        %v603 = vmul.f32 %v587, 0.046875
        %v604 = vmul.f32 %v588, 0.046875
        %v605 = vmul.f32 %v589, 0.046875
        %v606 = vmul.f32 %v590, 0.046875
        %v607 = vadd.f32 %v559, %v591
        %v608 = vadd.f32 %v560, %v592
        %v609 = vadd.f32 %v561, %v593
        %v610 = vadd.f32 %v562, %v594
        %v611 = vadd.f32 %v563, %v595
        %v612 = vadd.f32 %v564, %v596
        %v613 = vadd.f32 %v565, %v597
        %v614 = vadd.f32 %v566, %v598
        %v615 = vadd.f32 %v567, %v599
        %v616 = vadd.f32 %v568, %v600
        %v617 = vadd.f32 %v569, %v601
        %v618 = vadd.f32 %v570, %v602
        %v619 = vadd.f32 %v571, %v603
        %v620 = vadd.f32 %v572, %v604
        %v621 = vadd.f32 %v573, %v605
        %v622 = vadd.f32 %v574, %v606
        %v623 = vld [vmem:[#allocation2 + $0x1] sm:$0xf]
        %v624 = vld [vmem:[#allocation2 + $0x9] sm:$0xf]
        %v625 = vld [vmem:[#allocation2 + $0x11] sm:$0xf]
        %v626 = vld [vmem:[#allocation2 + $0x19] sm:$0xf]
        %v627 = vld [vmem:[#allocation2 + $0x31] sm:$0xf]
        %v628 = vld [vmem:[#allocation2 + $0x39] sm:$0xf]
        %v629 = vld [vmem:[#allocation2 + $0x41] sm:$0xf]
        %v630 = vld [vmem:[#allocation2 + $0x49] sm:$0xf]
        %v631 = vld [vmem:[#allocation2 + $0x61] sm:$0xf]
        %v632 = vld [vmem:[#allocation2 + $0x69] sm:$0xf]
        %v633 = vld [vmem:[#allocation2 + $0x71] sm:$0xf]
        %v634 = vld [vmem:[#allocation2 + $0x79] sm:$0xf]
        %v635 = vld [vmem:[#allocation2 + $0x91] sm:$0xf]
        %v636 = vld [vmem:[#allocation2 + $0x99] sm:$0xf]
        %v637 = vld [vmem:[#allocation2 + $0xa1] sm:$0xf]
        %v638 = vld [vmem:[#allocation2 + $0xa9] sm:$0xf]
        %v639 = vmul.f32 %v623, 0.046875
        %v640 = vmul.f32 %v624, 0.046875
        %v641 = vmul.f32 %v625, 0.046875
        %v642 = vmul.f32 %v626, 0.046875
        %v643 = vmul.f32 %v627, 0.046875
        %v644 = vmul.f32 %v628, 0.046875
        %v645 = vmul.f32 %v629, 0.046875
        %v646 = vmul.f32 %v630, 0.046875
        %v647 = vmul.f32 %v631, 0.046875
        %v648 = vmul.f32 %v632, 0.046875
        %v649 = vmul.f32 %v633, 0.046875
        %v650 = vmul.f32 %v634, 0.046875
        %v651 = vmul.f32 %v635, 0.046875
        %v652 = vmul.f32 %v636, 0.046875
        %v653 = vmul.f32 %v637, 0.046875
        %v654 = vmul.f32 %v638, 0.046875
        %v655 = vadd.f32 %v607, %v639
        %v656 = vadd.f32 %v608, %v640
        %v657 = vadd.f32 %v609, %v641
        %v658 = vadd.f32 %v610, %v642
        %v659 = vadd.f32 %v611, %v643
        %v660 = vadd.f32 %v612, %v644
        %v661 = vadd.f32 %v613, %v645
        %v662 = vadd.f32 %v614, %v646
        %v663 = vadd.f32 %v615, %v647
        %v664 = vadd.f32 %v616, %v648
        %v665 = vadd.f32 %v617, %v649
        %v666 = vadd.f32 %v618, %v650
        %v667 = vadd.f32 %v619, %v651
        %v668 = vadd.f32 %v620, %v652
        %v669 = vadd.f32 %v621, %v653
        %v670 = vadd.f32 %v622, %v654
        %v671 = vld [vmem:[#allocation2] sm:$0xf]
        %v672 = vld [vmem:[#allocation2 + $0x8] sm:$0xf]
        %v673 = vld [vmem:[#allocation2 + $0x10] sm:$0xf]
        %v674 = vld [vmem:[#allocation2 + $0x18] sm:$0xf]
        %v675 = vld [vmem:[#allocation2 + $0x30] sm:$0xf]
        %v676 = vld [vmem:[#allocation2 + $0x38] sm:$0xf]
        %v677 = vld [vmem:[#allocation2 + $0x40] sm:$0xf]
        %v678 = vld [vmem:[#allocation2 + $0x48] sm:$0xf]
        %v679 = vld [vmem:[#allocation2 + $0x60] sm:$0xf]
        %v680 = vld [vmem:[#allocation2 + $0x68] sm:$0xf]
        %v681 = vld [vmem:[#allocation2 + $0x70] sm:$0xf]
        %v682 = vld [vmem:[#allocation2 + $0x78] sm:$0xf]
        %v683 = vld [vmem:[#allocation2 + $0x90] sm:$0xf]
        %v684 = vld [vmem:[#allocation2 + $0x98] sm:$0xf]
        %v685 = vld [vmem:[#allocation2 + $0xa0] sm:$0xf]
        %v686 = vld [vmem:[#allocation2 + $0xa8] sm:$0xf]
        %v687 = vmul.f32 %v671, 0.015625
        %v688 = vmul.f32 %v672, 0.015625
        %v689 = vmul.f32 %v673, 0.015625
        %v690 = vmul.f32 %v674, 0.015625
        %v691 = vmul.f32 %v675, 0.015625
        %v692 = vmul.f32 %v676, 0.015625
        %v693 = vmul.f32 %v677, 0.015625
        %v694 = vmul.f32 %v678, 0.015625
        %v695 = vmul.f32 %v679, 0.015625
        %v696 = vmul.f32 %v680, 0.015625
        %v697 = vmul.f32 %v681, 0.015625
        %v698 = vmul.f32 %v682, 0.015625
        %v699 = vmul.f32 %v683, 0.015625
        %v700 = vmul.f32 %v684, 0.015625
        %v701 = vmul.f32 %v685, 0.015625
        %v702 = vmul.f32 %v686, 0.015625
        %v703 = vadd.f32 %v655, %v687
        %v704 = vadd.f32 %v656, %v688
        %v705 = vadd.f32 %v657, %v689
        %v706 = vadd.f32 %v658, %v690
        %v707 = vadd.f32 %v659, %v691
        %v708 = vadd.f32 %v660, %v692
        %v709 = vadd.f32 %v661, %v693
        %v710 = vadd.f32 %v662, %v694
        %v711 = vadd.f32 %v663, %v695
        %v712 = vadd.f32 %v664, %v696
        %v713 = vadd.f32 %v665, %v697
        %v714 = vadd.f32 %v666, %v698
        %v715 = vadd.f32 %v667, %v699
        %v716 = vadd.f32 %v668, %v700
        %v717 = vadd.f32 %v669, %v701
        %v718 = vadd.f32 %v670, %v702
        %v719 = vpack.c.bf16 %v703, %v703
        %v720 = vpack.c.bf16 %v704, %v704
        %v721 = vpack.c.bf16 %v705, %v705
        %v722 = vpack.c.bf16 %v706, %v706
        %v723 = vpack.c.bf16 %v707, %v707
        %v724 = vpack.c.bf16 %v708, %v708
        %v725 = vpack.c.bf16 %v709, %v709
        %v726 = vpack.c.bf16 %v710, %v710
        %v727 = vpack.c.bf16 %v711, %v711
        %v728 = vpack.c.bf16 %v712, %v712
        %v729 = vpack.c.bf16 %v713, %v713
        %v730 = vpack.c.bf16 %v714, %v714
        %v731 = vpack.c.bf16 %v715, %v715
        %v732 = vpack.c.bf16 %v716, %v716
        %v733 = vpack.c.bf16 %v717, %v717
        %v734 = vpack.c.bf16 %v718, %v718
        %vm735 = vcmask 58368
        %736 = vst.msk [vmem:[%s134] sm:$0x3] %vm735, %v719
        %737 = vst.msk [vmem:[%s134 + $0x2] sm:$0x3] %vm735, %v720
        %738 = vst.msk [vmem:[%s134 + $0x4] sm:$0x3] %vm735, %v721
        %739 = vst.msk [vmem:[%s134 + $0x6] sm:$0x3] %vm735, %v722
        %740 = vst.msk [vmem:[%s134 + $0x8] sm:$0x3] %vm735, %v723
        %741 = vst.msk [vmem:[%s134 + $0xa] sm:$0x3] %vm735, %v724
        %742 = vst.msk [vmem:[%s134 + $0xc] sm:$0x3] %vm735, %v725
        %743 = vst.msk [vmem:[%s134 + $0xe] sm:$0x3] %vm735, %v726
        %744 = vst.msk [vmem:[%s134 + $0x10] sm:$0x3] %vm735, %v727
        %745 = vst.msk [vmem:[%s134 + $0x12] sm:$0x3] %vm735, %v728
        %746 = vst.msk [vmem:[%s134 + $0x14] sm:$0x3] %vm735, %v729
        %747 = vst.msk [vmem:[%s134 + $0x16] sm:$0x3] %vm735, %v730
        %748 = vst.msk [vmem:[%s134 + $0x18] sm:$0x3] %vm735, %v731
        %749 = vst.msk [vmem:[%s134 + $0x1a] sm:$0x3] %vm735, %v732
        %750 = vst.msk [vmem:[%s134 + $0x1c] sm:$0x3] %vm735, %v733
        %751 = vst.msk [vmem:[%s134 + $0x1e] sm:$0x3] %vm735, %v734
        %v752 = vld [vmem:[%s151 + $0x1] sm:$0xf]
        %v753 = vld [vmem:[%s151 + $0x9] sm:$0xf]
        %v754 = vld [vmem:[%s151 + $0x11] sm:$0xf]
        %v755 = vld [vmem:[%s151 + $0x19] sm:$0xf]
        %v756 = vld [vmem:[%s151 + $0x31] sm:$0xf]
        %v757 = vld [vmem:[%s151 + $0x39] sm:$0xf]
        %v758 = vld [vmem:[%s151 + $0x41] sm:$0xf]
        %v759 = vld [vmem:[%s151 + $0x49] sm:$0xf]
        %v760 = vld [vmem:[%s151 + $0x61] sm:$0xf]
        %v761 = vld [vmem:[%s151 + $0x69] sm:$0xf]
        %v762 = vld [vmem:[%s151 + $0x71] sm:$0xf]
        %v763 = vld [vmem:[%s151 + $0x79] sm:$0xf]
        %v764 = vld [vmem:[%s151 + $0x91] sm:$0xf]
        %v765 = vld [vmem:[%s151 + $0x99] sm:$0xf]
        %v766 = vld [vmem:[%s151 + $0xa1] sm:$0xf]
        %v767 = vld [vmem:[%s151 + $0xa9] sm:$0xf]
        %v768 = vmul.f32 %v752, 0.421875
        %v769 = vmul.f32 %v753, 0.421875
        %v770 = vmul.f32 %v754, 0.421875
        %v771 = vmul.f32 %v755, 0.421875
        %v772 = vmul.f32 %v756, 0.421875
        %v773 = vmul.f32 %v757, 0.421875
        %v774 = vmul.f32 %v758, 0.421875
        %v775 = vmul.f32 %v759, 0.421875
        %v776 = vmul.f32 %v760, 0.421875
        %v777 = vmul.f32 %v761, 0.421875
        %v778 = vmul.f32 %v762, 0.421875
        %v779 = vmul.f32 %v763, 0.421875
        %v780 = vmul.f32 %v764, 0.421875
        %v781 = vmul.f32 %v765, 0.421875
        %v782 = vmul.f32 %v766, 0.421875
        %v783 = vmul.f32 %v767, 0.421875
        %v784 = vld [vmem:[%s151 + $0x2] sm:$0xf]
        %v785 = vld [vmem:[%s151 + $0xa] sm:$0xf]
        %v786 = vld [vmem:[%s151 + $0x12] sm:$0xf]
        %v787 = vld [vmem:[%s151 + $0x1a] sm:$0xf]
        %v788 = vld [vmem:[%s151 + $0x32] sm:$0xf]
        %v789 = vld [vmem:[%s151 + $0x3a] sm:$0xf]
        %v790 = vld [vmem:[%s151 + $0x42] sm:$0xf]
        %v791 = vld [vmem:[%s151 + $0x4a] sm:$0xf]
        %v792 = vld [vmem:[%s151 + $0x62] sm:$0xf]
        %v793 = vld [vmem:[%s151 + $0x6a] sm:$0xf]
        %v794 = vld [vmem:[%s151 + $0x72] sm:$0xf]
        %v795 = vld [vmem:[%s151 + $0x7a] sm:$0xf]
        %v796 = vld [vmem:[%s151 + $0x92] sm:$0xf]
        %v797 = vld [vmem:[%s151 + $0x9a] sm:$0xf]
        %v798 = vld [vmem:[%s151 + $0xa2] sm:$0xf]
        %v799 = vld [vmem:[%s151 + $0xaa] sm:$0xf]
        %v800 = vmul.f32 %v784, 0.140625
        %v801 = vmul.f32 %v785, 0.140625
        %v802 = vmul.f32 %v786, 0.140625
        %v803 = vmul.f32 %v787, 0.140625
        %v804 = vmul.f32 %v788, 0.140625
        %v805 = vmul.f32 %v789, 0.140625
        %v806 = vmul.f32 %v790, 0.140625
        %v807 = vmul.f32 %v791, 0.140625
        %v808 = vmul.f32 %v792, 0.140625
        %v809 = vmul.f32 %v793, 0.140625
        %v810 = vmul.f32 %v794, 0.140625
        %v811 = vmul.f32 %v795, 0.140625
        %v812 = vmul.f32 %v796, 0.140625
        %v813 = vmul.f32 %v797, 0.140625
        %v814 = vmul.f32 %v798, 0.140625
        %v815 = vmul.f32 %v799, 0.140625
        %v816 = vadd.f32 %v768, %v800
        %v817 = vadd.f32 %v769, %v801
        %v818 = vadd.f32 %v770, %v802
        %v819 = vadd.f32 %v771, %v803
        %v820 = vadd.f32 %v772, %v804
        %v821 = vadd.f32 %v773, %v805
        %v822 = vadd.f32 %v774, %v806
        %v823 = vadd.f32 %v775, %v807
        %v824 = vadd.f32 %v776, %v808
        %v825 = vadd.f32 %v777, %v809
        %v826 = vadd.f32 %v778, %v810
        %v827 = vadd.f32 %v779, %v811
        %v828 = vadd.f32 %v780, %v812
        %v829 = vadd.f32 %v781, %v813
        %v830 = vadd.f32 %v782, %v814
        %v831 = vadd.f32 %v783, %v815
        %v832 = vld [vmem:[%s430 + $0x1] sm:$0xf]
        %v833 = vld [vmem:[%s430 + $0x9] sm:$0xf]
        %v834 = vld [vmem:[%s430 + $0x11] sm:$0xf]
        %v835 = vld [vmem:[%s430 + $0x19] sm:$0xf]
        %v836 = vld [vmem:[%s430 + $0x31] sm:$0xf]
        %v837 = vld [vmem:[%s430 + $0x39] sm:$0xf]
        %v838 = vld [vmem:[%s430 + $0x41] sm:$0xf]
        %v839 = vld [vmem:[%s430 + $0x49] sm:$0xf]
        %v840 = vld [vmem:[%s430 + $0x61] sm:$0xf]
        %v841 = vld [vmem:[%s430 + $0x69] sm:$0xf]
        %v842 = vld [vmem:[%s430 + $0x71] sm:$0xf]
        %v843 = vld [vmem:[%s430 + $0x79] sm:$0xf]
        %v844 = vld [vmem:[%s430 + $0x91] sm:$0xf]
        %v845 = vld [vmem:[%s430 + $0x99] sm:$0xf]
        %v846 = vld [vmem:[%s430 + $0xa1] sm:$0xf]
        %v847 = vld [vmem:[%s430 + $0xa9] sm:$0xf]
        %v848 = vmul.f32 %v832, 0.140625
        %v849 = vmul.f32 %v833, 0.140625
        %v850 = vmul.f32 %v834, 0.140625
        %v851 = vmul.f32 %v835, 0.140625
        %v852 = vmul.f32 %v836, 0.140625
        %v853 = vmul.f32 %v837, 0.140625
        %v854 = vmul.f32 %v838, 0.140625
        %v855 = vmul.f32 %v839, 0.140625
        %v856 = vmul.f32 %v840, 0.140625
        %v857 = vmul.f32 %v841, 0.140625
        %v858 = vmul.f32 %v842, 0.140625
        %v859 = vmul.f32 %v843, 0.140625
        %v860 = vmul.f32 %v844, 0.140625
        %v861 = vmul.f32 %v845, 0.140625
        %v862 = vmul.f32 %v846, 0.140625
        %v863 = vmul.f32 %v847, 0.140625
        %v864 = vadd.f32 %v816, %v848
        %v865 = vadd.f32 %v817, %v849
        %v866 = vadd.f32 %v818, %v850
        %v867 = vadd.f32 %v819, %v851
        %v868 = vadd.f32 %v820, %v852
        %v869 = vadd.f32 %v821, %v853
        %v870 = vadd.f32 %v822, %v854
        %v871 = vadd.f32 %v823, %v855
        %v872 = vadd.f32 %v824, %v856
        %v873 = vadd.f32 %v825, %v857
        %v874 = vadd.f32 %v826, %v858
        %v875 = vadd.f32 %v827, %v859
        %v876 = vadd.f32 %v828, %v860
        %v877 = vadd.f32 %v829, %v861
        %v878 = vadd.f32 %v830, %v862
        %v879 = vadd.f32 %v831, %v863
        %v880 = vld [vmem:[%s430 + $0x2] sm:$0xf]
        %v881 = vld [vmem:[%s430 + $0xa] sm:$0xf]
        %v882 = vld [vmem:[%s430 + $0x12] sm:$0xf]
        %v883 = vld [vmem:[%s430 + $0x1a] sm:$0xf]
        %v884 = vld [vmem:[%s430 + $0x32] sm:$0xf]
        %v885 = vld [vmem:[%s430 + $0x3a] sm:$0xf]
        %v886 = vld [vmem:[%s430 + $0x42] sm:$0xf]
        %v887 = vld [vmem:[%s430 + $0x4a] sm:$0xf]
        %v888 = vld [vmem:[%s430 + $0x62] sm:$0xf]
        %v889 = vld [vmem:[%s430 + $0x6a] sm:$0xf]
        %v890 = vld [vmem:[%s430 + $0x72] sm:$0xf]
        %v891 = vld [vmem:[%s430 + $0x7a] sm:$0xf]
        %v892 = vld [vmem:[%s430 + $0x92] sm:$0xf]
        %v893 = vld [vmem:[%s430 + $0x9a] sm:$0xf]
        %v894 = vld [vmem:[%s430 + $0xa2] sm:$0xf]
        %v895 = vld [vmem:[%s430 + $0xaa] sm:$0xf]
        %v896 = vmul.f32 %v880, 0.046875
        %v897 = vmul.f32 %v881, 0.046875
        %v898 = vmul.f32 %v882, 0.046875
        %v899 = vmul.f32 %v883, 0.046875
        %v900 = vmul.f32 %v884, 0.046875
        %v901 = vmul.f32 %v885, 0.046875
        %v902 = vmul.f32 %v886, 0.046875
        %v903 = vmul.f32 %v887, 0.046875
        %v904 = vmul.f32 %v888, 0.046875
        %v905 = vmul.f32 %v889, 0.046875
        %v906 = vmul.f32 %v890, 0.046875
        %v907 = vmul.f32 %v891, 0.046875
        %v908 = vmul.f32 %v892, 0.046875
        %v909 = vmul.f32 %v893, 0.046875
        %v910 = vmul.f32 %v894, 0.046875
        %v911 = vmul.f32 %v895, 0.046875
        %v912 = vadd.f32 %v864, %v896
        %v913 = vadd.f32 %v865, %v897
        %v914 = vadd.f32 %v866, %v898
        %v915 = vadd.f32 %v867, %v899
        %v916 = vadd.f32 %v868, %v900
        %v917 = vadd.f32 %v869, %v901
        %v918 = vadd.f32 %v870, %v902
        %v919 = vadd.f32 %v871, %v903
        %v920 = vadd.f32 %v872, %v904
        %v921 = vadd.f32 %v873, %v905
        %v922 = vadd.f32 %v874, %v906
        %v923 = vadd.f32 %v875, %v907
        %v924 = vadd.f32 %v876, %v908
        %v925 = vadd.f32 %v877, %v909
        %v926 = vadd.f32 %v878, %v910
        %v927 = vadd.f32 %v879, %v911
        %v928 = vld [vmem:[%s169 + $0x1] sm:$0xf]
        %v929 = vld [vmem:[%s169 + $0x9] sm:$0xf]
        %v930 = vld [vmem:[%s169 + $0x11] sm:$0xf]
        %v931 = vld [vmem:[%s169 + $0x19] sm:$0xf]
        %v932 = vld [vmem:[%s169 + $0x31] sm:$0xf]
        %v933 = vld [vmem:[%s169 + $0x39] sm:$0xf]
        %v934 = vld [vmem:[%s169 + $0x41] sm:$0xf]
        %v935 = vld [vmem:[%s169 + $0x49] sm:$0xf]
        %v936 = vld [vmem:[%s169 + $0x61] sm:$0xf]
        %v937 = vld [vmem:[%s169 + $0x69] sm:$0xf]
        %v938 = vld [vmem:[%s169 + $0x71] sm:$0xf]
        %v939 = vld [vmem:[%s169 + $0x79] sm:$0xf]
        %v940 = vld [vmem:[%s169 + $0x91] sm:$0xf]
        %v941 = vld [vmem:[%s169 + $0x99] sm:$0xf]
        %v942 = vld [vmem:[%s169 + $0xa1] sm:$0xf]
        %v943 = vld [vmem:[%s169 + $0xa9] sm:$0xf]
        %v944 = vmul.f32 %v928, 0.140625
        %v945 = vmul.f32 %v929, 0.140625
        %v946 = vmul.f32 %v930, 0.140625
        %v947 = vmul.f32 %v931, 0.140625
        %v948 = vmul.f32 %v932, 0.140625
        %v949 = vmul.f32 %v933, 0.140625
        %v950 = vmul.f32 %v934, 0.140625
        %v951 = vmul.f32 %v935, 0.140625
        %v952 = vmul.f32 %v936, 0.140625
        %v953 = vmul.f32 %v937, 0.140625
        %v954 = vmul.f32 %v938, 0.140625
        %v955 = vmul.f32 %v939, 0.140625
        %v956 = vmul.f32 %v940, 0.140625
        %v957 = vmul.f32 %v941, 0.140625
        %v958 = vmul.f32 %v942, 0.140625
        %v959 = vmul.f32 %v943, 0.140625
        %v960 = vadd.f32 %v912, %v944
        %v961 = vadd.f32 %v913, %v945
        %v962 = vadd.f32 %v914, %v946
        %v963 = vadd.f32 %v915, %v947
        %v964 = vadd.f32 %v916, %v948
        %v965 = vadd.f32 %v917, %v949
        %v966 = vadd.f32 %v918, %v950
        %v967 = vadd.f32 %v919, %v951
        %v968 = vadd.f32 %v920, %v952
        %v969 = vadd.f32 %v921, %v953
        %v970 = vadd.f32 %v922, %v954
        %v971 = vadd.f32 %v923, %v955
        %v972 = vadd.f32 %v924, %v956
        %v973 = vadd.f32 %v925, %v957
        %v974 = vadd.f32 %v926, %v958
        %v975 = vadd.f32 %v927, %v959
        %v976 = vld [vmem:[%s169 + $0x2] sm:$0xf]
        %v977 = vld [vmem:[%s169 + $0xa] sm:$0xf]
        %v978 = vld [vmem:[%s169 + $0x12] sm:$0xf]
        %v979 = vld [vmem:[%s169 + $0x1a] sm:$0xf]
        %v980 = vld [vmem:[%s169 + $0x32] sm:$0xf]
        %v981 = vld [vmem:[%s169 + $0x3a] sm:$0xf]
        %v982 = vld [vmem:[%s169 + $0x42] sm:$0xf]
        %v983 = vld [vmem:[%s169 + $0x4a] sm:$0xf]
        %v984 = vld [vmem:[%s169 + $0x62] sm:$0xf]
        %v985 = vld [vmem:[%s169 + $0x6a] sm:$0xf]
        %v986 = vld [vmem:[%s169 + $0x72] sm:$0xf]
        %v987 = vld [vmem:[%s169 + $0x7a] sm:$0xf]
        %v988 = vld [vmem:[%s169 + $0x92] sm:$0xf]
        %v989 = vld [vmem:[%s169 + $0x9a] sm:$0xf]
        %v990 = vld [vmem:[%s169 + $0xa2] sm:$0xf]
        %v991 = vld [vmem:[%s169 + $0xaa] sm:$0xf]
        %v992 = vmul.f32 %v976, 0.046875
        %v993 = vmul.f32 %v977, 0.046875
        %v994 = vmul.f32 %v978, 0.046875
        %v995 = vmul.f32 %v979, 0.046875
        %v996 = vmul.f32 %v980, 0.046875
        %v997 = vmul.f32 %v981, 0.046875
        %v998 = vmul.f32 %v982, 0.046875
        %v999 = vmul.f32 %v983, 0.046875
        %v1000 = vmul.f32 %v984, 0.046875
        %v1001 = vmul.f32 %v985, 0.046875
        %v1002 = vmul.f32 %v986, 0.046875
        %v1003 = vmul.f32 %v987, 0.046875
        %v1004 = vmul.f32 %v988, 0.046875
        %v1005 = vmul.f32 %v989, 0.046875
        %v1006 = vmul.f32 %v990, 0.046875
        %v1007 = vmul.f32 %v991, 0.046875
        %v1008 = vadd.f32 %v960, %v992
        %v1009 = vadd.f32 %v961, %v993
        %v1010 = vadd.f32 %v962, %v994
        %v1011 = vadd.f32 %v963, %v995
        %v1012 = vadd.f32 %v964, %v996
        %v1013 = vadd.f32 %v965, %v997
        %v1014 = vadd.f32 %v966, %v998
        %v1015 = vadd.f32 %v967, %v999
        %v1016 = vadd.f32 %v968, %v1000
        %v1017 = vadd.f32 %v969, %v1001
        %v1018 = vadd.f32 %v970, %v1002
        %v1019 = vadd.f32 %v971, %v1003
        %v1020 = vadd.f32 %v972, %v1004
        %v1021 = vadd.f32 %v973, %v1005
        %v1022 = vadd.f32 %v974, %v1006
        %v1023 = vadd.f32 %v975, %v1007
        %v1024 = vld [vmem:[#allocation2 + $0x1] sm:$0xf]
        %v1025 = vld [vmem:[#allocation2 + $0x9] sm:$0xf]
        %v1026 = vld [vmem:[#allocation2 + $0x11] sm:$0xf]
        %v1027 = vld [vmem:[#allocation2 + $0x19] sm:$0xf]
        %v1028 = vld [vmem:[#allocation2 + $0x31] sm:$0xf]
        %v1029 = vld [vmem:[#allocation2 + $0x39] sm:$0xf]
        %v1030 = vld [vmem:[#allocation2 + $0x41] sm:$0xf]
        %v1031 = vld [vmem:[#allocation2 + $0x49] sm:$0xf]
        %v1032 = vld [vmem:[#allocation2 + $0x61] sm:$0xf]
        %v1033 = vld [vmem:[#allocation2 + $0x69] sm:$0xf]
        %v1034 = vld [vmem:[#allocation2 + $0x71] sm:$0xf]
        %v1035 = vld [vmem:[#allocation2 + $0x79] sm:$0xf]
        %v1036 = vld [vmem:[#allocation2 + $0x91] sm:$0xf]
        %v1037 = vld [vmem:[#allocation2 + $0x99] sm:$0xf]
        %v1038 = vld [vmem:[#allocation2 + $0xa1] sm:$0xf]
        %v1039 = vld [vmem:[#allocation2 + $0xa9] sm:$0xf]
        %v1040 = vmul.f32 %v1024, 0.046875
        %v1041 = vmul.f32 %v1025, 0.046875
        %v1042 = vmul.f32 %v1026, 0.046875
        %v1043 = vmul.f32 %v1027, 0.046875
        %v1044 = vmul.f32 %v1028, 0.046875
        %v1045 = vmul.f32 %v1029, 0.046875
        %v1046 = vmul.f32 %v1030, 0.046875
        %v1047 = vmul.f32 %v1031, 0.046875
        %v1048 = vmul.f32 %v1032, 0.046875
        %v1049 = vmul.f32 %v1033, 0.046875
        %v1050 = vmul.f32 %v1034, 0.046875
        %v1051 = vmul.f32 %v1035, 0.046875
        %v1052 = vmul.f32 %v1036, 0.046875
        %v1053 = vmul.f32 %v1037, 0.046875
        %v1054 = vmul.f32 %v1038, 0.046875
        %v1055 = vmul.f32 %v1039, 0.046875
        %v1056 = vadd.f32 %v1008, %v1040
        %v1057 = vadd.f32 %v1009, %v1041
        %v1058 = vadd.f32 %v1010, %v1042
        %v1059 = vadd.f32 %v1011, %v1043
        %v1060 = vadd.f32 %v1012, %v1044
        %v1061 = vadd.f32 %v1013, %v1045
        %v1062 = vadd.f32 %v1014, %v1046
        %v1063 = vadd.f32 %v1015, %v1047
        %v1064 = vadd.f32 %v1016, %v1048
        %v1065 = vadd.f32 %v1017, %v1049
        %v1066 = vadd.f32 %v1018, %v1050
        %v1067 = vadd.f32 %v1019, %v1051
        %v1068 = vadd.f32 %v1020, %v1052
        %v1069 = vadd.f32 %v1021, %v1053
        %v1070 = vadd.f32 %v1022, %v1054
        %v1071 = vadd.f32 %v1023, %v1055
        %v1072 = vld [vmem:[#allocation2 + $0x2] sm:$0xf]
        %v1073 = vld [vmem:[#allocation2 + $0xa] sm:$0xf]
        %v1074 = vld [vmem:[#allocation2 + $0x12] sm:$0xf]
        %v1075 = vld [vmem:[#allocation2 + $0x1a] sm:$0xf]
        %v1076 = vld [vmem:[#allocation2 + $0x32] sm:$0xf]
        %v1077 = vld [vmem:[#allocation2 + $0x3a] sm:$0xf]
        %v1078 = vld [vmem:[#allocation2 + $0x42] sm:$0xf]
        %v1079 = vld [vmem:[#allocation2 + $0x4a] sm:$0xf]
        %v1080 = vld [vmem:[#allocation2 + $0x62] sm:$0xf]
        %v1081 = vld [vmem:[#allocation2 + $0x6a] sm:$0xf]
        %v1082 = vld [vmem:[#allocation2 + $0x72] sm:$0xf]
        %v1083 = vld [vmem:[#allocation2 + $0x7a] sm:$0xf]
        %v1084 = vld [vmem:[#allocation2 + $0x92] sm:$0xf]
        %v1085 = vld [vmem:[#allocation2 + $0x9a] sm:$0xf]
        %v1086 = vld [vmem:[#allocation2 + $0xa2] sm:$0xf]
        %v1087 = vld [vmem:[#allocation2 + $0xaa] sm:$0xf]
        %v1088 = vmul.f32 %v1072, 0.015625
        %v1089 = vmul.f32 %v1073, 0.015625
        %v1090 = vmul.f32 %v1074, 0.015625
        %v1091 = vmul.f32 %v1075, 0.015625
        %v1092 = vmul.f32 %v1076, 0.015625
        %v1093 = vmul.f32 %v1077, 0.015625
        %v1094 = vmul.f32 %v1078, 0.015625
        %v1095 = vmul.f32 %v1079, 0.015625
        %v1096 = vmul.f32 %v1080, 0.015625
        %v1097 = vmul.f32 %v1081, 0.015625
        %v1098 = vmul.f32 %v1082, 0.015625
        %v1099 = vmul.f32 %v1083, 0.015625
        %v1100 = vmul.f32 %v1084, 0.015625
        %v1101 = vmul.f32 %v1085, 0.015625
        %v1102 = vmul.f32 %v1086, 0.015625
        %v1103 = vmul.f32 %v1087, 0.015625
        %v1104 = vadd.f32 %v1056, %v1088
        %v1105 = vadd.f32 %v1057, %v1089
        %v1106 = vadd.f32 %v1058, %v1090
        %v1107 = vadd.f32 %v1059, %v1091
        %v1108 = vadd.f32 %v1060, %v1092
        %v1109 = vadd.f32 %v1061, %v1093
        %v1110 = vadd.f32 %v1062, %v1094
        %v1111 = vadd.f32 %v1063, %v1095
        %v1112 = vadd.f32 %v1064, %v1096
        %v1113 = vadd.f32 %v1065, %v1097
        %v1114 = vadd.f32 %v1066, %v1098
        %v1115 = vadd.f32 %v1067, %v1099
        %v1116 = vadd.f32 %v1068, %v1100
        %v1117 = vadd.f32 %v1069, %v1101
        %v1118 = vadd.f32 %v1070, %v1102
        %v1119 = vadd.f32 %v1071, %v1103
        %v1120 = vpack.c.bf16 %v1104, %v1104
        %v1121 = vpack.c.bf16 %v1105, %v1105
        %v1122 = vpack.c.bf16 %v1106, %v1106
        %v1123 = vpack.c.bf16 %v1107, %v1107
        %v1124 = vpack.c.bf16 %v1108, %v1108
        %v1125 = vpack.c.bf16 %v1109, %v1109
        %v1126 = vpack.c.bf16 %v1110, %v1110
        %v1127 = vpack.c.bf16 %v1111, %v1111
        %v1128 = vpack.c.bf16 %v1112, %v1112
        %v1129 = vpack.c.bf16 %v1113, %v1113
        %v1130 = vpack.c.bf16 %v1114, %v1114
        %v1131 = vpack.c.bf16 %v1115, %v1115
        %v1132 = vpack.c.bf16 %v1116, %v1116
        %v1133 = vpack.c.bf16 %v1117, %v1117
        %v1134 = vpack.c.bf16 %v1118, %v1118
        %v1135 = vpack.c.bf16 %v1119, %v1119
        %s1136 = scalar_lea.vmem %s134, 32 [#allocation6]
        %1137 = vst.msk [vmem:[%s1136] sm:$0x3] %vm735, %v1120
        %1138 = vst.msk [vmem:[%s1136 + $0x2] sm:$0x3] %vm735, %v1121
        %1139 = vst.msk [vmem:[%s1136 + $0x4] sm:$0x3] %vm735, %v1122
        %1140 = vst.msk [vmem:[%s1136 + $0x6] sm:$0x3] %vm735, %v1123
        %1141 = vst.msk [vmem:[%s1136 + $0x8] sm:$0x3] %vm735, %v1124
        %1142 = vst.msk [vmem:[%s1136 + $0xa] sm:$0x3] %vm735, %v1125
        %1143 = vst.msk [vmem:[%s1136 + $0xc] sm:$0x3] %vm735, %v1126
        %1144 = vst.msk [vmem:[%s1136 + $0xe] sm:$0x3] %vm735, %v1127
        %1145 = vst.msk [vmem:[%s1136 + $0x10] sm:$0x3] %vm735, %v1128
        %1146 = vst.msk [vmem:[%s1136 + $0x12] sm:$0x3] %vm735, %v1129
        %1147 = vst.msk [vmem:[%s1136 + $0x14] sm:$0x3] %vm735, %v1130
        %1148 = vst.msk [vmem:[%s1136 + $0x16] sm:$0x3] %vm735, %v1131
        %1149 = vst.msk [vmem:[%s1136 + $0x18] sm:$0x3] %vm735, %v1132
        %1150 = vst.msk [vmem:[%s1136 + $0x1a] sm:$0x3] %vm735, %v1133
        %1151 = vst.msk [vmem:[%s1136 + $0x1c] sm:$0x3] %vm735, %v1134
        %1152 = vst.msk [vmem:[%s1136 + $0x1e] sm:$0x3] %vm735, %v1135
        %v1153 = vld [vmem:[%s151 + $0x1] sm:$0xf]
        %v1154 = vld [vmem:[%s151 + $0x9] sm:$0xf]
        %v1155 = vld [vmem:[%s151 + $0x11] sm:$0xf]
        %v1156 = vld [vmem:[%s151 + $0x19] sm:$0xf]
        %v1157 = vld [vmem:[%s151 + $0x31] sm:$0xf]
        %v1158 = vld [vmem:[%s151 + $0x39] sm:$0xf]
        %v1159 = vld [vmem:[%s151 + $0x41] sm:$0xf]
        %v1160 = vld [vmem:[%s151 + $0x49] sm:$0xf]
        %v1161 = vld [vmem:[%s151 + $0x61] sm:$0xf]
        %v1162 = vld [vmem:[%s151 + $0x69] sm:$0xf]
        %v1163 = vld [vmem:[%s151 + $0x71] sm:$0xf]
        %v1164 = vld [vmem:[%s151 + $0x79] sm:$0xf]
        %v1165 = vld [vmem:[%s151 + $0x91] sm:$0xf]
        %v1166 = vld [vmem:[%s151 + $0x99] sm:$0xf]
        %v1167 = vld [vmem:[%s151 + $0xa1] sm:$0xf]
        %v1168 = vld [vmem:[%s151 + $0xa9] sm:$0xf]
        %v1169 = vmul.f32 %v1153, 0.421875
        %v1170 = vmul.f32 %v1154, 0.421875
        %v1171 = vmul.f32 %v1155, 0.421875
        %v1172 = vmul.f32 %v1156, 0.421875
        %v1173 = vmul.f32 %v1157, 0.421875
        %v1174 = vmul.f32 %v1158, 0.421875
        %v1175 = vmul.f32 %v1159, 0.421875
        %v1176 = vmul.f32 %v1160, 0.421875
        %v1177 = vmul.f32 %v1161, 0.421875
        %v1178 = vmul.f32 %v1162, 0.421875
        %v1179 = vmul.f32 %v1163, 0.421875
        %v1180 = vmul.f32 %v1164, 0.421875
        %v1181 = vmul.f32 %v1165, 0.421875
        %v1182 = vmul.f32 %v1166, 0.421875
        %v1183 = vmul.f32 %v1167, 0.421875
        %v1184 = vmul.f32 %v1168, 0.421875
        %v1185 = vld [vmem:[%s151] sm:$0xf]
        %v1186 = vld [vmem:[%s151 + $0x8] sm:$0xf]
        %v1187 = vld [vmem:[%s151 + $0x10] sm:$0xf]
        %v1188 = vld [vmem:[%s151 + $0x18] sm:$0xf]
        %v1189 = vld [vmem:[%s151 + $0x30] sm:$0xf]
        %v1190 = vld [vmem:[%s151 + $0x38] sm:$0xf]
        %v1191 = vld [vmem:[%s151 + $0x40] sm:$0xf]
        %v1192 = vld [vmem:[%s151 + $0x48] sm:$0xf]
        %v1193 = vld [vmem:[%s151 + $0x60] sm:$0xf]
        %v1194 = vld [vmem:[%s151 + $0x68] sm:$0xf]
        %v1195 = vld [vmem:[%s151 + $0x70] sm:$0xf]
        %v1196 = vld [vmem:[%s151 + $0x78] sm:$0xf]
        %v1197 = vld [vmem:[%s151 + $0x90] sm:$0xf]
        %v1198 = vld [vmem:[%s151 + $0x98] sm:$0xf]
        %v1199 = vld [vmem:[%s151 + $0xa0] sm:$0xf]
        %v1200 = vld [vmem:[%s151 + $0xa8] sm:$0xf]
        %v1201 = vmul.f32 %v1185, 0.140625
        %v1202 = vmul.f32 %v1186, 0.140625
        %v1203 = vmul.f32 %v1187, 0.140625
        %v1204 = vmul.f32 %v1188, 0.140625
        %v1205 = vmul.f32 %v1189, 0.140625
        %v1206 = vmul.f32 %v1190, 0.140625
        %v1207 = vmul.f32 %v1191, 0.140625
        %v1208 = vmul.f32 %v1192, 0.140625
        %v1209 = vmul.f32 %v1193, 0.140625
        %v1210 = vmul.f32 %v1194, 0.140625
        %v1211 = vmul.f32 %v1195, 0.140625
        %v1212 = vmul.f32 %v1196, 0.140625
        %v1213 = vmul.f32 %v1197, 0.140625
        %v1214 = vmul.f32 %v1198, 0.140625
        %v1215 = vmul.f32 %v1199, 0.140625
        %v1216 = vmul.f32 %v1200, 0.140625
        %v1217 = vadd.f32 %v1169, %v1201
        %v1218 = vadd.f32 %v1170, %v1202
        %v1219 = vadd.f32 %v1171, %v1203
        %v1220 = vadd.f32 %v1172, %v1204
        %v1221 = vadd.f32 %v1173, %v1205
        %v1222 = vadd.f32 %v1174, %v1206
        %v1223 = vadd.f32 %v1175, %v1207
        %v1224 = vadd.f32 %v1176, %v1208
        %v1225 = vadd.f32 %v1177, %v1209
        %v1226 = vadd.f32 %v1178, %v1210
        %v1227 = vadd.f32 %v1179, %v1211
        %v1228 = vadd.f32 %v1180, %v1212
        %v1229 = vadd.f32 %v1181, %v1213
        %v1230 = vadd.f32 %v1182, %v1214
        %v1231 = vadd.f32 %v1183, %v1215
        %v1232 = vadd.f32 %v1184, %v1216
        %s1233 = scalar_lea.vmem [#allocation2], 64
        %v1234 = vld [vmem:[%s1233 + $0x1] sm:$0xf]
        %v1235 = vld [vmem:[%s1233 + $0x9] sm:$0xf]
        %v1236 = vld [vmem:[%s1233 + $0x11] sm:$0xf]
        %v1237 = vld [vmem:[%s1233 + $0x19] sm:$0xf]
        %v1238 = vld [vmem:[%s1233 + $0x31] sm:$0xf]
        %v1239 = vld [vmem:[%s1233 + $0x39] sm:$0xf]
        %v1240 = vld [vmem:[%s1233 + $0x41] sm:$0xf]
        %v1241 = vld [vmem:[%s1233 + $0x49] sm:$0xf]
        %v1242 = vld [vmem:[%s1233 + $0x61] sm:$0xf]
        %v1243 = vld [vmem:[%s1233 + $0x69] sm:$0xf]
        %v1244 = vld [vmem:[%s1233 + $0x71] sm:$0xf]
        %v1245 = vld [vmem:[%s1233 + $0x79] sm:$0xf]
        %v1246 = vld [vmem:[%s1233 + $0x91] sm:$0xf]
        %v1247 = vld [vmem:[%s1233 + $0x99] sm:$0xf]
        %v1248 = vld [vmem:[%s1233 + $0xa1] sm:$0xf]
        %v1249 = vld [vmem:[%s1233 + $0xa9] sm:$0xf]
        %v1250 = vmul.f32 %v1234, 0.140625
        %v1251 = vmul.f32 %v1235, 0.140625
        %v1252 = vmul.f32 %v1236, 0.140625
        %v1253 = vmul.f32 %v1237, 0.140625
        %v1254 = vmul.f32 %v1238, 0.140625
        %v1255 = vmul.f32 %v1239, 0.140625
        %v1256 = vmul.f32 %v1240, 0.140625
        %v1257 = vmul.f32 %v1241, 0.140625
        %v1258 = vmul.f32 %v1242, 0.140625
        %v1259 = vmul.f32 %v1243, 0.140625
        %v1260 = vmul.f32 %v1244, 0.140625
        %v1261 = vmul.f32 %v1245, 0.140625
        %v1262 = vmul.f32 %v1246, 0.140625
        %v1263 = vmul.f32 %v1247, 0.140625
        %v1264 = vmul.f32 %v1248, 0.140625
        %v1265 = vmul.f32 %v1249, 0.140625
        %v1266 = vadd.f32 %v1217, %v1250
        %v1267 = vadd.f32 %v1218, %v1251
        %v1268 = vadd.f32 %v1219, %v1252
        %v1269 = vadd.f32 %v1220, %v1253
        %v1270 = vadd.f32 %v1221, %v1254
        %v1271 = vadd.f32 %v1222, %v1255
        %v1272 = vadd.f32 %v1223, %v1256
        %v1273 = vadd.f32 %v1224, %v1257
        %v1274 = vadd.f32 %v1225, %v1258
        %v1275 = vadd.f32 %v1226, %v1259
        %v1276 = vadd.f32 %v1227, %v1260
        %v1277 = vadd.f32 %v1228, %v1261
        %v1278 = vadd.f32 %v1229, %v1262
        %v1279 = vadd.f32 %v1230, %v1263
        %v1280 = vadd.f32 %v1231, %v1264
        %v1281 = vadd.f32 %v1232, %v1265
        %v1282 = vld [vmem:[%s1233] sm:$0xf]
        %v1283 = vld [vmem:[%s1233 + $0x8] sm:$0xf]
        %v1284 = vld [vmem:[%s1233 + $0x10] sm:$0xf]
        %v1285 = vld [vmem:[%s1233 + $0x18] sm:$0xf]
        %v1286 = vld [vmem:[%s1233 + $0x30] sm:$0xf]
        %v1287 = vld [vmem:[%s1233 + $0x38] sm:$0xf]
        %v1288 = vld [vmem:[%s1233 + $0x40] sm:$0xf]
        %v1289 = vld [vmem:[%s1233 + $0x48] sm:$0xf]
        %v1290 = vld [vmem:[%s1233 + $0x60] sm:$0xf]
        %v1291 = vld [vmem:[%s1233 + $0x68] sm:$0xf]
        %v1292 = vld [vmem:[%s1233 + $0x70] sm:$0xf]
        %v1293 = vld [vmem:[%s1233 + $0x78] sm:$0xf]
        %v1294 = vld [vmem:[%s1233 + $0x90] sm:$0xf]
        %v1295 = vld [vmem:[%s1233 + $0x98] sm:$0xf]
        %v1296 = vld [vmem:[%s1233 + $0xa0] sm:$0xf]
        %v1297 = vld [vmem:[%s1233 + $0xa8] sm:$0xf]
        %v1298 = vmul.f32 %v1282, 0.046875
        %v1299 = vmul.f32 %v1283, 0.046875
        %v1300 = vmul.f32 %v1284, 0.046875
        %v1301 = vmul.f32 %v1285, 0.046875
        %v1302 = vmul.f32 %v1286, 0.046875
        %v1303 = vmul.f32 %v1287, 0.046875
        %v1304 = vmul.f32 %v1288, 0.046875
        %v1305 = vmul.f32 %v1289, 0.046875
        %v1306 = vmul.f32 %v1290, 0.046875
        %v1307 = vmul.f32 %v1291, 0.046875
        %v1308 = vmul.f32 %v1292, 0.046875
        %v1309 = vmul.f32 %v1293, 0.046875
        %v1310 = vmul.f32 %v1294, 0.046875
        %v1311 = vmul.f32 %v1295, 0.046875
        %v1312 = vmul.f32 %v1296, 0.046875
        %v1313 = vmul.f32 %v1297, 0.046875
        %v1314 = vadd.f32 %v1266, %v1298
        %v1315 = vadd.f32 %v1267, %v1299
        %v1316 = vadd.f32 %v1268, %v1300
        %v1317 = vadd.f32 %v1269, %v1301
        %v1318 = vadd.f32 %v1270, %v1302
        %v1319 = vadd.f32 %v1271, %v1303
        %v1320 = vadd.f32 %v1272, %v1304
        %v1321 = vadd.f32 %v1273, %v1305
        %v1322 = vadd.f32 %v1274, %v1306
        %v1323 = vadd.f32 %v1275, %v1307
        %v1324 = vadd.f32 %v1276, %v1308
        %v1325 = vadd.f32 %v1277, %v1309
        %v1326 = vadd.f32 %v1278, %v1310
        %v1327 = vadd.f32 %v1279, %v1311
        %v1328 = vadd.f32 %v1280, %v1312
        %v1329 = vadd.f32 %v1281, %v1313
        %v1330 = vld [vmem:[%s169 + $0x1] sm:$0xf]
        %v1331 = vld [vmem:[%s169 + $0x9] sm:$0xf]
        %v1332 = vld [vmem:[%s169 + $0x11] sm:$0xf]
        %v1333 = vld [vmem:[%s169 + $0x19] sm:$0xf]
        %v1334 = vld [vmem:[%s169 + $0x31] sm:$0xf]
        %v1335 = vld [vmem:[%s169 + $0x39] sm:$0xf]
        %v1336 = vld [vmem:[%s169 + $0x41] sm:$0xf]
        %v1337 = vld [vmem:[%s169 + $0x49] sm:$0xf]
        %v1338 = vld [vmem:[%s169 + $0x61] sm:$0xf]
        %v1339 = vld [vmem:[%s169 + $0x69] sm:$0xf]
        %v1340 = vld [vmem:[%s169 + $0x71] sm:$0xf]
        %v1341 = vld [vmem:[%s169 + $0x79] sm:$0xf]
        %v1342 = vld [vmem:[%s169 + $0x91] sm:$0xf]
        %v1343 = vld [vmem:[%s169 + $0x99] sm:$0xf]
        %v1344 = vld [vmem:[%s169 + $0xa1] sm:$0xf]
        %v1345 = vld [vmem:[%s169 + $0xa9] sm:$0xf]
        %v1346 = vmul.f32 %v1330, 0.140625
        %v1347 = vmul.f32 %v1331, 0.140625
        %v1348 = vmul.f32 %v1332, 0.140625
        %v1349 = vmul.f32 %v1333, 0.140625
        %v1350 = vmul.f32 %v1334, 0.140625
        %v1351 = vmul.f32 %v1335, 0.140625
        %v1352 = vmul.f32 %v1336, 0.140625
        %v1353 = vmul.f32 %v1337, 0.140625
        %v1354 = vmul.f32 %v1338, 0.140625
        %v1355 = vmul.f32 %v1339, 0.140625
        %v1356 = vmul.f32 %v1340, 0.140625
        %v1357 = vmul.f32 %v1341, 0.140625
        %v1358 = vmul.f32 %v1342, 0.140625
        %v1359 = vmul.f32 %v1343, 0.140625
        %v1360 = vmul.f32 %v1344, 0.140625
        %v1361 = vmul.f32 %v1345, 0.140625
        %v1362 = vadd.f32 %v1314, %v1346
        %v1363 = vadd.f32 %v1315, %v1347
        %v1364 = vadd.f32 %v1316, %v1348
        %v1365 = vadd.f32 %v1317, %v1349
        %v1366 = vadd.f32 %v1318, %v1350
        %v1367 = vadd.f32 %v1319, %v1351
        %v1368 = vadd.f32 %v1320, %v1352
        %v1369 = vadd.f32 %v1321, %v1353
        %v1370 = vadd.f32 %v1322, %v1354
        %v1371 = vadd.f32 %v1323, %v1355
        %v1372 = vadd.f32 %v1324, %v1356
        %v1373 = vadd.f32 %v1325, %v1357
        %v1374 = vadd.f32 %v1326, %v1358
        %v1375 = vadd.f32 %v1327, %v1359
        %v1376 = vadd.f32 %v1328, %v1360
        %v1377 = vadd.f32 %v1329, %v1361
        %v1378 = vld [vmem:[%s169] sm:$0xf]
        %v1379 = vld [vmem:[%s169 + $0x8] sm:$0xf]
        %v1380 = vld [vmem:[%s169 + $0x10] sm:$0xf]
        %v1381 = vld [vmem:[%s169 + $0x18] sm:$0xf]
        %v1382 = vld [vmem:[%s169 + $0x30] sm:$0xf]
        %v1383 = vld [vmem:[%s169 + $0x38] sm:$0xf]
        %v1384 = vld [vmem:[%s169 + $0x40] sm:$0xf]
        %v1385 = vld [vmem:[%s169 + $0x48] sm:$0xf]
        %v1386 = vld [vmem:[%s169 + $0x60] sm:$0xf]
        %v1387 = vld [vmem:[%s169 + $0x68] sm:$0xf]
        %v1388 = vld [vmem:[%s169 + $0x70] sm:$0xf]
        %v1389 = vld [vmem:[%s169 + $0x78] sm:$0xf]
        %v1390 = vld [vmem:[%s169 + $0x90] sm:$0xf]
        %v1391 = vld [vmem:[%s169 + $0x98] sm:$0xf]
        %v1392 = vld [vmem:[%s169 + $0xa0] sm:$0xf]
        %v1393 = vld [vmem:[%s169 + $0xa8] sm:$0xf]
        %v1394 = vmul.f32 %v1378, 0.046875
        %v1395 = vmul.f32 %v1379, 0.046875
        %v1396 = vmul.f32 %v1380, 0.046875
        %v1397 = vmul.f32 %v1381, 0.046875
        %v1398 = vmul.f32 %v1382, 0.046875
        %v1399 = vmul.f32 %v1383, 0.046875
        %v1400 = vmul.f32 %v1384, 0.046875
        %v1401 = vmul.f32 %v1385, 0.046875
        %v1402 = vmul.f32 %v1386, 0.046875
        %v1403 = vmul.f32 %v1387, 0.046875
        %v1404 = vmul.f32 %v1388, 0.046875
        %v1405 = vmul.f32 %v1389, 0.046875
        %v1406 = vmul.f32 %v1390, 0.046875
        %v1407 = vmul.f32 %v1391, 0.046875
        %v1408 = vmul.f32 %v1392, 0.046875
        %v1409 = vmul.f32 %v1393, 0.046875
        %v1410 = vadd.f32 %v1362, %v1394
        %v1411 = vadd.f32 %v1363, %v1395
        %v1412 = vadd.f32 %v1364, %v1396
        %v1413 = vadd.f32 %v1365, %v1397
        %v1414 = vadd.f32 %v1366, %v1398
        %v1415 = vadd.f32 %v1367, %v1399
        %v1416 = vadd.f32 %v1368, %v1400
        %v1417 = vadd.f32 %v1369, %v1401
        %v1418 = vadd.f32 %v1370, %v1402
        %v1419 = vadd.f32 %v1371, %v1403
        %v1420 = vadd.f32 %v1372, %v1404
        %v1421 = vadd.f32 %v1373, %v1405
        %v1422 = vadd.f32 %v1374, %v1406
        %v1423 = vadd.f32 %v1375, %v1407
        %v1424 = vadd.f32 %v1376, %v1408
        %v1425 = vadd.f32 %v1377, %v1409
        %s1426 = scalar_lea.vmem [#allocation2], 16
        %v1427 = vld [vmem:[%s1426 + $0x1] sm:$0xf]
        %v1428 = vld [vmem:[%s1426 + $0x9] sm:$0xf]
        %v1429 = vld [vmem:[%s1426 + $0x11] sm:$0xf]
        %v1430 = vld [vmem:[%s1426 + $0x19] sm:$0xf]
        %v1431 = vld [vmem:[%s1426 + $0x31] sm:$0xf]
        %v1432 = vld [vmem:[%s1426 + $0x39] sm:$0xf]
        %v1433 = vld [vmem:[%s1426 + $0x41] sm:$0xf]
        %v1434 = vld [vmem:[%s1426 + $0x49] sm:$0xf]
        %v1435 = vld [vmem:[%s1426 + $0x61] sm:$0xf]
        %v1436 = vld [vmem:[%s1426 + $0x69] sm:$0xf]
        %v1437 = vld [vmem:[%s1426 + $0x71] sm:$0xf]
        %v1438 = vld [vmem:[%s1426 + $0x79] sm:$0xf]
        %v1439 = vld [vmem:[%s1426 + $0x91] sm:$0xf]
        %v1440 = vld [vmem:[%s1426 + $0x99] sm:$0xf]
        %v1441 = vld [vmem:[%s1426 + $0xa1] sm:$0xf]
        %v1442 = vld [vmem:[%s1426 + $0xa9] sm:$0xf]
        %v1443 = vmul.f32 %v1427, 0.046875
        %v1444 = vmul.f32 %v1428, 0.046875
        %v1445 = vmul.f32 %v1429, 0.046875
        %v1446 = vmul.f32 %v1430, 0.046875
        %v1447 = vmul.f32 %v1431, 0.046875
        %v1448 = vmul.f32 %v1432, 0.046875
        %v1449 = vmul.f32 %v1433, 0.046875
        %v1450 = vmul.f32 %v1434, 0.046875
        %v1451 = vmul.f32 %v1435, 0.046875
        %v1452 = vmul.f32 %v1436, 0.046875
        %v1453 = vmul.f32 %v1437, 0.046875
        %v1454 = vmul.f32 %v1438, 0.046875
        %v1455 = vmul.f32 %v1439, 0.046875
        %v1456 = vmul.f32 %v1440, 0.046875
        %v1457 = vmul.f32 %v1441, 0.046875
        %v1458 = vmul.f32 %v1442, 0.046875
        %v1459 = vadd.f32 %v1410, %v1443
        %v1460 = vadd.f32 %v1411, %v1444
        %v1461 = vadd.f32 %v1412, %v1445
        %v1462 = vadd.f32 %v1413, %v1446
        %v1463 = vadd.f32 %v1414, %v1447
        %v1464 = vadd.f32 %v1415, %v1448
        %v1465 = vadd.f32 %v1416, %v1449
        %v1466 = vadd.f32 %v1417, %v1450
        %v1467 = vadd.f32 %v1418, %v1451
        %v1468 = vadd.f32 %v1419, %v1452
        %v1469 = vadd.f32 %v1420, %v1453
        %v1470 = vadd.f32 %v1421, %v1454
        %v1471 = vadd.f32 %v1422, %v1455
        %v1472 = vadd.f32 %v1423, %v1456
        %v1473 = vadd.f32 %v1424, %v1457
        %v1474 = vadd.f32 %v1425, %v1458
        %v1475 = vld [vmem:[%s1426] sm:$0xf]
        %v1476 = vld [vmem:[%s1426 + $0x8] sm:$0xf]
        %v1477 = vld [vmem:[%s1426 + $0x10] sm:$0xf]
        %v1478 = vld [vmem:[%s1426 + $0x18] sm:$0xf]
        %v1479 = vld [vmem:[%s1426 + $0x30] sm:$0xf]
        %v1480 = vld [vmem:[%s1426 + $0x38] sm:$0xf]
        %v1481 = vld [vmem:[%s1426 + $0x40] sm:$0xf]
        %v1482 = vld [vmem:[%s1426 + $0x48] sm:$0xf]
        %v1483 = vld [vmem:[%s1426 + $0x60] sm:$0xf]
        %v1484 = vld [vmem:[%s1426 + $0x68] sm:$0xf]
        %v1485 = vld [vmem:[%s1426 + $0x70] sm:$0xf]
        %v1486 = vld [vmem:[%s1426 + $0x78] sm:$0xf]
        %v1487 = vld [vmem:[%s1426 + $0x90] sm:$0xf]
        %v1488 = vld [vmem:[%s1426 + $0x98] sm:$0xf]
        %v1489 = vld [vmem:[%s1426 + $0xa0] sm:$0xf]
        %v1490 = vld [vmem:[%s1426 + $0xa8] sm:$0xf]
        %v1491 = vmul.f32 %v1475, 0.015625
        %v1492 = vmul.f32 %v1476, 0.015625
        %v1493 = vmul.f32 %v1477, 0.015625
        %v1494 = vmul.f32 %v1478, 0.015625
        %v1495 = vmul.f32 %v1479, 0.015625
        %v1496 = vmul.f32 %v1480, 0.015625
        %v1497 = vmul.f32 %v1481, 0.015625
        %v1498 = vmul.f32 %v1482, 0.015625
        %v1499 = vmul.f32 %v1483, 0.015625
        %v1500 = vmul.f32 %v1484, 0.015625
        %v1501 = vmul.f32 %v1485, 0.015625
        %v1502 = vmul.f32 %v1486, 0.015625
        %v1503 = vmul.f32 %v1487, 0.015625
        %v1504 = vmul.f32 %v1488, 0.015625
        %v1505 = vmul.f32 %v1489, 0.015625
        %v1506 = vmul.f32 %v1490, 0.015625
        %v1507 = vadd.f32 %v1459, %v1491
        %v1508 = vadd.f32 %v1460, %v1492
        %v1509 = vadd.f32 %v1461, %v1493
        %v1510 = vadd.f32 %v1462, %v1494
        %v1511 = vadd.f32 %v1463, %v1495
        %v1512 = vadd.f32 %v1464, %v1496
        %v1513 = vadd.f32 %v1465, %v1497
        %v1514 = vadd.f32 %v1466, %v1498
        %v1515 = vadd.f32 %v1467, %v1499
        %v1516 = vadd.f32 %v1468, %v1500
        %v1517 = vadd.f32 %v1469, %v1501
        %v1518 = vadd.f32 %v1470, %v1502
        %v1519 = vadd.f32 %v1471, %v1503
        %v1520 = vadd.f32 %v1472, %v1504
        %v1521 = vadd.f32 %v1473, %v1505
        %v1522 = vadd.f32 %v1474, %v1506
        %v1523 = vpack.c.bf16 %v1507, %v1507
        %v1524 = vpack.c.bf16 %v1508, %v1508
        %v1525 = vpack.c.bf16 %v1509, %v1509
        %v1526 = vpack.c.bf16 %v1510, %v1510
        %v1527 = vpack.c.bf16 %v1511, %v1511
        %v1528 = vpack.c.bf16 %v1512, %v1512
        %v1529 = vpack.c.bf16 %v1513, %v1513
        %v1530 = vpack.c.bf16 %v1514, %v1514
        %v1531 = vpack.c.bf16 %v1515, %v1515
        %v1532 = vpack.c.bf16 %v1516, %v1516
        %v1533 = vpack.c.bf16 %v1517, %v1517
        %v1534 = vpack.c.bf16 %v1518, %v1518
        %v1535 = vpack.c.bf16 %v1519, %v1519
        %v1536 = vpack.c.bf16 %v1520, %v1520
        %v1537 = vpack.c.bf16 %v1521, %v1521
        %v1538 = vpack.c.bf16 %v1522, %v1522
        %s1539 = scalar_lea.vmem %s134, 64 [#allocation6]
        %1540 = vst.msk [vmem:[%s1539] sm:$0x3] %vm735, %v1523
        %1541 = vst.msk [vmem:[%s1539 + $0x2] sm:$0x3] %vm735, %v1524
        %1542 = vst.msk [vmem:[%s1539 + $0x4] sm:$0x3] %vm735, %v1525
        %1543 = vst.msk [vmem:[%s1539 + $0x6] sm:$0x3] %vm735, %v1526
        %1544 = vst.msk [vmem:[%s1539 + $0x8] sm:$0x3] %vm735, %v1527
        %1545 = vst.msk [vmem:[%s1539 + $0xa] sm:$0x3] %vm735, %v1528
        %1546 = vst.msk [vmem:[%s1539 + $0xc] sm:$0x3] %vm735, %v1529
        %1547 = vst.msk [vmem:[%s1539 + $0xe] sm:$0x3] %vm735, %v1530
        %1548 = vst.msk [vmem:[%s1539 + $0x10] sm:$0x3] %vm735, %v1531
        %1549 = vst.msk [vmem:[%s1539 + $0x12] sm:$0x3] %vm735, %v1532
        %1550 = vst.msk [vmem:[%s1539 + $0x14] sm:$0x3] %vm735, %v1533
        %1551 = vst.msk [vmem:[%s1539 + $0x16] sm:$0x3] %vm735, %v1534
        %1552 = vst.msk [vmem:[%s1539 + $0x18] sm:$0x3] %vm735, %v1535
        %1553 = vst.msk [vmem:[%s1539 + $0x1a] sm:$0x3] %vm735, %v1536
        %1554 = vst.msk [vmem:[%s1539 + $0x1c] sm:$0x3] %vm735, %v1537
        %1555 = vst.msk [vmem:[%s1539 + $0x1e] sm:$0x3] %vm735, %v1538
        %v1556 = vld [vmem:[%s151 + $0x1] sm:$0xf]
        %v1557 = vld [vmem:[%s151 + $0x9] sm:$0xf]
        %v1558 = vld [vmem:[%s151 + $0x11] sm:$0xf]
        %v1559 = vld [vmem:[%s151 + $0x19] sm:$0xf]
        %v1560 = vld [vmem:[%s151 + $0x31] sm:$0xf]
        %v1561 = vld [vmem:[%s151 + $0x39] sm:$0xf]
        %v1562 = vld [vmem:[%s151 + $0x41] sm:$0xf]
        %v1563 = vld [vmem:[%s151 + $0x49] sm:$0xf]
        %v1564 = vld [vmem:[%s151 + $0x61] sm:$0xf]
        %v1565 = vld [vmem:[%s151 + $0x69] sm:$0xf]
        %v1566 = vld [vmem:[%s151 + $0x71] sm:$0xf]
        %v1567 = vld [vmem:[%s151 + $0x79] sm:$0xf]
        %v1568 = vld [vmem:[%s151 + $0x91] sm:$0xf]
        %v1569 = vld [vmem:[%s151 + $0x99] sm:$0xf]
        %v1570 = vld [vmem:[%s151 + $0xa1] sm:$0xf]
        %v1571 = vld [vmem:[%s151 + $0xa9] sm:$0xf]
        %v1572 = vmul.f32 %v1556, 0.421875
        %v1573 = vmul.f32 %v1557, 0.421875
        %v1574 = vmul.f32 %v1558, 0.421875
        %v1575 = vmul.f32 %v1559, 0.421875
        %v1576 = vmul.f32 %v1560, 0.421875
        %v1577 = vmul.f32 %v1561, 0.421875
        %v1578 = vmul.f32 %v1562, 0.421875
        %v1579 = vmul.f32 %v1563, 0.421875
        %v1580 = vmul.f32 %v1564, 0.421875
        %v1581 = vmul.f32 %v1565, 0.421875
        %v1582 = vmul.f32 %v1566, 0.421875
        %v1583 = vmul.f32 %v1567, 0.421875
        %v1584 = vmul.f32 %v1568, 0.421875
        %v1585 = vmul.f32 %v1569, 0.421875
        %v1586 = vmul.f32 %v1570, 0.421875
        %v1587 = vmul.f32 %v1571, 0.421875
        %v1588 = vld [vmem:[%s151 + $0x2] sm:$0xf]
        %v1589 = vld [vmem:[%s151 + $0xa] sm:$0xf]
        %v1590 = vld [vmem:[%s151 + $0x12] sm:$0xf]
        %v1591 = vld [vmem:[%s151 + $0x1a] sm:$0xf]
        %v1592 = vld [vmem:[%s151 + $0x32] sm:$0xf]
        %v1593 = vld [vmem:[%s151 + $0x3a] sm:$0xf]
        %v1594 = vld [vmem:[%s151 + $0x42] sm:$0xf]
        %v1595 = vld [vmem:[%s151 + $0x4a] sm:$0xf]
        %v1596 = vld [vmem:[%s151 + $0x62] sm:$0xf]
        %v1597 = vld [vmem:[%s151 + $0x6a] sm:$0xf]
        %v1598 = vld [vmem:[%s151 + $0x72] sm:$0xf]
        %v1599 = vld [vmem:[%s151 + $0x7a] sm:$0xf]
        %v1600 = vld [vmem:[%s151 + $0x92] sm:$0xf]
        %v1601 = vld [vmem:[%s151 + $0x9a] sm:$0xf]
        %v1602 = vld [vmem:[%s151 + $0xa2] sm:$0xf]
        %v1603 = vld [vmem:[%s151 + $0xaa] sm:$0xf]
        %v1604 = vmul.f32 %v1588, 0.140625
        %v1605 = vmul.f32 %v1589, 0.140625
        %v1606 = vmul.f32 %v1590, 0.140625
        %v1607 = vmul.f32 %v1591, 0.140625
        %v1608 = vmul.f32 %v1592, 0.140625
        %v1609 = vmul.f32 %v1593, 0.140625
        %v1610 = vmul.f32 %v1594, 0.140625
        %v1611 = vmul.f32 %v1595, 0.140625
        %v1612 = vmul.f32 %v1596, 0.140625
        %v1613 = vmul.f32 %v1597, 0.140625
        %v1614 = vmul.f32 %v1598, 0.140625
        %v1615 = vmul.f32 %v1599, 0.140625
        %v1616 = vmul.f32 %v1600, 0.140625
        %v1617 = vmul.f32 %v1601, 0.140625
        %v1618 = vmul.f32 %v1602, 0.140625
        %v1619 = vmul.f32 %v1603, 0.140625
        %v1620 = vadd.f32 %v1572, %v1604
        %v1621 = vadd.f32 %v1573, %v1605
        %v1622 = vadd.f32 %v1574, %v1606
        %v1623 = vadd.f32 %v1575, %v1607
        %v1624 = vadd.f32 %v1576, %v1608
        %v1625 = vadd.f32 %v1577, %v1609
        %v1626 = vadd.f32 %v1578, %v1610
        %v1627 = vadd.f32 %v1579, %v1611
        %v1628 = vadd.f32 %v1580, %v1612
        %v1629 = vadd.f32 %v1581, %v1613
        %v1630 = vadd.f32 %v1582, %v1614
        %v1631 = vadd.f32 %v1583, %v1615
        %v1632 = vadd.f32 %v1584, %v1616
        %v1633 = vadd.f32 %v1585, %v1617
        %v1634 = vadd.f32 %v1586, %v1618
        %v1635 = vadd.f32 %v1587, %v1619
        %v1636 = vld [vmem:[%s1233 + $0x1] sm:$0xf]
        %v1637 = vld [vmem:[%s1233 + $0x9] sm:$0xf]
        %v1638 = vld [vmem:[%s1233 + $0x11] sm:$0xf]
        %v1639 = vld [vmem:[%s1233 + $0x19] sm:$0xf]
        %v1640 = vld [vmem:[%s1233 + $0x31] sm:$0xf]
        %v1641 = vld [vmem:[%s1233 + $0x39] sm:$0xf]
        %v1642 = vld [vmem:[%s1233 + $0x41] sm:$0xf]
        %v1643 = vld [vmem:[%s1233 + $0x49] sm:$0xf]
        %v1644 = vld [vmem:[%s1233 + $0x61] sm:$0xf]
        %v1645 = vld [vmem:[%s1233 + $0x69] sm:$0xf]
        %v1646 = vld [vmem:[%s1233 + $0x71] sm:$0xf]
        %v1647 = vld [vmem:[%s1233 + $0x79] sm:$0xf]
        %v1648 = vld [vmem:[%s1233 + $0x91] sm:$0xf]
        %v1649 = vld [vmem:[%s1233 + $0x99] sm:$0xf]
        %v1650 = vld [vmem:[%s1233 + $0xa1] sm:$0xf]
        %v1651 = vld [vmem:[%s1233 + $0xa9] sm:$0xf]
        %v1652 = vmul.f32 %v1636, 0.140625
        %v1653 = vmul.f32 %v1637, 0.140625
        %v1654 = vmul.f32 %v1638, 0.140625
        %v1655 = vmul.f32 %v1639, 0.140625
        %v1656 = vmul.f32 %v1640, 0.140625
        %v1657 = vmul.f32 %v1641, 0.140625
        %v1658 = vmul.f32 %v1642, 0.140625
        %v1659 = vmul.f32 %v1643, 0.140625
        %v1660 = vmul.f32 %v1644, 0.140625
        %v1661 = vmul.f32 %v1645, 0.140625
        %v1662 = vmul.f32 %v1646, 0.140625
        %v1663 = vmul.f32 %v1647, 0.140625
        %v1664 = vmul.f32 %v1648, 0.140625
        %v1665 = vmul.f32 %v1649, 0.140625
        %v1666 = vmul.f32 %v1650, 0.140625
        %v1667 = vmul.f32 %v1651, 0.140625
        %v1668 = vadd.f32 %v1620, %v1652
        %v1669 = vadd.f32 %v1621, %v1653
        %v1670 = vadd.f32 %v1622, %v1654
        %v1671 = vadd.f32 %v1623, %v1655
        %v1672 = vadd.f32 %v1624, %v1656
        %v1673 = vadd.f32 %v1625, %v1657
        %v1674 = vadd.f32 %v1626, %v1658
        %v1675 = vadd.f32 %v1627, %v1659
        %v1676 = vadd.f32 %v1628, %v1660
        %v1677 = vadd.f32 %v1629, %v1661
        %v1678 = vadd.f32 %v1630, %v1662
        %v1679 = vadd.f32 %v1631, %v1663
        %v1680 = vadd.f32 %v1632, %v1664
        %v1681 = vadd.f32 %v1633, %v1665
        %v1682 = vadd.f32 %v1634, %v1666
        %v1683 = vadd.f32 %v1635, %v1667
        %v1684 = vld [vmem:[%s1233 + $0x2] sm:$0xf]
        %v1685 = vld [vmem:[%s1233 + $0xa] sm:$0xf]
        %v1686 = vld [vmem:[%s1233 + $0x12] sm:$0xf]
        %v1687 = vld [vmem:[%s1233 + $0x1a] sm:$0xf]
        %v1688 = vld [vmem:[%s1233 + $0x32] sm:$0xf]
        %v1689 = vld [vmem:[%s1233 + $0x3a] sm:$0xf]
        %v1690 = vld [vmem:[%s1233 + $0x42] sm:$0xf]
        %v1691 = vld [vmem:[%s1233 + $0x4a] sm:$0xf]
        %v1692 = vld [vmem:[%s1233 + $0x62] sm:$0xf]
        %v1693 = vld [vmem:[%s1233 + $0x6a] sm:$0xf]
        %v1694 = vld [vmem:[%s1233 + $0x72] sm:$0xf]
        %v1695 = vld [vmem:[%s1233 + $0x7a] sm:$0xf]
        %v1696 = vld [vmem:[%s1233 + $0x92] sm:$0xf]
        %v1697 = vld [vmem:[%s1233 + $0x9a] sm:$0xf]
        %v1698 = vld [vmem:[%s1233 + $0xa2] sm:$0xf]
        %v1699 = vld [vmem:[%s1233 + $0xaa] sm:$0xf]
        %v1700 = vmul.f32 %v1684, 0.046875
        %v1701 = vmul.f32 %v1685, 0.046875
        %v1702 = vmul.f32 %v1686, 0.046875
        %v1703 = vmul.f32 %v1687, 0.046875
        %v1704 = vmul.f32 %v1688, 0.046875
        %v1705 = vmul.f32 %v1689, 0.046875
        %v1706 = vmul.f32 %v1690, 0.046875
        %v1707 = vmul.f32 %v1691, 0.046875
        %v1708 = vmul.f32 %v1692, 0.046875
        %v1709 = vmul.f32 %v1693, 0.046875
        %v1710 = vmul.f32 %v1694, 0.046875
        %v1711 = vmul.f32 %v1695, 0.046875
        %v1712 = vmul.f32 %v1696, 0.046875
        %v1713 = vmul.f32 %v1697, 0.046875
        %v1714 = vmul.f32 %v1698, 0.046875
        %v1715 = vmul.f32 %v1699, 0.046875
        %v1716 = vadd.f32 %v1668, %v1700
        %v1717 = vadd.f32 %v1669, %v1701
        %v1718 = vadd.f32 %v1670, %v1702
        %v1719 = vadd.f32 %v1671, %v1703
        %v1720 = vadd.f32 %v1672, %v1704
        %v1721 = vadd.f32 %v1673, %v1705
        %v1722 = vadd.f32 %v1674, %v1706
        %v1723 = vadd.f32 %v1675, %v1707
        %v1724 = vadd.f32 %v1676, %v1708
        %v1725 = vadd.f32 %v1677, %v1709
        %v1726 = vadd.f32 %v1678, %v1710
        %v1727 = vadd.f32 %v1679, %v1711
        %v1728 = vadd.f32 %v1680, %v1712
        %v1729 = vadd.f32 %v1681, %v1713
        %v1730 = vadd.f32 %v1682, %v1714
        %v1731 = vadd.f32 %v1683, %v1715
        %v1732 = vld [vmem:[%s169 + $0x1] sm:$0xf]
        %v1733 = vld [vmem:[%s169 + $0x9] sm:$0xf]
        %v1734 = vld [vmem:[%s169 + $0x11] sm:$0xf]
        %v1735 = vld [vmem:[%s169 + $0x19] sm:$0xf]
        %v1736 = vld [vmem:[%s169 + $0x31] sm:$0xf]
        %v1737 = vld [vmem:[%s169 + $0x39] sm:$0xf]
        %v1738 = vld [vmem:[%s169 + $0x41] sm:$0xf]
        %v1739 = vld [vmem:[%s169 + $0x49] sm:$0xf]
        %v1740 = vld [vmem:[%s169 + $0x61] sm:$0xf]
        %v1741 = vld [vmem:[%s169 + $0x69] sm:$0xf]
        %v1742 = vld [vmem:[%s169 + $0x71] sm:$0xf]
        %v1743 = vld [vmem:[%s169 + $0x79] sm:$0xf]
        %v1744 = vld [vmem:[%s169 + $0x91] sm:$0xf]
        %v1745 = vld [vmem:[%s169 + $0x99] sm:$0xf]
        %v1746 = vld [vmem:[%s169 + $0xa1] sm:$0xf]
        %v1747 = vld [vmem:[%s169 + $0xa9] sm:$0xf]
        %v1748 = vmul.f32 %v1732, 0.140625
        %v1749 = vmul.f32 %v1733, 0.140625
        %v1750 = vmul.f32 %v1734, 0.140625
        %v1751 = vmul.f32 %v1735, 0.140625
        %v1752 = vmul.f32 %v1736, 0.140625
        %v1753 = vmul.f32 %v1737, 0.140625
        %v1754 = vmul.f32 %v1738, 0.140625
        %v1755 = vmul.f32 %v1739, 0.140625
        %v1756 = vmul.f32 %v1740, 0.140625
        %v1757 = vmul.f32 %v1741, 0.140625
        %v1758 = vmul.f32 %v1742, 0.140625
        %v1759 = vmul.f32 %v1743, 0.140625
        %v1760 = vmul.f32 %v1744, 0.140625
        %v1761 = vmul.f32 %v1745, 0.140625
        %v1762 = vmul.f32 %v1746, 0.140625
        %v1763 = vmul.f32 %v1747, 0.140625
        %v1764 = vadd.f32 %v1716, %v1748
        %v1765 = vadd.f32 %v1717, %v1749
        %v1766 = vadd.f32 %v1718, %v1750
        %v1767 = vadd.f32 %v1719, %v1751
        %v1768 = vadd.f32 %v1720, %v1752
        %v1769 = vadd.f32 %v1721, %v1753
        %v1770 = vadd.f32 %v1722, %v1754
        %v1771 = vadd.f32 %v1723, %v1755
        %v1772 = vadd.f32 %v1724, %v1756
        %v1773 = vadd.f32 %v1725, %v1757
        %v1774 = vadd.f32 %v1726, %v1758
        %v1775 = vadd.f32 %v1727, %v1759
        %v1776 = vadd.f32 %v1728, %v1760
        %v1777 = vadd.f32 %v1729, %v1761
        %v1778 = vadd.f32 %v1730, %v1762
        %v1779 = vadd.f32 %v1731, %v1763
        %v1780 = vld [vmem:[%s169 + $0x2] sm:$0xf]
        %v1781 = vld [vmem:[%s169 + $0xa] sm:$0xf]
        %v1782 = vld [vmem:[%s169 + $0x12] sm:$0xf]
        %v1783 = vld [vmem:[%s169 + $0x1a] sm:$0xf]
        %v1784 = vld [vmem:[%s169 + $0x32] sm:$0xf]
        %v1785 = vld [vmem:[%s169 + $0x3a] sm:$0xf]
        %v1786 = vld [vmem:[%s169 + $0x42] sm:$0xf]
        %v1787 = vld [vmem:[%s169 + $0x4a] sm:$0xf]
        %v1788 = vld [vmem:[%s169 + $0x62] sm:$0xf]
        %v1789 = vld [vmem:[%s169 + $0x6a] sm:$0xf]
        %v1790 = vld [vmem:[%s169 + $0x72] sm:$0xf]
        %v1791 = vld [vmem:[%s169 + $0x7a] sm:$0xf]
        %v1792 = vld [vmem:[%s169 + $0x92] sm:$0xf]
        %v1793 = vld [vmem:[%s169 + $0x9a] sm:$0xf]
        %v1794 = vld [vmem:[%s169 + $0xa2] sm:$0xf]
        %v1795 = vld [vmem:[%s169 + $0xaa] sm:$0xf]
        %v1796 = vmul.f32 %v1780, 0.046875
        %v1797 = vmul.f32 %v1781, 0.046875
        %v1798 = vmul.f32 %v1782, 0.046875
        %v1799 = vmul.f32 %v1783, 0.046875
        %v1800 = vmul.f32 %v1784, 0.046875
        %v1801 = vmul.f32 %v1785, 0.046875
        %v1802 = vmul.f32 %v1786, 0.046875
        %v1803 = vmul.f32 %v1787, 0.046875
        %v1804 = vmul.f32 %v1788, 0.046875
        %v1805 = vmul.f32 %v1789, 0.046875
        %v1806 = vmul.f32 %v1790, 0.046875
        %v1807 = vmul.f32 %v1791, 0.046875
        %v1808 = vmul.f32 %v1792, 0.046875
        %v1809 = vmul.f32 %v1793, 0.046875
        %v1810 = vmul.f32 %v1794, 0.046875
        %v1811 = vmul.f32 %v1795, 0.046875
        %v1812 = vadd.f32 %v1764, %v1796
        %v1813 = vadd.f32 %v1765, %v1797
        %v1814 = vadd.f32 %v1766, %v1798
        %v1815 = vadd.f32 %v1767, %v1799
        %v1816 = vadd.f32 %v1768, %v1800
        %v1817 = vadd.f32 %v1769, %v1801
        %v1818 = vadd.f32 %v1770, %v1802
        %v1819 = vadd.f32 %v1771, %v1803
        %v1820 = vadd.f32 %v1772, %v1804
        %v1821 = vadd.f32 %v1773, %v1805
        %v1822 = vadd.f32 %v1774, %v1806
        %v1823 = vadd.f32 %v1775, %v1807
        %v1824 = vadd.f32 %v1776, %v1808
        %v1825 = vadd.f32 %v1777, %v1809
        %v1826 = vadd.f32 %v1778, %v1810
        %v1827 = vadd.f32 %v1779, %v1811
        %v1828 = vld [vmem:[%s1426 + $0x1] sm:$0xf]
        %v1829 = vld [vmem:[%s1426 + $0x9] sm:$0xf]
        %v1830 = vld [vmem:[%s1426 + $0x11] sm:$0xf]
        %v1831 = vld [vmem:[%s1426 + $0x19] sm:$0xf]
        %v1832 = vld [vmem:[%s1426 + $0x31] sm:$0xf]
        %v1833 = vld [vmem:[%s1426 + $0x39] sm:$0xf]
        %v1834 = vld [vmem:[%s1426 + $0x41] sm:$0xf]
        %v1835 = vld [vmem:[%s1426 + $0x49] sm:$0xf]
        %v1836 = vld [vmem:[%s1426 + $0x61] sm:$0xf]
        %v1837 = vld [vmem:[%s1426 + $0x69] sm:$0xf]
        %v1838 = vld [vmem:[%s1426 + $0x71] sm:$0xf]
        %v1839 = vld [vmem:[%s1426 + $0x79] sm:$0xf]
        %v1840 = vld [vmem:[%s1426 + $0x91] sm:$0xf]
        %v1841 = vld [vmem:[%s1426 + $0x99] sm:$0xf]
        %v1842 = vld [vmem:[%s1426 + $0xa1] sm:$0xf]
        %v1843 = vld [vmem:[%s1426 + $0xa9] sm:$0xf]
        %v1844 = vmul.f32 %v1828, 0.046875
        %v1845 = vmul.f32 %v1829, 0.046875
        %v1846 = vmul.f32 %v1830, 0.046875
        %v1847 = vmul.f32 %v1831, 0.046875
        %v1848 = vmul.f32 %v1832, 0.046875
        %v1849 = vmul.f32 %v1833, 0.046875
        %v1850 = vmul.f32 %v1834, 0.046875
        %v1851 = vmul.f32 %v1835, 0.046875
        %v1852 = vmul.f32 %v1836, 0.046875
        %v1853 = vmul.f32 %v1837, 0.046875
        %v1854 = vmul.f32 %v1838, 0.046875
        %v1855 = vmul.f32 %v1839, 0.046875
        %v1856 = vmul.f32 %v1840, 0.046875
        %v1857 = vmul.f32 %v1841, 0.046875
        %v1858 = vmul.f32 %v1842, 0.046875
        %v1859 = vmul.f32 %v1843, 0.046875
        %v1860 = vadd.f32 %v1812, %v1844
        %v1861 = vadd.f32 %v1813, %v1845
        %v1862 = vadd.f32 %v1814, %v1846
        %v1863 = vadd.f32 %v1815, %v1847
        %v1864 = vadd.f32 %v1816, %v1848
        %v1865 = vadd.f32 %v1817, %v1849
        %v1866 = vadd.f32 %v1818, %v1850
        %v1867 = vadd.f32 %v1819, %v1851
        %v1868 = vadd.f32 %v1820, %v1852
        %v1869 = vadd.f32 %v1821, %v1853
        %v1870 = vadd.f32 %v1822, %v1854
        %v1871 = vadd.f32 %v1823, %v1855
        %v1872 = vadd.f32 %v1824, %v1856
        %v1873 = vadd.f32 %v1825, %v1857
        %v1874 = vadd.f32 %v1826, %v1858
        %v1875 = vadd.f32 %v1827, %v1859
        %v1876 = vld [vmem:[%s1426 + $0x2] sm:$0xf]
        %v1877 = vld [vmem:[%s1426 + $0xa] sm:$0xf]
        %v1878 = vld [vmem:[%s1426 + $0x12] sm:$0xf]
        %v1879 = vld [vmem:[%s1426 + $0x1a] sm:$0xf]
        %v1880 = vld [vmem:[%s1426 + $0x32] sm:$0xf]
        %v1881 = vld [vmem:[%s1426 + $0x3a] sm:$0xf]
        %v1882 = vld [vmem:[%s1426 + $0x42] sm:$0xf]
        %v1883 = vld [vmem:[%s1426 + $0x4a] sm:$0xf]
        %v1884 = vld [vmem:[%s1426 + $0x62] sm:$0xf]
        %v1885 = vld [vmem:[%s1426 + $0x6a] sm:$0xf]
        %v1886 = vld [vmem:[%s1426 + $0x72] sm:$0xf]
        %v1887 = vld [vmem:[%s1426 + $0x7a] sm:$0xf]
        %v1888 = vld [vmem:[%s1426 + $0x92] sm:$0xf]
        %v1889 = vld [vmem:[%s1426 + $0x9a] sm:$0xf]
        %v1890 = vld [vmem:[%s1426 + $0xa2] sm:$0xf]
        %v1891 = vld [vmem:[%s1426 + $0xaa] sm:$0xf]
        %v1892 = vmul.f32 %v1876, 0.015625
        %v1893 = vmul.f32 %v1877, 0.015625
        %v1894 = vmul.f32 %v1878, 0.015625
        %v1895 = vmul.f32 %v1879, 0.015625
        %v1896 = vmul.f32 %v1880, 0.015625
        %v1897 = vmul.f32 %v1881, 0.015625
        %v1898 = vmul.f32 %v1882, 0.015625
        %v1899 = vmul.f32 %v1883, 0.015625
        %v1900 = vmul.f32 %v1884, 0.015625
        %v1901 = vmul.f32 %v1885, 0.015625
        %v1902 = vmul.f32 %v1886, 0.015625
        %v1903 = vmul.f32 %v1887, 0.015625
        %v1904 = vmul.f32 %v1888, 0.015625
        %v1905 = vmul.f32 %v1889, 0.015625
        %v1906 = vmul.f32 %v1890, 0.015625
        %v1907 = vmul.f32 %v1891, 0.015625
        %v1908 = vadd.f32 %v1860, %v1892
        %v1909 = vadd.f32 %v1861, %v1893
        %v1910 = vadd.f32 %v1862, %v1894
        %v1911 = vadd.f32 %v1863, %v1895
        %v1912 = vadd.f32 %v1864, %v1896
        %v1913 = vadd.f32 %v1865, %v1897
        %v1914 = vadd.f32 %v1866, %v1898
        %v1915 = vadd.f32 %v1867, %v1899
        %v1916 = vadd.f32 %v1868, %v1900
        %v1917 = vadd.f32 %v1869, %v1901
        %v1918 = vadd.f32 %v1870, %v1902
        %v1919 = vadd.f32 %v1871, %v1903
        %v1920 = vadd.f32 %v1872, %v1904
        %v1921 = vadd.f32 %v1873, %v1905
        %v1922 = vadd.f32 %v1874, %v1906
        %v1923 = vadd.f32 %v1875, %v1907
        %v1924 = vpack.c.bf16 %v1908, %v1908
        %v1925 = vpack.c.bf16 %v1909, %v1909
        %v1926 = vpack.c.bf16 %v1910, %v1910
        %v1927 = vpack.c.bf16 %v1911, %v1911
        %v1928 = vpack.c.bf16 %v1912, %v1912
        %v1929 = vpack.c.bf16 %v1913, %v1913
        %v1930 = vpack.c.bf16 %v1914, %v1914
        %v1931 = vpack.c.bf16 %v1915, %v1915
        %v1932 = vpack.c.bf16 %v1916, %v1916
        %v1933 = vpack.c.bf16 %v1917, %v1917
        %v1934 = vpack.c.bf16 %v1918, %v1918
        %v1935 = vpack.c.bf16 %v1919, %v1919
        %v1936 = vpack.c.bf16 %v1920, %v1920
        %v1937 = vpack.c.bf16 %v1921, %v1921
        %v1938 = vpack.c.bf16 %v1922, %v1922
        %v1939 = vpack.c.bf16 %v1923, %v1923
        %s1940 = scalar_lea.vmem %s134, 96 [#allocation6]
        %1941 = vst.msk [vmem:[%s1940] sm:$0x3] %vm735, %v1924
        %1942 = vst.msk [vmem:[%s1940 + $0x2] sm:$0x3] %vm735, %v1925
        %1943 = vst.msk [vmem:[%s1940 + $0x4] sm:$0x3] %vm735, %v1926
        %1944 = vst.msk [vmem:[%s1940 + $0x6] sm:$0x3] %vm735, %v1927
        %1945 = vst.msk [vmem:[%s1940 + $0x8] sm:$0x3] %vm735, %v1928
        %1946 = vst.msk [vmem:[%s1940 + $0xa] sm:$0x3] %vm735, %v1929
        %1947 = vst.msk [vmem:[%s1940 + $0xc] sm:$0x3] %vm735, %v1930
        %1948 = vst.msk [vmem:[%s1940 + $0xe] sm:$0x3] %vm735, %v1931
        %1949 = vst.msk [vmem:[%s1940 + $0x10] sm:$0x3] %vm735, %v1932
        %1950 = vst.msk [vmem:[%s1940 + $0x12] sm:$0x3] %vm735, %v1933
        %1951 = vst.msk [vmem:[%s1940 + $0x14] sm:$0x3] %vm735, %v1934
        %1952 = vst.msk [vmem:[%s1940 + $0x16] sm:$0x3] %vm735, %v1935
        %1953 = vst.msk [vmem:[%s1940 + $0x18] sm:$0x3] %vm735, %v1936
        %1954 = vst.msk [vmem:[%s1940 + $0x1a] sm:$0x3] %vm735, %v1937
        %1955 = vst.msk [vmem:[%s1940 + $0x1c] sm:$0x3] %vm735, %v1938
        %1956 = vst.msk [vmem:[%s1940 + $0x1e] sm:$0x3] %vm735, %v1939
        %v1957 = vld [vmem:[%s151 + $0x1] sm:$0xf]
        %v1958 = vld [vmem:[%s151 + $0x9] sm:$0xf]
        %v1959 = vld [vmem:[%s151 + $0x11] sm:$0xf]
        %v1960 = vld [vmem:[%s151 + $0x19] sm:$0xf]
        %v1961 = vld [vmem:[%s151 + $0x31] sm:$0xf]
        %v1962 = vld [vmem:[%s151 + $0x39] sm:$0xf]
        %v1963 = vld [vmem:[%s151 + $0x41] sm:$0xf]
        %v1964 = vld [vmem:[%s151 + $0x49] sm:$0xf]
        %v1965 = vld [vmem:[%s151 + $0x61] sm:$0xf]
        %v1966 = vld [vmem:[%s151 + $0x69] sm:$0xf]
        %v1967 = vld [vmem:[%s151 + $0x71] sm:$0xf]
        %v1968 = vld [vmem:[%s151 + $0x79] sm:$0xf]
        %v1969 = vld [vmem:[%s151 + $0x91] sm:$0xf]
        %v1970 = vld [vmem:[%s151 + $0x99] sm:$0xf]
        %v1971 = vld [vmem:[%s151 + $0xa1] sm:$0xf]
        %v1972 = vld [vmem:[%s151 + $0xa9] sm:$0xf]
        %v1973 = vmul.f32 %v1957, 0.421875
        %v1974 = vmul.f32 %v1958, 0.421875
        %v1975 = vmul.f32 %v1959, 0.421875
        %v1976 = vmul.f32 %v1960, 0.421875
        %v1977 = vmul.f32 %v1961, 0.421875
        %v1978 = vmul.f32 %v1962, 0.421875
        %v1979 = vmul.f32 %v1963, 0.421875
        %v1980 = vmul.f32 %v1964, 0.421875
        %v1981 = vmul.f32 %v1965, 0.421875
        %v1982 = vmul.f32 %v1966, 0.421875
        %v1983 = vmul.f32 %v1967, 0.421875
        %v1984 = vmul.f32 %v1968, 0.421875
        %v1985 = vmul.f32 %v1969, 0.421875
        %v1986 = vmul.f32 %v1970, 0.421875
        %v1987 = vmul.f32 %v1971, 0.421875
        %v1988 = vmul.f32 %v1972, 0.421875
        %v1989 = vld [vmem:[%s151] sm:$0xf]
        %v1990 = vld [vmem:[%s151 + $0x8] sm:$0xf]
        %v1991 = vld [vmem:[%s151 + $0x10] sm:$0xf]
        %v1992 = vld [vmem:[%s151 + $0x18] sm:$0xf]
        %v1993 = vld [vmem:[%s151 + $0x30] sm:$0xf]
        %v1994 = vld [vmem:[%s151 + $0x38] sm:$0xf]
        %v1995 = vld [vmem:[%s151 + $0x40] sm:$0xf]
        %v1996 = vld [vmem:[%s151 + $0x48] sm:$0xf]
        %v1997 = vld [vmem:[%s151 + $0x60] sm:$0xf]
        %v1998 = vld [vmem:[%s151 + $0x68] sm:$0xf]
        %v1999 = vld [vmem:[%s151 + $0x70] sm:$0xf]
        %v2000 = vld [vmem:[%s151 + $0x78] sm:$0xf]
        %v2001 = vld [vmem:[%s151 + $0x90] sm:$0xf]
        %v2002 = vld [vmem:[%s151 + $0x98] sm:$0xf]
        %v2003 = vld [vmem:[%s151 + $0xa0] sm:$0xf]
        %v2004 = vld [vmem:[%s151 + $0xa8] sm:$0xf]
        %v2005 = vmul.f32 %v1989, 0.140625
        %v2006 = vmul.f32 %v1990, 0.140625
        %v2007 = vmul.f32 %v1991, 0.140625
        %v2008 = vmul.f32 %v1992, 0.140625
        %v2009 = vmul.f32 %v1993, 0.140625
        %v2010 = vmul.f32 %v1994, 0.140625
        %v2011 = vmul.f32 %v1995, 0.140625
        %v2012 = vmul.f32 %v1996, 0.140625
        %v2013 = vmul.f32 %v1997, 0.140625
        %v2014 = vmul.f32 %v1998, 0.140625
        %v2015 = vmul.f32 %v1999, 0.140625
        %v2016 = vmul.f32 %v2000, 0.140625
        %v2017 = vmul.f32 %v2001, 0.140625
        %v2018 = vmul.f32 %v2002, 0.140625
        %v2019 = vmul.f32 %v2003, 0.140625
        %v2020 = vmul.f32 %v2004, 0.140625
        %v2021 = vadd.f32 %v1973, %v2005
        %v2022 = vadd.f32 %v1974, %v2006
        %v2023 = vadd.f32 %v1975, %v2007
        %v2024 = vadd.f32 %v1976, %v2008
        %v2025 = vadd.f32 %v1977, %v2009
        %v2026 = vadd.f32 %v1978, %v2010
        %v2027 = vadd.f32 %v1979, %v2011
        %v2028 = vadd.f32 %v1980, %v2012
        %v2029 = vadd.f32 %v1981, %v2013
        %v2030 = vadd.f32 %v1982, %v2014
        %v2031 = vadd.f32 %v1983, %v2015
        %v2032 = vadd.f32 %v1984, %v2016
        %v2033 = vadd.f32 %v1985, %v2017
        %v2034 = vadd.f32 %v1986, %v2018
        %v2035 = vadd.f32 %v1987, %v2019
        %v2036 = vadd.f32 %v1988, %v2020
        %v2037 = vld [vmem:[%s430 + $0x1] sm:$0xf]
        %v2038 = vld [vmem:[%s430 + $0x9] sm:$0xf]
        %v2039 = vld [vmem:[%s430 + $0x11] sm:$0xf]
        %v2040 = vld [vmem:[%s430 + $0x19] sm:$0xf]
        %v2041 = vld [vmem:[%s430 + $0x31] sm:$0xf]
        %v2042 = vld [vmem:[%s430 + $0x39] sm:$0xf]
        %v2043 = vld [vmem:[%s430 + $0x41] sm:$0xf]
        %v2044 = vld [vmem:[%s430 + $0x49] sm:$0xf]
        %v2045 = vld [vmem:[%s430 + $0x61] sm:$0xf]
        %v2046 = vld [vmem:[%s430 + $0x69] sm:$0xf]
        %v2047 = vld [vmem:[%s430 + $0x71] sm:$0xf]
        %v2048 = vld [vmem:[%s430 + $0x79] sm:$0xf]
        %v2049 = vld [vmem:[%s430 + $0x91] sm:$0xf]
        %v2050 = vld [vmem:[%s430 + $0x99] sm:$0xf]
        %v2051 = vld [vmem:[%s430 + $0xa1] sm:$0xf]
        %v2052 = vld [vmem:[%s430 + $0xa9] sm:$0xf]
        %v2053 = vmul.f32 %v2037, 0.140625
        %v2054 = vmul.f32 %v2038, 0.140625
        %v2055 = vmul.f32 %v2039, 0.140625
        %v2056 = vmul.f32 %v2040, 0.140625
        %v2057 = vmul.f32 %v2041, 0.140625
        %v2058 = vmul.f32 %v2042, 0.140625
        %v2059 = vmul.f32 %v2043, 0.140625
        %v2060 = vmul.f32 %v2044, 0.140625
        %v2061 = vmul.f32 %v2045, 0.140625
        %v2062 = vmul.f32 %v2046, 0.140625
        %v2063 = vmul.f32 %v2047, 0.140625
        %v2064 = vmul.f32 %v2048, 0.140625
        %v2065 = vmul.f32 %v2049, 0.140625
        %v2066 = vmul.f32 %v2050, 0.140625
        %v2067 = vmul.f32 %v2051, 0.140625
        %v2068 = vmul.f32 %v2052, 0.140625
        %v2069 = vadd.f32 %v2021, %v2053
        %v2070 = vadd.f32 %v2022, %v2054
        %v2071 = vadd.f32 %v2023, %v2055
        %v2072 = vadd.f32 %v2024, %v2056
        %v2073 = vadd.f32 %v2025, %v2057
        %v2074 = vadd.f32 %v2026, %v2058
        %v2075 = vadd.f32 %v2027, %v2059
        %v2076 = vadd.f32 %v2028, %v2060
        %v2077 = vadd.f32 %v2029, %v2061
        %v2078 = vadd.f32 %v2030, %v2062
        %v2079 = vadd.f32 %v2031, %v2063
        %v2080 = vadd.f32 %v2032, %v2064
        %v2081 = vadd.f32 %v2033, %v2065
        %v2082 = vadd.f32 %v2034, %v2066
        %v2083 = vadd.f32 %v2035, %v2067
        %v2084 = vadd.f32 %v2036, %v2068
        %v2085 = vld [vmem:[%s430] sm:$0xf]
        %v2086 = vld [vmem:[%s430 + $0x8] sm:$0xf]
        %v2087 = vld [vmem:[%s430 + $0x10] sm:$0xf]
        %v2088 = vld [vmem:[%s430 + $0x18] sm:$0xf]
        %v2089 = vld [vmem:[%s430 + $0x30] sm:$0xf]
        %v2090 = vld [vmem:[%s430 + $0x38] sm:$0xf]
        %v2091 = vld [vmem:[%s430 + $0x40] sm:$0xf]
        %v2092 = vld [vmem:[%s430 + $0x48] sm:$0xf]
        %v2093 = vld [vmem:[%s430 + $0x60] sm:$0xf]
        %v2094 = vld [vmem:[%s430 + $0x68] sm:$0xf]
        %v2095 = vld [vmem:[%s430 + $0x70] sm:$0xf]
        %v2096 = vld [vmem:[%s430 + $0x78] sm:$0xf]
        %v2097 = vld [vmem:[%s430 + $0x90] sm:$0xf]
        %v2098 = vld [vmem:[%s430 + $0x98] sm:$0xf]
        %v2099 = vld [vmem:[%s430 + $0xa0] sm:$0xf]
        %v2100 = vld [vmem:[%s430 + $0xa8] sm:$0xf]
        %v2101 = vmul.f32 %v2085, 0.046875
        %v2102 = vmul.f32 %v2086, 0.046875
        %v2103 = vmul.f32 %v2087, 0.046875
        %v2104 = vmul.f32 %v2088, 0.046875
        %v2105 = vmul.f32 %v2089, 0.046875
        %v2106 = vmul.f32 %v2090, 0.046875
        %v2107 = vmul.f32 %v2091, 0.046875
        %v2108 = vmul.f32 %v2092, 0.046875
        %v2109 = vmul.f32 %v2093, 0.046875
        %v2110 = vmul.f32 %v2094, 0.046875
        %v2111 = vmul.f32 %v2095, 0.046875
        %v2112 = vmul.f32 %v2096, 0.046875
        %v2113 = vmul.f32 %v2097, 0.046875
        %v2114 = vmul.f32 %v2098, 0.046875
        %v2115 = vmul.f32 %v2099, 0.046875
        %v2116 = vmul.f32 %v2100, 0.046875
        %v2117 = vadd.f32 %v2069, %v2101
        %v2118 = vadd.f32 %v2070, %v2102
        %v2119 = vadd.f32 %v2071, %v2103
        %v2120 = vadd.f32 %v2072, %v2104
        %v2121 = vadd.f32 %v2073, %v2105
        %v2122 = vadd.f32 %v2074, %v2106
        %v2123 = vadd.f32 %v2075, %v2107
        %v2124 = vadd.f32 %v2076, %v2108
        %v2125 = vadd.f32 %v2077, %v2109
        %v2126 = vadd.f32 %v2078, %v2110
        %v2127 = vadd.f32 %v2079, %v2111
        %v2128 = vadd.f32 %v2080, %v2112
        %v2129 = vadd.f32 %v2081, %v2113
        %v2130 = vadd.f32 %v2082, %v2114
        %v2131 = vadd.f32 %v2083, %v2115
        %v2132 = vadd.f32 %v2084, %v2116
        %s2133 = scalar_lea.vmem [#allocation2], 104
        %v2134 = vld [vmem:[%s2133 + $0x1] sm:$0xf]
        %v2135 = vld [vmem:[%s2133 + $0x9] sm:$0xf]
        %v2136 = vld [vmem:[%s2133 + $0x11] sm:$0xf]
        %v2137 = vld [vmem:[%s2133 + $0x19] sm:$0xf]
        %v2138 = vld [vmem:[%s2133 + $0x31] sm:$0xf]
        %v2139 = vld [vmem:[%s2133 + $0x39] sm:$0xf]
        %v2140 = vld [vmem:[%s2133 + $0x41] sm:$0xf]
        %v2141 = vld [vmem:[%s2133 + $0x49] sm:$0xf]
        %v2142 = vld [vmem:[%s2133 + $0x61] sm:$0xf]
        %v2143 = vld [vmem:[%s2133 + $0x69] sm:$0xf]
        %v2144 = vld [vmem:[%s2133 + $0x71] sm:$0xf]
        %v2145 = vld [vmem:[%s2133 + $0x79] sm:$0xf]
        %v2146 = vld [vmem:[%s2133 + $0x91] sm:$0xf]
        %v2147 = vld [vmem:[%s2133 + $0x99] sm:$0xf]
        %v2148 = vld [vmem:[%s2133 + $0xa1] sm:$0xf]
        %v2149 = vld [vmem:[%s2133 + $0xa9] sm:$0xf]
        %v2150 = vmul.f32 %v2134, 0.140625
        %v2151 = vmul.f32 %v2135, 0.140625
        %v2152 = vmul.f32 %v2136, 0.140625
        %v2153 = vmul.f32 %v2137, 0.140625
        %v2154 = vmul.f32 %v2138, 0.140625
        %v2155 = vmul.f32 %v2139, 0.140625
        %v2156 = vmul.f32 %v2140, 0.140625
        %v2157 = vmul.f32 %v2141, 0.140625
        %v2158 = vmul.f32 %v2142, 0.140625
        %v2159 = vmul.f32 %v2143, 0.140625
        %v2160 = vmul.f32 %v2144, 0.140625
        %v2161 = vmul.f32 %v2145, 0.140625
        %v2162 = vmul.f32 %v2146, 0.140625
        %v2163 = vmul.f32 %v2147, 0.140625
        %v2164 = vmul.f32 %v2148, 0.140625
        %v2165 = vmul.f32 %v2149, 0.140625
        %v2166 = vadd.f32 %v2117, %v2150
        %v2167 = vadd.f32 %v2118, %v2151
        %v2168 = vadd.f32 %v2119, %v2152
        %v2169 = vadd.f32 %v2120, %v2153
        %v2170 = vadd.f32 %v2121, %v2154
        %v2171 = vadd.f32 %v2122, %v2155
        %v2172 = vadd.f32 %v2123, %v2156
        %v2173 = vadd.f32 %v2124, %v2157
        %v2174 = vadd.f32 %v2125, %v2158
        %v2175 = vadd.f32 %v2126, %v2159
        %v2176 = vadd.f32 %v2127, %v2160
        %v2177 = vadd.f32 %v2128, %v2161
        %v2178 = vadd.f32 %v2129, %v2162
        %v2179 = vadd.f32 %v2130, %v2163
        %v2180 = vadd.f32 %v2131, %v2164
        %v2181 = vadd.f32 %v2132, %v2165
        %v2182 = vld [vmem:[%s2133] sm:$0xf]
        %v2183 = vld [vmem:[%s2133 + $0x8] sm:$0xf]
        %v2184 = vld [vmem:[%s2133 + $0x10] sm:$0xf]
        %v2185 = vld [vmem:[%s2133 + $0x18] sm:$0xf]
        %v2186 = vld [vmem:[%s2133 + $0x30] sm:$0xf]
        %v2187 = vld [vmem:[%s2133 + $0x38] sm:$0xf]
        %v2188 = vld [vmem:[%s2133 + $0x40] sm:$0xf]
        %v2189 = vld [vmem:[%s2133 + $0x48] sm:$0xf]
        %v2190 = vld [vmem:[%s2133 + $0x60] sm:$0xf]
        %v2191 = vld [vmem:[%s2133 + $0x68] sm:$0xf]
        %v2192 = vld [vmem:[%s2133 + $0x70] sm:$0xf]
        %v2193 = vld [vmem:[%s2133 + $0x78] sm:$0xf]
        %v2194 = vld [vmem:[%s2133 + $0x90] sm:$0xf]
        %v2195 = vld [vmem:[%s2133 + $0x98] sm:$0xf]
        %v2196 = vld [vmem:[%s2133 + $0xa0] sm:$0xf]
        %v2197 = vld [vmem:[%s2133 + $0xa8] sm:$0xf]
        %v2198 = vmul.f32 %v2182, 0.046875
        %v2199 = vmul.f32 %v2183, 0.046875
        %v2200 = vmul.f32 %v2184, 0.046875
        %v2201 = vmul.f32 %v2185, 0.046875
        %v2202 = vmul.f32 %v2186, 0.046875
        %v2203 = vmul.f32 %v2187, 0.046875
        %v2204 = vmul.f32 %v2188, 0.046875
        %v2205 = vmul.f32 %v2189, 0.046875
        %v2206 = vmul.f32 %v2190, 0.046875
        %v2207 = vmul.f32 %v2191, 0.046875
        %v2208 = vmul.f32 %v2192, 0.046875
        %v2209 = vmul.f32 %v2193, 0.046875
        %v2210 = vmul.f32 %v2194, 0.046875
        %v2211 = vmul.f32 %v2195, 0.046875
        %v2212 = vmul.f32 %v2196, 0.046875
        %v2213 = vmul.f32 %v2197, 0.046875
        %v2214 = vadd.f32 %v2166, %v2198
        %v2215 = vadd.f32 %v2167, %v2199
        %v2216 = vadd.f32 %v2168, %v2200
        %v2217 = vadd.f32 %v2169, %v2201
        %v2218 = vadd.f32 %v2170, %v2202
        %v2219 = vadd.f32 %v2171, %v2203
        %v2220 = vadd.f32 %v2172, %v2204
        %v2221 = vadd.f32 %v2173, %v2205
        %v2222 = vadd.f32 %v2174, %v2206
        %v2223 = vadd.f32 %v2175, %v2207
        %v2224 = vadd.f32 %v2176, %v2208
        %v2225 = vadd.f32 %v2177, %v2209
        %v2226 = vadd.f32 %v2178, %v2210
        %v2227 = vadd.f32 %v2179, %v2211
        %v2228 = vadd.f32 %v2180, %v2212
        %v2229 = vadd.f32 %v2181, %v2213
        %s2230 = scalar_lea.vmem [#allocation2], 96
        %v2231 = vld [vmem:[%s2230 + $0x1] sm:$0xf]
        %v2232 = vld [vmem:[%s2230 + $0x9] sm:$0xf]
        %v2233 = vld [vmem:[%s2230 + $0x11] sm:$0xf]
        %v2234 = vld [vmem:[%s2230 + $0x19] sm:$0xf]
        %v2235 = vld [vmem:[%s2230 + $0x31] sm:$0xf]
        %v2236 = vld [vmem:[%s2230 + $0x39] sm:$0xf]
        %v2237 = vld [vmem:[%s2230 + $0x41] sm:$0xf]
        %v2238 = vld [vmem:[%s2230 + $0x49] sm:$0xf]
        %v2239 = vld [vmem:[%s2230 + $0x61] sm:$0xf]
        %v2240 = vld [vmem:[%s2230 + $0x69] sm:$0xf]
        %v2241 = vld [vmem:[%s2230 + $0x71] sm:$0xf]
        %v2242 = vld [vmem:[%s2230 + $0x79] sm:$0xf]
        %v2243 = vld [vmem:[%s2230 + $0x91] sm:$0xf]
        %v2244 = vld [vmem:[%s2230 + $0x99] sm:$0xf]
        %v2245 = vld [vmem:[%s2230 + $0xa1] sm:$0xf]
        %v2246 = vld [vmem:[%s2230 + $0xa9] sm:$0xf]
        %v2247 = vmul.f32 %v2231, 0.046875
        %v2248 = vmul.f32 %v2232, 0.046875
        %v2249 = vmul.f32 %v2233, 0.046875
        %v2250 = vmul.f32 %v2234, 0.046875
        %v2251 = vmul.f32 %v2235, 0.046875
        %v2252 = vmul.f32 %v2236, 0.046875
        %v2253 = vmul.f32 %v2237, 0.046875
        %v2254 = vmul.f32 %v2238, 0.046875
        %v2255 = vmul.f32 %v2239, 0.046875
        %v2256 = vmul.f32 %v2240, 0.046875
        %v2257 = vmul.f32 %v2241, 0.046875
        %v2258 = vmul.f32 %v2242, 0.046875
        %v2259 = vmul.f32 %v2243, 0.046875
        %v2260 = vmul.f32 %v2244, 0.046875
        %v2261 = vmul.f32 %v2245, 0.046875
        %v2262 = vmul.f32 %v2246, 0.046875
        %v2263 = vadd.f32 %v2214, %v2247
        %v2264 = vadd.f32 %v2215, %v2248
        %v2265 = vadd.f32 %v2216, %v2249
        %v2266 = vadd.f32 %v2217, %v2250
        %v2267 = vadd.f32 %v2218, %v2251
        %v2268 = vadd.f32 %v2219, %v2252
        %v2269 = vadd.f32 %v2220, %v2253
        %v2270 = vadd.f32 %v2221, %v2254
        %v2271 = vadd.f32 %v2222, %v2255
        %v2272 = vadd.f32 %v2223, %v2256
        %v2273 = vadd.f32 %v2224, %v2257
        %v2274 = vadd.f32 %v2225, %v2258
        %v2275 = vadd.f32 %v2226, %v2259
        %v2276 = vadd.f32 %v2227, %v2260
        %v2277 = vadd.f32 %v2228, %v2261
        %v2278 = vadd.f32 %v2229, %v2262
        %v2279 = vld [vmem:[%s2230] sm:$0xf]
        %v2280 = vld [vmem:[%s2230 + $0x8] sm:$0xf]
        %v2281 = vld [vmem:[%s2230 + $0x10] sm:$0xf]
        %v2282 = vld [vmem:[%s2230 + $0x18] sm:$0xf]
        %v2283 = vld [vmem:[%s2230 + $0x30] sm:$0xf]
        %v2284 = vld [vmem:[%s2230 + $0x38] sm:$0xf]
        %v2285 = vld [vmem:[%s2230 + $0x40] sm:$0xf]
        %v2286 = vld [vmem:[%s2230 + $0x48] sm:$0xf]
        %v2287 = vld [vmem:[%s2230 + $0x60] sm:$0xf]
        %v2288 = vld [vmem:[%s2230 + $0x68] sm:$0xf]
        %v2289 = vld [vmem:[%s2230 + $0x70] sm:$0xf]
        %v2290 = vld [vmem:[%s2230 + $0x78] sm:$0xf]
        %v2291 = vld [vmem:[%s2230 + $0x90] sm:$0xf]
        %v2292 = vld [vmem:[%s2230 + $0x98] sm:$0xf]
        %v2293 = vld [vmem:[%s2230 + $0xa0] sm:$0xf]
        %v2294 = vld [vmem:[%s2230 + $0xa8] sm:$0xf]
        %v2295 = vmul.f32 %v2279, 0.015625
        %v2296 = vmul.f32 %v2280, 0.015625
        %v2297 = vmul.f32 %v2281, 0.015625
        %v2298 = vmul.f32 %v2282, 0.015625
        %v2299 = vmul.f32 %v2283, 0.015625
        %v2300 = vmul.f32 %v2284, 0.015625
        %v2301 = vmul.f32 %v2285, 0.015625
        %v2302 = vmul.f32 %v2286, 0.015625
        %v2303 = vmul.f32 %v2287, 0.015625
        %v2304 = vmul.f32 %v2288, 0.015625
        %v2305 = vmul.f32 %v2289, 0.015625
        %v2306 = vmul.f32 %v2290, 0.015625
        %v2307 = vmul.f32 %v2291, 0.015625
        %v2308 = vmul.f32 %v2292, 0.015625
        %v2309 = vmul.f32 %v2293, 0.015625
        %v2310 = vmul.f32 %v2294, 0.015625
        %v2311 = vadd.f32 %v2263, %v2295
        %v2312 = vadd.f32 %v2264, %v2296
        %v2313 = vadd.f32 %v2265, %v2297
        %v2314 = vadd.f32 %v2266, %v2298
        %v2315 = vadd.f32 %v2267, %v2299
        %v2316 = vadd.f32 %v2268, %v2300
        %v2317 = vadd.f32 %v2269, %v2301
        %v2318 = vadd.f32 %v2270, %v2302
        %v2319 = vadd.f32 %v2271, %v2303
        %v2320 = vadd.f32 %v2272, %v2304
        %v2321 = vadd.f32 %v2273, %v2305
        %v2322 = vadd.f32 %v2274, %v2306
        %v2323 = vadd.f32 %v2275, %v2307
        %v2324 = vadd.f32 %v2276, %v2308
        %v2325 = vadd.f32 %v2277, %v2309
        %v2326 = vadd.f32 %v2278, %v2310
        %v2327 = vpack.c.bf16 %v2311, %v2311
        %v2328 = vpack.c.bf16 %v2312, %v2312
        %v2329 = vpack.c.bf16 %v2313, %v2313
        %v2330 = vpack.c.bf16 %v2314, %v2314
        %v2331 = vpack.c.bf16 %v2315, %v2315
        %v2332 = vpack.c.bf16 %v2316, %v2316
        %v2333 = vpack.c.bf16 %v2317, %v2317
        %v2334 = vpack.c.bf16 %v2318, %v2318
        %v2335 = vpack.c.bf16 %v2319, %v2319
        %v2336 = vpack.c.bf16 %v2320, %v2320
        %v2337 = vpack.c.bf16 %v2321, %v2321
        %v2338 = vpack.c.bf16 %v2322, %v2322
        %v2339 = vpack.c.bf16 %v2323, %v2323
        %v2340 = vpack.c.bf16 %v2324, %v2324
        %v2341 = vpack.c.bf16 %v2325, %v2325
        %v2342 = vpack.c.bf16 %v2326, %v2326
        %s2343 = scalar_lea.vmem %s134, 128 [#allocation6]
        %2344 = vst.msk [vmem:[%s2343] sm:$0x3] %vm735, %v2327
        %2345 = vst.msk [vmem:[%s2343 + $0x2] sm:$0x3] %vm735, %v2328
        %2346 = vst.msk [vmem:[%s2343 + $0x4] sm:$0x3] %vm735, %v2329
        %2347 = vst.msk [vmem:[%s2343 + $0x6] sm:$0x3] %vm735, %v2330
        %2348 = vst.msk [vmem:[%s2343 + $0x8] sm:$0x3] %vm735, %v2331
        %2349 = vst.msk [vmem:[%s2343 + $0xa] sm:$0x3] %vm735, %v2332
        %2350 = vst.msk [vmem:[%s2343 + $0xc] sm:$0x3] %vm735, %v2333
        %2351 = vst.msk [vmem:[%s2343 + $0xe] sm:$0x3] %vm735, %v2334
        %2352 = vst.msk [vmem:[%s2343 + $0x10] sm:$0x3] %vm735, %v2335
        %2353 = vst.msk [vmem:[%s2343 + $0x12] sm:$0x3] %vm735, %v2336
        %2354 = vst.msk [vmem:[%s2343 + $0x14] sm:$0x3] %vm735, %v2337
        %2355 = vst.msk [vmem:[%s2343 + $0x16] sm:$0x3] %vm735, %v2338
        %2356 = vst.msk [vmem:[%s2343 + $0x18] sm:$0x3] %vm735, %v2339
        %2357 = vst.msk [vmem:[%s2343 + $0x1a] sm:$0x3] %vm735, %v2340
        %2358 = vst.msk [vmem:[%s2343 + $0x1c] sm:$0x3] %vm735, %v2341
        %2359 = vst.msk [vmem:[%s2343 + $0x1e] sm:$0x3] %vm735, %v2342
        %v2360 = vld [vmem:[%s151 + $0x1] sm:$0xf]
        %v2361 = vld [vmem:[%s151 + $0x9] sm:$0xf]
        %v2362 = vld [vmem:[%s151 + $0x11] sm:$0xf]
        %v2363 = vld [vmem:[%s151 + $0x19] sm:$0xf]
        %v2364 = vld [vmem:[%s151 + $0x31] sm:$0xf]
        %v2365 = vld [vmem:[%s151 + $0x39] sm:$0xf]
        %v2366 = vld [vmem:[%s151 + $0x41] sm:$0xf]
        %v2367 = vld [vmem:[%s151 + $0x49] sm:$0xf]
        %v2368 = vld [vmem:[%s151 + $0x61] sm:$0xf]
        %v2369 = vld [vmem:[%s151 + $0x69] sm:$0xf]
        %v2370 = vld [vmem:[%s151 + $0x71] sm:$0xf]
        %v2371 = vld [vmem:[%s151 + $0x79] sm:$0xf]
        %v2372 = vld [vmem:[%s151 + $0x91] sm:$0xf]
        %v2373 = vld [vmem:[%s151 + $0x99] sm:$0xf]
        %v2374 = vld [vmem:[%s151 + $0xa1] sm:$0xf]
        %v2375 = vld [vmem:[%s151 + $0xa9] sm:$0xf]
        %v2376 = vmul.f32 %v2360, 0.421875
        %v2377 = vmul.f32 %v2361, 0.421875
        %v2378 = vmul.f32 %v2362, 0.421875
        %v2379 = vmul.f32 %v2363, 0.421875
        %v2380 = vmul.f32 %v2364, 0.421875
        %v2381 = vmul.f32 %v2365, 0.421875
        %v2382 = vmul.f32 %v2366, 0.421875
        %v2383 = vmul.f32 %v2367, 0.421875
        %v2384 = vmul.f32 %v2368, 0.421875
        %v2385 = vmul.f32 %v2369, 0.421875
        %v2386 = vmul.f32 %v2370, 0.421875
        %v2387 = vmul.f32 %v2371, 0.421875
        %v2388 = vmul.f32 %v2372, 0.421875
        %v2389 = vmul.f32 %v2373, 0.421875
        %v2390 = vmul.f32 %v2374, 0.421875
        %v2391 = vmul.f32 %v2375, 0.421875
        %v2392 = vld [vmem:[%s151 + $0x2] sm:$0xf]
        %v2393 = vld [vmem:[%s151 + $0xa] sm:$0xf]
        %v2394 = vld [vmem:[%s151 + $0x12] sm:$0xf]
        %v2395 = vld [vmem:[%s151 + $0x1a] sm:$0xf]
        %v2396 = vld [vmem:[%s151 + $0x32] sm:$0xf]
        %v2397 = vld [vmem:[%s151 + $0x3a] sm:$0xf]
        %v2398 = vld [vmem:[%s151 + $0x42] sm:$0xf]
        %v2399 = vld [vmem:[%s151 + $0x4a] sm:$0xf]
        %v2400 = vld [vmem:[%s151 + $0x62] sm:$0xf]
        %v2401 = vld [vmem:[%s151 + $0x6a] sm:$0xf]
        %v2402 = vld [vmem:[%s151 + $0x72] sm:$0xf]
        %v2403 = vld [vmem:[%s151 + $0x7a] sm:$0xf]
        %v2404 = vld [vmem:[%s151 + $0x92] sm:$0xf]
        %v2405 = vld [vmem:[%s151 + $0x9a] sm:$0xf]
        %v2406 = vld [vmem:[%s151 + $0xa2] sm:$0xf]
        %v2407 = vld [vmem:[%s151 + $0xaa] sm:$0xf]
        %v2408 = vmul.f32 %v2392, 0.140625
        %v2409 = vmul.f32 %v2393, 0.140625
        %v2410 = vmul.f32 %v2394, 0.140625
        %v2411 = vmul.f32 %v2395, 0.140625
        %v2412 = vmul.f32 %v2396, 0.140625
        %v2413 = vmul.f32 %v2397, 0.140625
        %v2414 = vmul.f32 %v2398, 0.140625
        %v2415 = vmul.f32 %v2399, 0.140625
        %v2416 = vmul.f32 %v2400, 0.140625
        %v2417 = vmul.f32 %v2401, 0.140625
        %v2418 = vmul.f32 %v2402, 0.140625
        %v2419 = vmul.f32 %v2403, 0.140625
        %v2420 = vmul.f32 %v2404, 0.140625
        %v2421 = vmul.f32 %v2405, 0.140625
        %v2422 = vmul.f32 %v2406, 0.140625
        %v2423 = vmul.f32 %v2407, 0.140625
        %v2424 = vadd.f32 %v2376, %v2408
        %v2425 = vadd.f32 %v2377, %v2409
        %v2426 = vadd.f32 %v2378, %v2410
        %v2427 = vadd.f32 %v2379, %v2411
        %v2428 = vadd.f32 %v2380, %v2412
        %v2429 = vadd.f32 %v2381, %v2413
        %v2430 = vadd.f32 %v2382, %v2414
        %v2431 = vadd.f32 %v2383, %v2415
        %v2432 = vadd.f32 %v2384, %v2416
        %v2433 = vadd.f32 %v2385, %v2417
        %v2434 = vadd.f32 %v2386, %v2418
        %v2435 = vadd.f32 %v2387, %v2419
        %v2436 = vadd.f32 %v2388, %v2420
        %v2437 = vadd.f32 %v2389, %v2421
        %v2438 = vadd.f32 %v2390, %v2422
        %v2439 = vadd.f32 %v2391, %v2423
        %v2440 = vld [vmem:[%s430 + $0x1] sm:$0xf]
        %v2441 = vld [vmem:[%s430 + $0x9] sm:$0xf]
        %v2442 = vld [vmem:[%s430 + $0x11] sm:$0xf]
        %v2443 = vld [vmem:[%s430 + $0x19] sm:$0xf]
        %v2444 = vld [vmem:[%s430 + $0x31] sm:$0xf]
        %v2445 = vld [vmem:[%s430 + $0x39] sm:$0xf]
        %v2446 = vld [vmem:[%s430 + $0x41] sm:$0xf]
        %v2447 = vld [vmem:[%s430 + $0x49] sm:$0xf]
        %v2448 = vld [vmem:[%s430 + $0x61] sm:$0xf]
        %v2449 = vld [vmem:[%s430 + $0x69] sm:$0xf]
        %v2450 = vld [vmem:[%s430 + $0x71] sm:$0xf]
        %v2451 = vld [vmem:[%s430 + $0x79] sm:$0xf]
        %v2452 = vld [vmem:[%s430 + $0x91] sm:$0xf]
        %v2453 = vld [vmem:[%s430 + $0x99] sm:$0xf]
        %v2454 = vld [vmem:[%s430 + $0xa1] sm:$0xf]
        %v2455 = vld [vmem:[%s430 + $0xa9] sm:$0xf]
        %v2456 = vmul.f32 %v2440, 0.140625
        %v2457 = vmul.f32 %v2441, 0.140625
        %v2458 = vmul.f32 %v2442, 0.140625
        %v2459 = vmul.f32 %v2443, 0.140625
        %v2460 = vmul.f32 %v2444, 0.140625
        %v2461 = vmul.f32 %v2445, 0.140625
        %v2462 = vmul.f32 %v2446, 0.140625
        %v2463 = vmul.f32 %v2447, 0.140625
        %v2464 = vmul.f32 %v2448, 0.140625
        %v2465 = vmul.f32 %v2449, 0.140625
        %v2466 = vmul.f32 %v2450, 0.140625
        %v2467 = vmul.f32 %v2451, 0.140625
        %v2468 = vmul.f32 %v2452, 0.140625
        %v2469 = vmul.f32 %v2453, 0.140625
        %v2470 = vmul.f32 %v2454, 0.140625
        %v2471 = vmul.f32 %v2455, 0.140625
        %v2472 = vadd.f32 %v2424, %v2456
        %v2473 = vadd.f32 %v2425, %v2457
        %v2474 = vadd.f32 %v2426, %v2458
        %v2475 = vadd.f32 %v2427, %v2459
        %v2476 = vadd.f32 %v2428, %v2460
        %v2477 = vadd.f32 %v2429, %v2461
        %v2478 = vadd.f32 %v2430, %v2462
        %v2479 = vadd.f32 %v2431, %v2463
        %v2480 = vadd.f32 %v2432, %v2464
        %v2481 = vadd.f32 %v2433, %v2465
        %v2482 = vadd.f32 %v2434, %v2466
        %v2483 = vadd.f32 %v2435, %v2467
        %v2484 = vadd.f32 %v2436, %v2468
        %v2485 = vadd.f32 %v2437, %v2469
        %v2486 = vadd.f32 %v2438, %v2470
        %v2487 = vadd.f32 %v2439, %v2471
        %v2488 = vld [vmem:[%s430 + $0x2] sm:$0xf]
        %v2489 = vld [vmem:[%s430 + $0xa] sm:$0xf]
        %v2490 = vld [vmem:[%s430 + $0x12] sm:$0xf]
        %v2491 = vld [vmem:[%s430 + $0x1a] sm:$0xf]
        %v2492 = vld [vmem:[%s430 + $0x32] sm:$0xf]
        %v2493 = vld [vmem:[%s430 + $0x3a] sm:$0xf]
        %v2494 = vld [vmem:[%s430 + $0x42] sm:$0xf]
        %v2495 = vld [vmem:[%s430 + $0x4a] sm:$0xf]
        %v2496 = vld [vmem:[%s430 + $0x62] sm:$0xf]
        %v2497 = vld [vmem:[%s430 + $0x6a] sm:$0xf]
        %v2498 = vld [vmem:[%s430 + $0x72] sm:$0xf]
        %v2499 = vld [vmem:[%s430 + $0x7a] sm:$0xf]
        %v2500 = vld [vmem:[%s430 + $0x92] sm:$0xf]
        %v2501 = vld [vmem:[%s430 + $0x9a] sm:$0xf]
        %v2502 = vld [vmem:[%s430 + $0xa2] sm:$0xf]
        %v2503 = vld [vmem:[%s430 + $0xaa] sm:$0xf]
        %v2504 = vmul.f32 %v2488, 0.046875
        %v2505 = vmul.f32 %v2489, 0.046875
        %v2506 = vmul.f32 %v2490, 0.046875
        %v2507 = vmul.f32 %v2491, 0.046875
        %v2508 = vmul.f32 %v2492, 0.046875
        %v2509 = vmul.f32 %v2493, 0.046875
        %v2510 = vmul.f32 %v2494, 0.046875
        %v2511 = vmul.f32 %v2495, 0.046875
        %v2512 = vmul.f32 %v2496, 0.046875
        %v2513 = vmul.f32 %v2497, 0.046875
        %v2514 = vmul.f32 %v2498, 0.046875
        %v2515 = vmul.f32 %v2499, 0.046875
        %v2516 = vmul.f32 %v2500, 0.046875
        %v2517 = vmul.f32 %v2501, 0.046875
        %v2518 = vmul.f32 %v2502, 0.046875
        %v2519 = vmul.f32 %v2503, 0.046875
        %v2520 = vadd.f32 %v2472, %v2504
        %v2521 = vadd.f32 %v2473, %v2505
        %v2522 = vadd.f32 %v2474, %v2506
        %v2523 = vadd.f32 %v2475, %v2507
        %v2524 = vadd.f32 %v2476, %v2508
        %v2525 = vadd.f32 %v2477, %v2509
        %v2526 = vadd.f32 %v2478, %v2510
        %v2527 = vadd.f32 %v2479, %v2511
        %v2528 = vadd.f32 %v2480, %v2512
        %v2529 = vadd.f32 %v2481, %v2513
        %v2530 = vadd.f32 %v2482, %v2514
        %v2531 = vadd.f32 %v2483, %v2515
        %v2532 = vadd.f32 %v2484, %v2516
        %v2533 = vadd.f32 %v2485, %v2517
        %v2534 = vadd.f32 %v2486, %v2518
        %v2535 = vadd.f32 %v2487, %v2519
        %v2536 = vld [vmem:[%s2133 + $0x1] sm:$0xf]
        %v2537 = vld [vmem:[%s2133 + $0x9] sm:$0xf]
        %v2538 = vld [vmem:[%s2133 + $0x11] sm:$0xf]
        %v2539 = vld [vmem:[%s2133 + $0x19] sm:$0xf]
        %v2540 = vld [vmem:[%s2133 + $0x31] sm:$0xf]
        %v2541 = vld [vmem:[%s2133 + $0x39] sm:$0xf]
        %v2542 = vld [vmem:[%s2133 + $0x41] sm:$0xf]
        %v2543 = vld [vmem:[%s2133 + $0x49] sm:$0xf]
        %v2544 = vld [vmem:[%s2133 + $0x61] sm:$0xf]
        %v2545 = vld [vmem:[%s2133 + $0x69] sm:$0xf]
        %v2546 = vld [vmem:[%s2133 + $0x71] sm:$0xf]
        %v2547 = vld [vmem:[%s2133 + $0x79] sm:$0xf]
        %v2548 = vld [vmem:[%s2133 + $0x91] sm:$0xf]
        %v2549 = vld [vmem:[%s2133 + $0x99] sm:$0xf]
        %v2550 = vld [vmem:[%s2133 + $0xa1] sm:$0xf]
        %v2551 = vld [vmem:[%s2133 + $0xa9] sm:$0xf]
        %v2552 = vmul.f32 %v2536, 0.140625
        %v2553 = vmul.f32 %v2537, 0.140625
        %v2554 = vmul.f32 %v2538, 0.140625
        %v2555 = vmul.f32 %v2539, 0.140625
        %v2556 = vmul.f32 %v2540, 0.140625
        %v2557 = vmul.f32 %v2541, 0.140625
        %v2558 = vmul.f32 %v2542, 0.140625
        %v2559 = vmul.f32 %v2543, 0.140625
        %v2560 = vmul.f32 %v2544, 0.140625
        %v2561 = vmul.f32 %v2545, 0.140625
        %v2562 = vmul.f32 %v2546, 0.140625
        %v2563 = vmul.f32 %v2547, 0.140625
        %v2564 = vmul.f32 %v2548, 0.140625
        %v2565 = vmul.f32 %v2549, 0.140625
        %v2566 = vmul.f32 %v2550, 0.140625
        %v2567 = vmul.f32 %v2551, 0.140625
        %v2568 = vadd.f32 %v2520, %v2552
        %v2569 = vadd.f32 %v2521, %v2553
        %v2570 = vadd.f32 %v2522, %v2554
        %v2571 = vadd.f32 %v2523, %v2555
        %v2572 = vadd.f32 %v2524, %v2556
        %v2573 = vadd.f32 %v2525, %v2557
        %v2574 = vadd.f32 %v2526, %v2558
        %v2575 = vadd.f32 %v2527, %v2559
        %v2576 = vadd.f32 %v2528, %v2560
        %v2577 = vadd.f32 %v2529, %v2561
        %v2578 = vadd.f32 %v2530, %v2562
        %v2579 = vadd.f32 %v2531, %v2563
        %v2580 = vadd.f32 %v2532, %v2564
        %v2581 = vadd.f32 %v2533, %v2565
        %v2582 = vadd.f32 %v2534, %v2566
        %v2583 = vadd.f32 %v2535, %v2567
        %v2584 = vld [vmem:[%s2133 + $0x2] sm:$0xf]
        %v2585 = vld [vmem:[%s2133 + $0xa] sm:$0xf]
        %v2586 = vld [vmem:[%s2133 + $0x12] sm:$0xf]
        %v2587 = vld [vmem:[%s2133 + $0x1a] sm:$0xf]
        %v2588 = vld [vmem:[%s2133 + $0x32] sm:$0xf]
        %v2589 = vld [vmem:[%s2133 + $0x3a] sm:$0xf]
        %v2590 = vld [vmem:[%s2133 + $0x42] sm:$0xf]
        %v2591 = vld [vmem:[%s2133 + $0x4a] sm:$0xf]
        %v2592 = vld [vmem:[%s2133 + $0x62] sm:$0xf]
        %v2593 = vld [vmem:[%s2133 + $0x6a] sm:$0xf]
        %v2594 = vld [vmem:[%s2133 + $0x72] sm:$0xf]
        %v2595 = vld [vmem:[%s2133 + $0x7a] sm:$0xf]
        %v2596 = vld [vmem:[%s2133 + $0x92] sm:$0xf]
        %v2597 = vld [vmem:[%s2133 + $0x9a] sm:$0xf]
        %v2598 = vld [vmem:[%s2133 + $0xa2] sm:$0xf]
        %v2599 = vld [vmem:[%s2133 + $0xaa] sm:$0xf]
        %v2600 = vmul.f32 %v2584, 0.046875
        %v2601 = vmul.f32 %v2585, 0.046875
        %v2602 = vmul.f32 %v2586, 0.046875
        %v2603 = vmul.f32 %v2587, 0.046875
        %v2604 = vmul.f32 %v2588, 0.046875
        %v2605 = vmul.f32 %v2589, 0.046875
        %v2606 = vmul.f32 %v2590, 0.046875
        %v2607 = vmul.f32 %v2591, 0.046875
        %v2608 = vmul.f32 %v2592, 0.046875
        %v2609 = vmul.f32 %v2593, 0.046875
        %v2610 = vmul.f32 %v2594, 0.046875
        %v2611 = vmul.f32 %v2595, 0.046875
        %v2612 = vmul.f32 %v2596, 0.046875
        %v2613 = vmul.f32 %v2597, 0.046875
        %v2614 = vmul.f32 %v2598, 0.046875
        %v2615 = vmul.f32 %v2599, 0.046875
        %v2616 = vadd.f32 %v2568, %v2600
        %v2617 = vadd.f32 %v2569, %v2601
        %v2618 = vadd.f32 %v2570, %v2602
        %v2619 = vadd.f32 %v2571, %v2603
        %v2620 = vadd.f32 %v2572, %v2604
        %v2621 = vadd.f32 %v2573, %v2605
        %v2622 = vadd.f32 %v2574, %v2606
        %v2623 = vadd.f32 %v2575, %v2607
        %v2624 = vadd.f32 %v2576, %v2608
        %v2625 = vadd.f32 %v2577, %v2609
        %v2626 = vadd.f32 %v2578, %v2610
        %v2627 = vadd.f32 %v2579, %v2611
        %v2628 = vadd.f32 %v2580, %v2612
        %v2629 = vadd.f32 %v2581, %v2613
        %v2630 = vadd.f32 %v2582, %v2614
        %v2631 = vadd.f32 %v2583, %v2615
        %v2632 = vld [vmem:[%s2230 + $0x1] sm:$0xf]
        %v2633 = vld [vmem:[%s2230 + $0x9] sm:$0xf]
        %v2634 = vld [vmem:[%s2230 + $0x11] sm:$0xf]
        %v2635 = vld [vmem:[%s2230 + $0x19] sm:$0xf]
        %v2636 = vld [vmem:[%s2230 + $0x31] sm:$0xf]
        %v2637 = vld [vmem:[%s2230 + $0x39] sm:$0xf]
        %v2638 = vld [vmem:[%s2230 + $0x41] sm:$0xf]
        %v2639 = vld [vmem:[%s2230 + $0x49] sm:$0xf]
        %v2640 = vld [vmem:[%s2230 + $0x61] sm:$0xf]
        %v2641 = vld [vmem:[%s2230 + $0x69] sm:$0xf]
        %v2642 = vld [vmem:[%s2230 + $0x71] sm:$0xf]
        %v2643 = vld [vmem:[%s2230 + $0x79] sm:$0xf]
        %v2644 = vld [vmem:[%s2230 + $0x91] sm:$0xf]
        %v2645 = vld [vmem:[%s2230 + $0x99] sm:$0xf]
        %v2646 = vld [vmem:[%s2230 + $0xa1] sm:$0xf]
        %v2647 = vld [vmem:[%s2230 + $0xa9] sm:$0xf]
        %v2648 = vmul.f32 %v2632, 0.046875
        %v2649 = vmul.f32 %v2633, 0.046875
        %v2650 = vmul.f32 %v2634, 0.046875
        %v2651 = vmul.f32 %v2635, 0.046875
        %v2652 = vmul.f32 %v2636, 0.046875
        %v2653 = vmul.f32 %v2637, 0.046875
        %v2654 = vmul.f32 %v2638, 0.046875
        %v2655 = vmul.f32 %v2639, 0.046875
        %v2656 = vmul.f32 %v2640, 0.046875
        %v2657 = vmul.f32 %v2641, 0.046875
        %v2658 = vmul.f32 %v2642, 0.046875
        %v2659 = vmul.f32 %v2643, 0.046875
        %v2660 = vmul.f32 %v2644, 0.046875
        %v2661 = vmul.f32 %v2645, 0.046875
        %v2662 = vmul.f32 %v2646, 0.046875
        %v2663 = vmul.f32 %v2647, 0.046875
        %v2664 = vadd.f32 %v2616, %v2648
        %v2665 = vadd.f32 %v2617, %v2649
        %v2666 = vadd.f32 %v2618, %v2650
        %v2667 = vadd.f32 %v2619, %v2651
        %v2668 = vadd.f32 %v2620, %v2652
        %v2669 = vadd.f32 %v2621, %v2653
        %v2670 = vadd.f32 %v2622, %v2654
        %v2671 = vadd.f32 %v2623, %v2655
        %v2672 = vadd.f32 %v2624, %v2656
        %v2673 = vadd.f32 %v2625, %v2657
        %v2674 = vadd.f32 %v2626, %v2658
        %v2675 = vadd.f32 %v2627, %v2659
        %v2676 = vadd.f32 %v2628, %v2660
        %v2677 = vadd.f32 %v2629, %v2661
        %v2678 = vadd.f32 %v2630, %v2662
        %v2679 = vadd.f32 %v2631, %v2663
        %v2680 = vld [vmem:[%s2230 + $0x2] sm:$0xf]
        %v2681 = vld [vmem:[%s2230 + $0xa] sm:$0xf]
        %v2682 = vld [vmem:[%s2230 + $0x12] sm:$0xf]
        %v2683 = vld [vmem:[%s2230 + $0x1a] sm:$0xf]
        %v2684 = vld [vmem:[%s2230 + $0x32] sm:$0xf]
        %v2685 = vld [vmem:[%s2230 + $0x3a] sm:$0xf]
        %v2686 = vld [vmem:[%s2230 + $0x42] sm:$0xf]
        %v2687 = vld [vmem:[%s2230 + $0x4a] sm:$0xf]
        %v2688 = vld [vmem:[%s2230 + $0x62] sm:$0xf]
        %v2689 = vld [vmem:[%s2230 + $0x6a] sm:$0xf]
        %v2690 = vld [vmem:[%s2230 + $0x72] sm:$0xf]
        %v2691 = vld [vmem:[%s2230 + $0x7a] sm:$0xf]
        %v2692 = vld [vmem:[%s2230 + $0x92] sm:$0xf]
        %v2693 = vld [vmem:[%s2230 + $0x9a] sm:$0xf]
        %v2694 = vld [vmem:[%s2230 + $0xa2] sm:$0xf]
        %v2695 = vld [vmem:[%s2230 + $0xaa] sm:$0xf]
        %v2696 = vmul.f32 %v2680, 0.015625
        %v2697 = vmul.f32 %v2681, 0.015625
        %v2698 = vmul.f32 %v2682, 0.015625
        %v2699 = vmul.f32 %v2683, 0.015625
        %v2700 = vmul.f32 %v2684, 0.015625
        %v2701 = vmul.f32 %v2685, 0.015625
        %v2702 = vmul.f32 %v2686, 0.015625
        %v2703 = vmul.f32 %v2687, 0.015625
        %v2704 = vmul.f32 %v2688, 0.015625
        %v2705 = vmul.f32 %v2689, 0.015625
        %v2706 = vmul.f32 %v2690, 0.015625
        %v2707 = vmul.f32 %v2691, 0.015625
        %v2708 = vmul.f32 %v2692, 0.015625
        %v2709 = vmul.f32 %v2693, 0.015625
        %v2710 = vmul.f32 %v2694, 0.015625
        %v2711 = vmul.f32 %v2695, 0.015625
        %v2712 = vadd.f32 %v2664, %v2696
        %v2713 = vadd.f32 %v2665, %v2697
        %v2714 = vadd.f32 %v2666, %v2698
        %v2715 = vadd.f32 %v2667, %v2699
        %v2716 = vadd.f32 %v2668, %v2700
        %v2717 = vadd.f32 %v2669, %v2701
        %v2718 = vadd.f32 %v2670, %v2702
        %v2719 = vadd.f32 %v2671, %v2703
        %v2720 = vadd.f32 %v2672, %v2704
        %v2721 = vadd.f32 %v2673, %v2705
        %v2722 = vadd.f32 %v2674, %v2706
        %v2723 = vadd.f32 %v2675, %v2707
        %v2724 = vadd.f32 %v2676, %v2708
        %v2725 = vadd.f32 %v2677, %v2709
        %v2726 = vadd.f32 %v2678, %v2710
        %v2727 = vadd.f32 %v2679, %v2711
        %v2728 = vpack.c.bf16 %v2712, %v2712
        %v2729 = vpack.c.bf16 %v2713, %v2713
        %v2730 = vpack.c.bf16 %v2714, %v2714
        %v2731 = vpack.c.bf16 %v2715, %v2715
        %v2732 = vpack.c.bf16 %v2716, %v2716
        %v2733 = vpack.c.bf16 %v2717, %v2717
        %v2734 = vpack.c.bf16 %v2718, %v2718
        %v2735 = vpack.c.bf16 %v2719, %v2719
        %v2736 = vpack.c.bf16 %v2720, %v2720
        %v2737 = vpack.c.bf16 %v2721, %v2721
        %v2738 = vpack.c.bf16 %v2722, %v2722
        %v2739 = vpack.c.bf16 %v2723, %v2723
        %v2740 = vpack.c.bf16 %v2724, %v2724
        %v2741 = vpack.c.bf16 %v2725, %v2725
        %v2742 = vpack.c.bf16 %v2726, %v2726
        %v2743 = vpack.c.bf16 %v2727, %v2727
        %s2744 = scalar_lea.vmem %s134, 160 [#allocation6]
        %2745 = vst.msk [vmem:[%s2744] sm:$0x3] %vm735, %v2728
        %2746 = vst.msk [vmem:[%s2744 + $0x2] sm:$0x3] %vm735, %v2729
        %2747 = vst.msk [vmem:[%s2744 + $0x4] sm:$0x3] %vm735, %v2730
        %2748 = vst.msk [vmem:[%s2744 + $0x6] sm:$0x3] %vm735, %v2731
        %2749 = vst.msk [vmem:[%s2744 + $0x8] sm:$0x3] %vm735, %v2732
        %2750 = vst.msk [vmem:[%s2744 + $0xa] sm:$0x3] %vm735, %v2733
        %2751 = vst.msk [vmem:[%s2744 + $0xc] sm:$0x3] %vm735, %v2734
        %2752 = vst.msk [vmem:[%s2744 + $0xe] sm:$0x3] %vm735, %v2735
        %2753 = vst.msk [vmem:[%s2744 + $0x10] sm:$0x3] %vm735, %v2736
        %2754 = vst.msk [vmem:[%s2744 + $0x12] sm:$0x3] %vm735, %v2737
        %2755 = vst.msk [vmem:[%s2744 + $0x14] sm:$0x3] %vm735, %v2738
        %2756 = vst.msk [vmem:[%s2744 + $0x16] sm:$0x3] %vm735, %v2739
        %2757 = vst.msk [vmem:[%s2744 + $0x18] sm:$0x3] %vm735, %v2740
        %2758 = vst.msk [vmem:[%s2744 + $0x1a] sm:$0x3] %vm735, %v2741
        %2759 = vst.msk [vmem:[%s2744 + $0x1c] sm:$0x3] %vm735, %v2742
        %2760 = vst.msk [vmem:[%s2744 + $0x1e] sm:$0x3] %vm735, %v2743
        %v2761 = vld [vmem:[%s151 + $0x1] sm:$0xf]
        %v2762 = vld [vmem:[%s151 + $0x9] sm:$0xf]
        %v2763 = vld [vmem:[%s151 + $0x11] sm:$0xf]
        %v2764 = vld [vmem:[%s151 + $0x19] sm:$0xf]
        %v2765 = vld [vmem:[%s151 + $0x31] sm:$0xf]
        %v2766 = vld [vmem:[%s151 + $0x39] sm:$0xf]
        %v2767 = vld [vmem:[%s151 + $0x41] sm:$0xf]
        %v2768 = vld [vmem:[%s151 + $0x49] sm:$0xf]
        %v2769 = vld [vmem:[%s151 + $0x61] sm:$0xf]
        %v2770 = vld [vmem:[%s151 + $0x69] sm:$0xf]
        %v2771 = vld [vmem:[%s151 + $0x71] sm:$0xf]
        %v2772 = vld [vmem:[%s151 + $0x79] sm:$0xf]
        %v2773 = vld [vmem:[%s151 + $0x91] sm:$0xf]
        %v2774 = vld [vmem:[%s151 + $0x99] sm:$0xf]
        %v2775 = vld [vmem:[%s151 + $0xa1] sm:$0xf]
        %v2776 = vld [vmem:[%s151 + $0xa9] sm:$0xf]
        %v2777 = vmul.f32 %v2761, 0.421875
        %v2778 = vmul.f32 %v2762, 0.421875
        %v2779 = vmul.f32 %v2763, 0.421875
        %v2780 = vmul.f32 %v2764, 0.421875
        %v2781 = vmul.f32 %v2765, 0.421875
        %v2782 = vmul.f32 %v2766, 0.421875
        %v2783 = vmul.f32 %v2767, 0.421875
        %v2784 = vmul.f32 %v2768, 0.421875
        %v2785 = vmul.f32 %v2769, 0.421875
        %v2786 = vmul.f32 %v2770, 0.421875
        %v2787 = vmul.f32 %v2771, 0.421875
        %v2788 = vmul.f32 %v2772, 0.421875
        %v2789 = vmul.f32 %v2773, 0.421875
        %v2790 = vmul.f32 %v2774, 0.421875
        %v2791 = vmul.f32 %v2775, 0.421875
        %v2792 = vmul.f32 %v2776, 0.421875
        %v2793 = vld [vmem:[%s151] sm:$0xf]
        %v2794 = vld [vmem:[%s151 + $0x8] sm:$0xf]
        %v2795 = vld [vmem:[%s151 + $0x10] sm:$0xf]
        %v2796 = vld [vmem:[%s151 + $0x18] sm:$0xf]
        %v2797 = vld [vmem:[%s151 + $0x30] sm:$0xf]
        %v2798 = vld [vmem:[%s151 + $0x38] sm:$0xf]
        %v2799 = vld [vmem:[%s151 + $0x40] sm:$0xf]
        %v2800 = vld [vmem:[%s151 + $0x48] sm:$0xf]
        %v2801 = vld [vmem:[%s151 + $0x60] sm:$0xf]
        %v2802 = vld [vmem:[%s151 + $0x68] sm:$0xf]
        %v2803 = vld [vmem:[%s151 + $0x70] sm:$0xf]
        %v2804 = vld [vmem:[%s151 + $0x78] sm:$0xf]
        %v2805 = vld [vmem:[%s151 + $0x90] sm:$0xf]
        %v2806 = vld [vmem:[%s151 + $0x98] sm:$0xf]
        %v2807 = vld [vmem:[%s151 + $0xa0] sm:$0xf]
        %v2808 = vld [vmem:[%s151 + $0xa8] sm:$0xf]
        %v2809 = vmul.f32 %v2793, 0.140625
        %v2810 = vmul.f32 %v2794, 0.140625
        %v2811 = vmul.f32 %v2795, 0.140625
        %v2812 = vmul.f32 %v2796, 0.140625
        %v2813 = vmul.f32 %v2797, 0.140625
        %v2814 = vmul.f32 %v2798, 0.140625
        %v2815 = vmul.f32 %v2799, 0.140625
        %v2816 = vmul.f32 %v2800, 0.140625
        %v2817 = vmul.f32 %v2801, 0.140625
        %v2818 = vmul.f32 %v2802, 0.140625
        %v2819 = vmul.f32 %v2803, 0.140625
        %v2820 = vmul.f32 %v2804, 0.140625
        %v2821 = vmul.f32 %v2805, 0.140625
        %v2822 = vmul.f32 %v2806, 0.140625
        %v2823 = vmul.f32 %v2807, 0.140625
        %v2824 = vmul.f32 %v2808, 0.140625
        %v2825 = vadd.f32 %v2777, %v2809
        %v2826 = vadd.f32 %v2778, %v2810
        %v2827 = vadd.f32 %v2779, %v2811
        %v2828 = vadd.f32 %v2780, %v2812
        %v2829 = vadd.f32 %v2781, %v2813
        %v2830 = vadd.f32 %v2782, %v2814
        %v2831 = vadd.f32 %v2783, %v2815
        %v2832 = vadd.f32 %v2784, %v2816
        %v2833 = vadd.f32 %v2785, %v2817
        %v2834 = vadd.f32 %v2786, %v2818
        %v2835 = vadd.f32 %v2787, %v2819
        %v2836 = vadd.f32 %v2788, %v2820
        %v2837 = vadd.f32 %v2789, %v2821
        %v2838 = vadd.f32 %v2790, %v2822
        %v2839 = vadd.f32 %v2791, %v2823
        %v2840 = vadd.f32 %v2792, %v2824
        %v2841 = vld [vmem:[%s1233 + $0x1] sm:$0xf]
        %v2842 = vld [vmem:[%s1233 + $0x9] sm:$0xf]
        %v2843 = vld [vmem:[%s1233 + $0x11] sm:$0xf]
        %v2844 = vld [vmem:[%s1233 + $0x19] sm:$0xf]
        %v2845 = vld [vmem:[%s1233 + $0x31] sm:$0xf]
        %v2846 = vld [vmem:[%s1233 + $0x39] sm:$0xf]
        %v2847 = vld [vmem:[%s1233 + $0x41] sm:$0xf]
        %v2848 = vld [vmem:[%s1233 + $0x49] sm:$0xf]
        %v2849 = vld [vmem:[%s1233 + $0x61] sm:$0xf]
        %v2850 = vld [vmem:[%s1233 + $0x69] sm:$0xf]
        %v2851 = vld [vmem:[%s1233 + $0x71] sm:$0xf]
        %v2852 = vld [vmem:[%s1233 + $0x79] sm:$0xf]
        %v2853 = vld [vmem:[%s1233 + $0x91] sm:$0xf]
        %v2854 = vld [vmem:[%s1233 + $0x99] sm:$0xf]
        %v2855 = vld [vmem:[%s1233 + $0xa1] sm:$0xf]
        %v2856 = vld [vmem:[%s1233 + $0xa9] sm:$0xf]
        %v2857 = vmul.f32 %v2841, 0.140625
        %v2858 = vmul.f32 %v2842, 0.140625
        %v2859 = vmul.f32 %v2843, 0.140625
        %v2860 = vmul.f32 %v2844, 0.140625
        %v2861 = vmul.f32 %v2845, 0.140625
        %v2862 = vmul.f32 %v2846, 0.140625
        %v2863 = vmul.f32 %v2847, 0.140625
        %v2864 = vmul.f32 %v2848, 0.140625
        %v2865 = vmul.f32 %v2849, 0.140625
        %v2866 = vmul.f32 %v2850, 0.140625
        %v2867 = vmul.f32 %v2851, 0.140625
        %v2868 = vmul.f32 %v2852, 0.140625
        %v2869 = vmul.f32 %v2853, 0.140625
        %v2870 = vmul.f32 %v2854, 0.140625
        %v2871 = vmul.f32 %v2855, 0.140625
        %v2872 = vmul.f32 %v2856, 0.140625
        %v2873 = vadd.f32 %v2825, %v2857
        %v2874 = vadd.f32 %v2826, %v2858
        %v2875 = vadd.f32 %v2827, %v2859
        %v2876 = vadd.f32 %v2828, %v2860
        %v2877 = vadd.f32 %v2829, %v2861
        %v2878 = vadd.f32 %v2830, %v2862
        %v2879 = vadd.f32 %v2831, %v2863
        %v2880 = vadd.f32 %v2832, %v2864
        %v2881 = vadd.f32 %v2833, %v2865
        %v2882 = vadd.f32 %v2834, %v2866
        %v2883 = vadd.f32 %v2835, %v2867
        %v2884 = vadd.f32 %v2836, %v2868
        %v2885 = vadd.f32 %v2837, %v2869
        %v2886 = vadd.f32 %v2838, %v2870
        %v2887 = vadd.f32 %v2839, %v2871
        %v2888 = vadd.f32 %v2840, %v2872
        %v2889 = vld [vmem:[%s1233] sm:$0xf]
        %v2890 = vld [vmem:[%s1233 + $0x8] sm:$0xf]
        %v2891 = vld [vmem:[%s1233 + $0x10] sm:$0xf]
        %v2892 = vld [vmem:[%s1233 + $0x18] sm:$0xf]
        %v2893 = vld [vmem:[%s1233 + $0x30] sm:$0xf]
        %v2894 = vld [vmem:[%s1233 + $0x38] sm:$0xf]
        %v2895 = vld [vmem:[%s1233 + $0x40] sm:$0xf]
        %v2896 = vld [vmem:[%s1233 + $0x48] sm:$0xf]
        %v2897 = vld [vmem:[%s1233 + $0x60] sm:$0xf]
        %v2898 = vld [vmem:[%s1233 + $0x68] sm:$0xf]
        %v2899 = vld [vmem:[%s1233 + $0x70] sm:$0xf]
        %v2900 = vld [vmem:[%s1233 + $0x78] sm:$0xf]
        %v2901 = vld [vmem:[%s1233 + $0x90] sm:$0xf]
        %v2902 = vld [vmem:[%s1233 + $0x98] sm:$0xf]
        %v2903 = vld [vmem:[%s1233 + $0xa0] sm:$0xf]
        %v2904 = vld [vmem:[%s1233 + $0xa8] sm:$0xf]
        %v2905 = vmul.f32 %v2889, 0.046875
        %v2906 = vmul.f32 %v2890, 0.046875
        %v2907 = vmul.f32 %v2891, 0.046875
        %v2908 = vmul.f32 %v2892, 0.046875
        %v2909 = vmul.f32 %v2893, 0.046875
        %v2910 = vmul.f32 %v2894, 0.046875
        %v2911 = vmul.f32 %v2895, 0.046875
        %v2912 = vmul.f32 %v2896, 0.046875
        %v2913 = vmul.f32 %v2897, 0.046875
        %v2914 = vmul.f32 %v2898, 0.046875
        %v2915 = vmul.f32 %v2899, 0.046875
        %v2916 = vmul.f32 %v2900, 0.046875
        %v2917 = vmul.f32 %v2901, 0.046875
        %v2918 = vmul.f32 %v2902, 0.046875
        %v2919 = vmul.f32 %v2903, 0.046875
        %v2920 = vmul.f32 %v2904, 0.046875
        %v2921 = vadd.f32 %v2873, %v2905
        %v2922 = vadd.f32 %v2874, %v2906
        %v2923 = vadd.f32 %v2875, %v2907
        %v2924 = vadd.f32 %v2876, %v2908
        %v2925 = vadd.f32 %v2877, %v2909
        %v2926 = vadd.f32 %v2878, %v2910
        %v2927 = vadd.f32 %v2879, %v2911
        %v2928 = vadd.f32 %v2880, %v2912
        %v2929 = vadd.f32 %v2881, %v2913
        %v2930 = vadd.f32 %v2882, %v2914
        %v2931 = vadd.f32 %v2883, %v2915
        %v2932 = vadd.f32 %v2884, %v2916
        %v2933 = vadd.f32 %v2885, %v2917
        %v2934 = vadd.f32 %v2886, %v2918
        %v2935 = vadd.f32 %v2887, %v2919
        %v2936 = vadd.f32 %v2888, %v2920
        %v2937 = vld [vmem:[%s2133 + $0x1] sm:$0xf]
        %v2938 = vld [vmem:[%s2133 + $0x9] sm:$0xf]
        %v2939 = vld [vmem:[%s2133 + $0x11] sm:$0xf]
        %v2940 = vld [vmem:[%s2133 + $0x19] sm:$0xf]
        %v2941 = vld [vmem:[%s2133 + $0x31] sm:$0xf]
        %v2942 = vld [vmem:[%s2133 + $0x39] sm:$0xf]
        %v2943 = vld [vmem:[%s2133 + $0x41] sm:$0xf]
        %v2944 = vld [vmem:[%s2133 + $0x49] sm:$0xf]
        %v2945 = vld [vmem:[%s2133 + $0x61] sm:$0xf]
        %v2946 = vld [vmem:[%s2133 + $0x69] sm:$0xf]
        %v2947 = vld [vmem:[%s2133 + $0x71] sm:$0xf]
        %v2948 = vld [vmem:[%s2133 + $0x79] sm:$0xf]
        %v2949 = vld [vmem:[%s2133 + $0x91] sm:$0xf]
        %v2950 = vld [vmem:[%s2133 + $0x99] sm:$0xf]
        %v2951 = vld [vmem:[%s2133 + $0xa1] sm:$0xf]
        %v2952 = vld [vmem:[%s2133 + $0xa9] sm:$0xf]
        %v2953 = vmul.f32 %v2937, 0.140625
        %v2954 = vmul.f32 %v2938, 0.140625
        %v2955 = vmul.f32 %v2939, 0.140625
        %v2956 = vmul.f32 %v2940, 0.140625
        %v2957 = vmul.f32 %v2941, 0.140625
        %v2958 = vmul.f32 %v2942, 0.140625
        %v2959 = vmul.f32 %v2943, 0.140625
        %v2960 = vmul.f32 %v2944, 0.140625
        %v2961 = vmul.f32 %v2945, 0.140625
        %v2962 = vmul.f32 %v2946, 0.140625
        %v2963 = vmul.f32 %v2947, 0.140625
        %v2964 = vmul.f32 %v2948, 0.140625
        %v2965 = vmul.f32 %v2949, 0.140625
        %v2966 = vmul.f32 %v2950, 0.140625
        %v2967 = vmul.f32 %v2951, 0.140625
        %v2968 = vmul.f32 %v2952, 0.140625
        %v2969 = vadd.f32 %v2921, %v2953
        %v2970 = vadd.f32 %v2922, %v2954
        %v2971 = vadd.f32 %v2923, %v2955
        %v2972 = vadd.f32 %v2924, %v2956
        %v2973 = vadd.f32 %v2925, %v2957
        %v2974 = vadd.f32 %v2926, %v2958
        %v2975 = vadd.f32 %v2927, %v2959
        %v2976 = vadd.f32 %v2928, %v2960
        %v2977 = vadd.f32 %v2929, %v2961
        %v2978 = vadd.f32 %v2930, %v2962
        %v2979 = vadd.f32 %v2931, %v2963
        %v2980 = vadd.f32 %v2932, %v2964
        %v2981 = vadd.f32 %v2933, %v2965
        %v2982 = vadd.f32 %v2934, %v2966
        %v2983 = vadd.f32 %v2935, %v2967
        %v2984 = vadd.f32 %v2936, %v2968
        %v2985 = vld [vmem:[%s2133] sm:$0xf]
        %v2986 = vld [vmem:[%s2133 + $0x8] sm:$0xf]
        %v2987 = vld [vmem:[%s2133 + $0x10] sm:$0xf]
        %v2988 = vld [vmem:[%s2133 + $0x18] sm:$0xf]
        %v2989 = vld [vmem:[%s2133 + $0x30] sm:$0xf]
        %v2990 = vld [vmem:[%s2133 + $0x38] sm:$0xf]
        %v2991 = vld [vmem:[%s2133 + $0x40] sm:$0xf]
        %v2992 = vld [vmem:[%s2133 + $0x48] sm:$0xf]
        %v2993 = vld [vmem:[%s2133 + $0x60] sm:$0xf]
        %v2994 = vld [vmem:[%s2133 + $0x68] sm:$0xf]
        %v2995 = vld [vmem:[%s2133 + $0x70] sm:$0xf]
        %v2996 = vld [vmem:[%s2133 + $0x78] sm:$0xf]
        %v2997 = vld [vmem:[%s2133 + $0x90] sm:$0xf]
        %v2998 = vld [vmem:[%s2133 + $0x98] sm:$0xf]
        %v2999 = vld [vmem:[%s2133 + $0xa0] sm:$0xf]
        %v3000 = vld [vmem:[%s2133 + $0xa8] sm:$0xf]
        %v3001 = vmul.f32 %v2985, 0.046875
        %v3002 = vmul.f32 %v2986, 0.046875
        %v3003 = vmul.f32 %v2987, 0.046875
        %v3004 = vmul.f32 %v2988, 0.046875
        %v3005 = vmul.f32 %v2989, 0.046875
        %v3006 = vmul.f32 %v2990, 0.046875
        %v3007 = vmul.f32 %v2991, 0.046875
        %v3008 = vmul.f32 %v2992, 0.046875
        %v3009 = vmul.f32 %v2993, 0.046875
        %v3010 = vmul.f32 %v2994, 0.046875
        %v3011 = vmul.f32 %v2995, 0.046875
        %v3012 = vmul.f32 %v2996, 0.046875
        %v3013 = vmul.f32 %v2997, 0.046875
        %v3014 = vmul.f32 %v2998, 0.046875
        %v3015 = vmul.f32 %v2999, 0.046875
        %v3016 = vmul.f32 %v3000, 0.046875
        %v3017 = vadd.f32 %v2969, %v3001
        %v3018 = vadd.f32 %v2970, %v3002
        %v3019 = vadd.f32 %v2971, %v3003
        %v3020 = vadd.f32 %v2972, %v3004
        %v3021 = vadd.f32 %v2973, %v3005
        %v3022 = vadd.f32 %v2974, %v3006
        %v3023 = vadd.f32 %v2975, %v3007
        %v3024 = vadd.f32 %v2976, %v3008
        %v3025 = vadd.f32 %v2977, %v3009
        %v3026 = vadd.f32 %v2978, %v3010
        %v3027 = vadd.f32 %v2979, %v3011
        %v3028 = vadd.f32 %v2980, %v3012
        %v3029 = vadd.f32 %v2981, %v3013
        %v3030 = vadd.f32 %v2982, %v3014
        %v3031 = vadd.f32 %v2983, %v3015
        %v3032 = vadd.f32 %v2984, %v3016
        %s3033 = scalar_lea.vmem [#allocation2], 112
        %v3034 = vld [vmem:[%s3033 + $0x1] sm:$0xf]
        %v3035 = vld [vmem:[%s3033 + $0x9] sm:$0xf]
        %v3036 = vld [vmem:[%s3033 + $0x11] sm:$0xf]
        %v3037 = vld [vmem:[%s3033 + $0x19] sm:$0xf]
        %v3038 = vld [vmem:[%s3033 + $0x31] sm:$0xf]
        %v3039 = vld [vmem:[%s3033 + $0x39] sm:$0xf]
        %v3040 = vld [vmem:[%s3033 + $0x41] sm:$0xf]
        %v3041 = vld [vmem:[%s3033 + $0x49] sm:$0xf]
        %v3042 = vld [vmem:[%s3033 + $0x61] sm:$0xf]
        %v3043 = vld [vmem:[%s3033 + $0x69] sm:$0xf]
        %v3044 = vld [vmem:[%s3033 + $0x71] sm:$0xf]
        %v3045 = vld [vmem:[%s3033 + $0x79] sm:$0xf]
        %v3046 = vld [vmem:[%s3033 + $0x91] sm:$0xf]
        %v3047 = vld [vmem:[%s3033 + $0x99] sm:$0xf]
        %v3048 = vld [vmem:[%s3033 + $0xa1] sm:$0xf]
        %v3049 = vld [vmem:[%s3033 + $0xa9] sm:$0xf]
        %v3050 = vmul.f32 %v3034, 0.046875
        %v3051 = vmul.f32 %v3035, 0.046875
        %v3052 = vmul.f32 %v3036, 0.046875
        %v3053 = vmul.f32 %v3037, 0.046875
        %v3054 = vmul.f32 %v3038, 0.046875
        %v3055 = vmul.f32 %v3039, 0.046875
        %v3056 = vmul.f32 %v3040, 0.046875
        %v3057 = vmul.f32 %v3041, 0.046875
        %v3058 = vmul.f32 %v3042, 0.046875
        %v3059 = vmul.f32 %v3043, 0.046875
        %v3060 = vmul.f32 %v3044, 0.046875
        %v3061 = vmul.f32 %v3045, 0.046875
        %v3062 = vmul.f32 %v3046, 0.046875
        %v3063 = vmul.f32 %v3047, 0.046875
        %v3064 = vmul.f32 %v3048, 0.046875
        %v3065 = vmul.f32 %v3049, 0.046875
        %v3066 = vadd.f32 %v3017, %v3050
        %v3067 = vadd.f32 %v3018, %v3051
        %v3068 = vadd.f32 %v3019, %v3052
        %v3069 = vadd.f32 %v3020, %v3053
        %v3070 = vadd.f32 %v3021, %v3054
        %v3071 = vadd.f32 %v3022, %v3055
        %v3072 = vadd.f32 %v3023, %v3056
        %v3073 = vadd.f32 %v3024, %v3057
        %v3074 = vadd.f32 %v3025, %v3058
        %v3075 = vadd.f32 %v3026, %v3059
        %v3076 = vadd.f32 %v3027, %v3060
        %v3077 = vadd.f32 %v3028, %v3061
        %v3078 = vadd.f32 %v3029, %v3062
        %v3079 = vadd.f32 %v3030, %v3063
        %v3080 = vadd.f32 %v3031, %v3064
        %v3081 = vadd.f32 %v3032, %v3065
        %v3082 = vld [vmem:[%s3033] sm:$0xf]
        %v3083 = vld [vmem:[%s3033 + $0x8] sm:$0xf]
        %v3084 = vld [vmem:[%s3033 + $0x10] sm:$0xf]
        %v3085 = vld [vmem:[%s3033 + $0x18] sm:$0xf]
        %v3086 = vld [vmem:[%s3033 + $0x30] sm:$0xf]
        %v3087 = vld [vmem:[%s3033 + $0x38] sm:$0xf]
        %v3088 = vld [vmem:[%s3033 + $0x40] sm:$0xf]
        %v3089 = vld [vmem:[%s3033 + $0x48] sm:$0xf]
        %v3090 = vld [vmem:[%s3033 + $0x60] sm:$0xf]
        %v3091 = vld [vmem:[%s3033 + $0x68] sm:$0xf]
        %v3092 = vld [vmem:[%s3033 + $0x70] sm:$0xf]
        %v3093 = vld [vmem:[%s3033 + $0x78] sm:$0xf]
        %v3094 = vld [vmem:[%s3033 + $0x90] sm:$0xf]
        %v3095 = vld [vmem:[%s3033 + $0x98] sm:$0xf]
        %v3096 = vld [vmem:[%s3033 + $0xa0] sm:$0xf]
        %v3097 = vld [vmem:[%s3033 + $0xa8] sm:$0xf]
        %v3098 = vmul.f32 %v3082, 0.015625
        %v3099 = vmul.f32 %v3083, 0.015625
        %v3100 = vmul.f32 %v3084, 0.015625
        %v3101 = vmul.f32 %v3085, 0.015625
        %v3102 = vmul.f32 %v3086, 0.015625
        %v3103 = vmul.f32 %v3087, 0.015625
        %v3104 = vmul.f32 %v3088, 0.015625
        %v3105 = vmul.f32 %v3089, 0.015625
        %v3106 = vmul.f32 %v3090, 0.015625
        %v3107 = vmul.f32 %v3091, 0.015625
        %v3108 = vmul.f32 %v3092, 0.015625
        %v3109 = vmul.f32 %v3093, 0.015625
        %v3110 = vmul.f32 %v3094, 0.015625
        %v3111 = vmul.f32 %v3095, 0.015625
        %v3112 = vmul.f32 %v3096, 0.015625
        %v3113 = vmul.f32 %v3097, 0.015625
        %v3114 = vadd.f32 %v3066, %v3098
        %v3115 = vadd.f32 %v3067, %v3099
        %v3116 = vadd.f32 %v3068, %v3100
        %v3117 = vadd.f32 %v3069, %v3101
        %v3118 = vadd.f32 %v3070, %v3102
        %v3119 = vadd.f32 %v3071, %v3103
        %v3120 = vadd.f32 %v3072, %v3104
        %v3121 = vadd.f32 %v3073, %v3105
        %v3122 = vadd.f32 %v3074, %v3106
        %v3123 = vadd.f32 %v3075, %v3107
        %v3124 = vadd.f32 %v3076, %v3108
        %v3125 = vadd.f32 %v3077, %v3109
        %v3126 = vadd.f32 %v3078, %v3110
        %v3127 = vadd.f32 %v3079, %v3111
        %v3128 = vadd.f32 %v3080, %v3112
        %v3129 = vadd.f32 %v3081, %v3113
        %v3130 = vpack.c.bf16 %v3114, %v3114
        %v3131 = vpack.c.bf16 %v3115, %v3115
        %v3132 = vpack.c.bf16 %v3116, %v3116
        %v3133 = vpack.c.bf16 %v3117, %v3117
        %v3134 = vpack.c.bf16 %v3118, %v3118
        %v3135 = vpack.c.bf16 %v3119, %v3119
        %v3136 = vpack.c.bf16 %v3120, %v3120
        %v3137 = vpack.c.bf16 %v3121, %v3121
        %v3138 = vpack.c.bf16 %v3122, %v3122
        %v3139 = vpack.c.bf16 %v3123, %v3123
        %v3140 = vpack.c.bf16 %v3124, %v3124
        %v3141 = vpack.c.bf16 %v3125, %v3125
        %v3142 = vpack.c.bf16 %v3126, %v3126
        %v3143 = vpack.c.bf16 %v3127, %v3127
        %v3144 = vpack.c.bf16 %v3128, %v3128
        %v3145 = vpack.c.bf16 %v3129, %v3129
        %s3146 = scalar_lea.vmem %s134, 192 [#allocation6]
        %3147 = vst.msk [vmem:[%s3146] sm:$0x3] %vm735, %v3130
        %3148 = vst.msk [vmem:[%s3146 + $0x2] sm:$0x3] %vm735, %v3131
        %3149 = vst.msk [vmem:[%s3146 + $0x4] sm:$0x3] %vm735, %v3132
        %3150 = vst.msk [vmem:[%s3146 + $0x6] sm:$0x3] %vm735, %v3133
        %3151 = vst.msk [vmem:[%s3146 + $0x8] sm:$0x3] %vm735, %v3134
        %3152 = vst.msk [vmem:[%s3146 + $0xa] sm:$0x3] %vm735, %v3135
        %3153 = vst.msk [vmem:[%s3146 + $0xc] sm:$0x3] %vm735, %v3136
        %3154 = vst.msk [vmem:[%s3146 + $0xe] sm:$0x3] %vm735, %v3137
        %3155 = vst.msk [vmem:[%s3146 + $0x10] sm:$0x3] %vm735, %v3138
        %3156 = vst.msk [vmem:[%s3146 + $0x12] sm:$0x3] %vm735, %v3139
        %3157 = vst.msk [vmem:[%s3146 + $0x14] sm:$0x3] %vm735, %v3140
        %3158 = vst.msk [vmem:[%s3146 + $0x16] sm:$0x3] %vm735, %v3141
        %3159 = vst.msk [vmem:[%s3146 + $0x18] sm:$0x3] %vm735, %v3142
        %3160 = vst.msk [vmem:[%s3146 + $0x1a] sm:$0x3] %vm735, %v3143
        %3161 = vst.msk [vmem:[%s3146 + $0x1c] sm:$0x3] %vm735, %v3144
        %3162 = vst.msk [vmem:[%s3146 + $0x1e] sm:$0x3] %vm735, %v3145
        %v3163 = vld [vmem:[%s151 + $0x1] sm:$0xf]
        %v3164 = vld [vmem:[%s151 + $0x9] sm:$0xf]
        %v3165 = vld [vmem:[%s151 + $0x11] sm:$0xf]
        %v3166 = vld [vmem:[%s151 + $0x19] sm:$0xf]
        %v3167 = vld [vmem:[%s151 + $0x31] sm:$0xf]
        %v3168 = vld [vmem:[%s151 + $0x39] sm:$0xf]
        %v3169 = vld [vmem:[%s151 + $0x41] sm:$0xf]
        %v3170 = vld [vmem:[%s151 + $0x49] sm:$0xf]
        %v3171 = vld [vmem:[%s151 + $0x61] sm:$0xf]
        %v3172 = vld [vmem:[%s151 + $0x69] sm:$0xf]
        %v3173 = vld [vmem:[%s151 + $0x71] sm:$0xf]
        %v3174 = vld [vmem:[%s151 + $0x79] sm:$0xf]
        %v3175 = vld [vmem:[%s151 + $0x91] sm:$0xf]
        %v3176 = vld [vmem:[%s151 + $0x99] sm:$0xf]
        %v3177 = vld [vmem:[%s151 + $0xa1] sm:$0xf]
        %v3178 = vld [vmem:[%s151 + $0xa9] sm:$0xf]
        %v3179 = vmul.f32 %v3163, 0.421875
        %v3180 = vmul.f32 %v3164, 0.421875
        %v3181 = vmul.f32 %v3165, 0.421875
        %v3182 = vmul.f32 %v3166, 0.421875
        %v3183 = vmul.f32 %v3167, 0.421875
        %v3184 = vmul.f32 %v3168, 0.421875
        %v3185 = vmul.f32 %v3169, 0.421875
        %v3186 = vmul.f32 %v3170, 0.421875
        %v3187 = vmul.f32 %v3171, 0.421875
        %v3188 = vmul.f32 %v3172, 0.421875
        %v3189 = vmul.f32 %v3173, 0.421875
        %v3190 = vmul.f32 %v3174, 0.421875
        %v3191 = vmul.f32 %v3175, 0.421875
        %v3192 = vmul.f32 %v3176, 0.421875
        %v3193 = vmul.f32 %v3177, 0.421875
        %v3194 = vmul.f32 %v3178, 0.421875
        %v3195 = vld [vmem:[%s151 + $0x2] sm:$0xf]
        %v3196 = vld [vmem:[%s151 + $0xa] sm:$0xf]
        %v3197 = vld [vmem:[%s151 + $0x12] sm:$0xf]
        %v3198 = vld [vmem:[%s151 + $0x1a] sm:$0xf]
        %v3199 = vld [vmem:[%s151 + $0x32] sm:$0xf]
        %v3200 = vld [vmem:[%s151 + $0x3a] sm:$0xf]
        %v3201 = vld [vmem:[%s151 + $0x42] sm:$0xf]
        %v3202 = vld [vmem:[%s151 + $0x4a] sm:$0xf]
        %v3203 = vld [vmem:[%s151 + $0x62] sm:$0xf]
        %v3204 = vld [vmem:[%s151 + $0x6a] sm:$0xf]
        %v3205 = vld [vmem:[%s151 + $0x72] sm:$0xf]
        %v3206 = vld [vmem:[%s151 + $0x7a] sm:$0xf]
        %v3207 = vld [vmem:[%s151 + $0x92] sm:$0xf]
        %v3208 = vld [vmem:[%s151 + $0x9a] sm:$0xf]
        %v3209 = vld [vmem:[%s151 + $0xa2] sm:$0xf]
        %v3210 = vld [vmem:[%s151 + $0xaa] sm:$0xf]
        %v3211 = vmul.f32 %v3195, 0.140625
        %v3212 = vmul.f32 %v3196, 0.140625
        %v3213 = vmul.f32 %v3197, 0.140625
        %v3214 = vmul.f32 %v3198, 0.140625
        %v3215 = vmul.f32 %v3199, 0.140625
        %v3216 = vmul.f32 %v3200, 0.140625
        %v3217 = vmul.f32 %v3201, 0.140625
        %v3218 = vmul.f32 %v3202, 0.140625
        %v3219 = vmul.f32 %v3203, 0.140625
        %v3220 = vmul.f32 %v3204, 0.140625
        %v3221 = vmul.f32 %v3205, 0.140625
        %v3222 = vmul.f32 %v3206, 0.140625
        %v3223 = vmul.f32 %v3207, 0.140625
        %v3224 = vmul.f32 %v3208, 0.140625
        %v3225 = vmul.f32 %v3209, 0.140625
        %v3226 = vmul.f32 %v3210, 0.140625
        %v3227 = vadd.f32 %v3179, %v3211
        %v3228 = vadd.f32 %v3180, %v3212
        %v3229 = vadd.f32 %v3181, %v3213
        %v3230 = vadd.f32 %v3182, %v3214
        %v3231 = vadd.f32 %v3183, %v3215
        %v3232 = vadd.f32 %v3184, %v3216
        %v3233 = vadd.f32 %v3185, %v3217
        %v3234 = vadd.f32 %v3186, %v3218
        %v3235 = vadd.f32 %v3187, %v3219
        %v3236 = vadd.f32 %v3188, %v3220
        %v3237 = vadd.f32 %v3189, %v3221
        %v3238 = vadd.f32 %v3190, %v3222
        %v3239 = vadd.f32 %v3191, %v3223
        %v3240 = vadd.f32 %v3192, %v3224
        %v3241 = vadd.f32 %v3193, %v3225
        %v3242 = vadd.f32 %v3194, %v3226
        %v3243 = vld [vmem:[%s1233 + $0x1] sm:$0xf]
        %v3244 = vld [vmem:[%s1233 + $0x9] sm:$0xf]
        %v3245 = vld [vmem:[%s1233 + $0x11] sm:$0xf]
        %v3246 = vld [vmem:[%s1233 + $0x19] sm:$0xf]
        %v3247 = vld [vmem:[%s1233 + $0x31] sm:$0xf]
        %v3248 = vld [vmem:[%s1233 + $0x39] sm:$0xf]
        %v3249 = vld [vmem:[%s1233 + $0x41] sm:$0xf]
        %v3250 = vld [vmem:[%s1233 + $0x49] sm:$0xf]
        %v3251 = vld [vmem:[%s1233 + $0x61] sm:$0xf]
        %v3252 = vld [vmem:[%s1233 + $0x69] sm:$0xf]
        %v3253 = vld [vmem:[%s1233 + $0x71] sm:$0xf]
        %v3254 = vld [vmem:[%s1233 + $0x79] sm:$0xf]
        %v3255 = vld [vmem:[%s1233 + $0x91] sm:$0xf]
        %v3256 = vld [vmem:[%s1233 + $0x99] sm:$0xf]
        %v3257 = vld [vmem:[%s1233 + $0xa1] sm:$0xf]
        %v3258 = vld [vmem:[%s1233 + $0xa9] sm:$0xf]
        %v3259 = vmul.f32 %v3243, 0.140625
        %v3260 = vmul.f32 %v3244, 0.140625
        %v3261 = vmul.f32 %v3245, 0.140625
        %v3262 = vmul.f32 %v3246, 0.140625
        %v3263 = vmul.f32 %v3247, 0.140625
        %v3264 = vmul.f32 %v3248, 0.140625
        %v3265 = vmul.f32 %v3249, 0.140625
        %v3266 = vmul.f32 %v3250, 0.140625
        %v3267 = vmul.f32 %v3251, 0.140625
        %v3268 = vmul.f32 %v3252, 0.140625
        %v3269 = vmul.f32 %v3253, 0.140625
        %v3270 = vmul.f32 %v3254, 0.140625
        %v3271 = vmul.f32 %v3255, 0.140625
        %v3272 = vmul.f32 %v3256, 0.140625
        %v3273 = vmul.f32 %v3257, 0.140625
        %v3274 = vmul.f32 %v3258, 0.140625
        %v3275 = vadd.f32 %v3227, %v3259
        %v3276 = vadd.f32 %v3228, %v3260
        %v3277 = vadd.f32 %v3229, %v3261
        %v3278 = vadd.f32 %v3230, %v3262
        %v3279 = vadd.f32 %v3231, %v3263
        %v3280 = vadd.f32 %v3232, %v3264
        %v3281 = vadd.f32 %v3233, %v3265
        %v3282 = vadd.f32 %v3234, %v3266
        %v3283 = vadd.f32 %v3235, %v3267
        %v3284 = vadd.f32 %v3236, %v3268
        %v3285 = vadd.f32 %v3237, %v3269
        %v3286 = vadd.f32 %v3238, %v3270
        %v3287 = vadd.f32 %v3239, %v3271
        %v3288 = vadd.f32 %v3240, %v3272
        %v3289 = vadd.f32 %v3241, %v3273
        %v3290 = vadd.f32 %v3242, %v3274
        %v3291 = vld [vmem:[%s1233 + $0x2] sm:$0xf]
        %v3292 = vld [vmem:[%s1233 + $0xa] sm:$0xf]
        %v3293 = vld [vmem:[%s1233 + $0x12] sm:$0xf]
        %v3294 = vld [vmem:[%s1233 + $0x1a] sm:$0xf]
        %v3295 = vld [vmem:[%s1233 + $0x32] sm:$0xf]
        %v3296 = vld [vmem:[%s1233 + $0x3a] sm:$0xf]
        %v3297 = vld [vmem:[%s1233 + $0x42] sm:$0xf]
        %v3298 = vld [vmem:[%s1233 + $0x4a] sm:$0xf]
        %v3299 = vld [vmem:[%s1233 + $0x62] sm:$0xf]
        %v3300 = vld [vmem:[%s1233 + $0x6a] sm:$0xf]
        %v3301 = vld [vmem:[%s1233 + $0x72] sm:$0xf]
        %v3302 = vld [vmem:[%s1233 + $0x7a] sm:$0xf]
        %v3303 = vld [vmem:[%s1233 + $0x92] sm:$0xf]
        %v3304 = vld [vmem:[%s1233 + $0x9a] sm:$0xf]
        %v3305 = vld [vmem:[%s1233 + $0xa2] sm:$0xf]
        %v3306 = vld [vmem:[%s1233 + $0xaa] sm:$0xf]
        %v3307 = vmul.f32 %v3291, 0.046875
        %v3308 = vmul.f32 %v3292, 0.046875
        %v3309 = vmul.f32 %v3293, 0.046875
        %v3310 = vmul.f32 %v3294, 0.046875
        %v3311 = vmul.f32 %v3295, 0.046875
        %v3312 = vmul.f32 %v3296, 0.046875
        %v3313 = vmul.f32 %v3297, 0.046875
        %v3314 = vmul.f32 %v3298, 0.046875
        %v3315 = vmul.f32 %v3299, 0.046875
        %v3316 = vmul.f32 %v3300, 0.046875
        %v3317 = vmul.f32 %v3301, 0.046875
        %v3318 = vmul.f32 %v3302, 0.046875
        %v3319 = vmul.f32 %v3303, 0.046875
        %v3320 = vmul.f32 %v3304, 0.046875
        %v3321 = vmul.f32 %v3305, 0.046875
        %v3322 = vmul.f32 %v3306, 0.046875
        %v3323 = vadd.f32 %v3275, %v3307
        %v3324 = vadd.f32 %v3276, %v3308
        %v3325 = vadd.f32 %v3277, %v3309
        %v3326 = vadd.f32 %v3278, %v3310
        %v3327 = vadd.f32 %v3279, %v3311
        %v3328 = vadd.f32 %v3280, %v3312
        %v3329 = vadd.f32 %v3281, %v3313
        %v3330 = vadd.f32 %v3282, %v3314
        %v3331 = vadd.f32 %v3283, %v3315
        %v3332 = vadd.f32 %v3284, %v3316
        %v3333 = vadd.f32 %v3285, %v3317
        %v3334 = vadd.f32 %v3286, %v3318
        %v3335 = vadd.f32 %v3287, %v3319
        %v3336 = vadd.f32 %v3288, %v3320
        %v3337 = vadd.f32 %v3289, %v3321
        %v3338 = vadd.f32 %v3290, %v3322
        %v3339 = vld [vmem:[%s2133 + $0x1] sm:$0xf]
        %v3340 = vld [vmem:[%s2133 + $0x9] sm:$0xf]
        %v3341 = vld [vmem:[%s2133 + $0x11] sm:$0xf]
        %v3342 = vld [vmem:[%s2133 + $0x19] sm:$0xf]
        %v3343 = vld [vmem:[%s2133 + $0x31] sm:$0xf]
        %v3344 = vld [vmem:[%s2133 + $0x39] sm:$0xf]
        %v3345 = vld [vmem:[%s2133 + $0x41] sm:$0xf]
        %v3346 = vld [vmem:[%s2133 + $0x49] sm:$0xf]
        %v3347 = vld [vmem:[%s2133 + $0x61] sm:$0xf]
        %v3348 = vld [vmem:[%s2133 + $0x69] sm:$0xf]
        %v3349 = vld [vmem:[%s2133 + $0x71] sm:$0xf]
        %v3350 = vld [vmem:[%s2133 + $0x79] sm:$0xf]
        %v3351 = vld [vmem:[%s2133 + $0x91] sm:$0xf]
        %v3352 = vld [vmem:[%s2133 + $0x99] sm:$0xf]
        %v3353 = vld [vmem:[%s2133 + $0xa1] sm:$0xf]
        %v3354 = vld [vmem:[%s2133 + $0xa9] sm:$0xf]
        %v3355 = vmul.f32 %v3339, 0.140625
        %v3356 = vmul.f32 %v3340, 0.140625
        %v3357 = vmul.f32 %v3341, 0.140625
        %v3358 = vmul.f32 %v3342, 0.140625
        %v3359 = vmul.f32 %v3343, 0.140625
        %v3360 = vmul.f32 %v3344, 0.140625
        %v3361 = vmul.f32 %v3345, 0.140625
        %v3362 = vmul.f32 %v3346, 0.140625
        %v3363 = vmul.f32 %v3347, 0.140625
        %v3364 = vmul.f32 %v3348, 0.140625
        %v3365 = vmul.f32 %v3349, 0.140625
        %v3366 = vmul.f32 %v3350, 0.140625
        %v3367 = vmul.f32 %v3351, 0.140625
        %v3368 = vmul.f32 %v3352, 0.140625
        %v3369 = vmul.f32 %v3353, 0.140625
        %v3370 = vmul.f32 %v3354, 0.140625
        %v3371 = vadd.f32 %v3323, %v3355
        %v3372 = vadd.f32 %v3324, %v3356
        %v3373 = vadd.f32 %v3325, %v3357
        %v3374 = vadd.f32 %v3326, %v3358
        %v3375 = vadd.f32 %v3327, %v3359
        %v3376 = vadd.f32 %v3328, %v3360
        %v3377 = vadd.f32 %v3329, %v3361
        %v3378 = vadd.f32 %v3330, %v3362
        %v3379 = vadd.f32 %v3331, %v3363
        %v3380 = vadd.f32 %v3332, %v3364
        %v3381 = vadd.f32 %v3333, %v3365
        %v3382 = vadd.f32 %v3334, %v3366
        %v3383 = vadd.f32 %v3335, %v3367
        %v3384 = vadd.f32 %v3336, %v3368
        %v3385 = vadd.f32 %v3337, %v3369
        %v3386 = vadd.f32 %v3338, %v3370
        %v3387 = vld [vmem:[%s2133 + $0x2] sm:$0xf]
        %v3388 = vld [vmem:[%s2133 + $0xa] sm:$0xf]
        %v3389 = vld [vmem:[%s2133 + $0x12] sm:$0xf]
        %v3390 = vld [vmem:[%s2133 + $0x1a] sm:$0xf]
        %v3391 = vld [vmem:[%s2133 + $0x32] sm:$0xf]
        %v3392 = vld [vmem:[%s2133 + $0x3a] sm:$0xf]
        %v3393 = vld [vmem:[%s2133 + $0x42] sm:$0xf]
        %v3394 = vld [vmem:[%s2133 + $0x4a] sm:$0xf]
        %v3395 = vld [vmem:[%s2133 + $0x62] sm:$0xf]
        %v3396 = vld [vmem:[%s2133 + $0x6a] sm:$0xf]
        %v3397 = vld [vmem:[%s2133 + $0x72] sm:$0xf]
        %v3398 = vld [vmem:[%s2133 + $0x7a] sm:$0xf]
        %v3399 = vld [vmem:[%s2133 + $0x92] sm:$0xf]
        %v3400 = vld [vmem:[%s2133 + $0x9a] sm:$0xf]
        %v3401 = vld [vmem:[%s2133 + $0xa2] sm:$0xf]
        %v3402 = vld [vmem:[%s2133 + $0xaa] sm:$0xf]
        %v3403 = vmul.f32 %v3387, 0.046875
        %v3404 = vmul.f32 %v3388, 0.046875
        %v3405 = vmul.f32 %v3389, 0.046875
        %v3406 = vmul.f32 %v3390, 0.046875
        %v3407 = vmul.f32 %v3391, 0.046875
        %v3408 = vmul.f32 %v3392, 0.046875
        %v3409 = vmul.f32 %v3393, 0.046875
        %v3410 = vmul.f32 %v3394, 0.046875
        %v3411 = vmul.f32 %v3395, 0.046875
        %v3412 = vmul.f32 %v3396, 0.046875
        %v3413 = vmul.f32 %v3397, 0.046875
        %v3414 = vmul.f32 %v3398, 0.046875
        %v3415 = vmul.f32 %v3399, 0.046875
        %v3416 = vmul.f32 %v3400, 0.046875
        %v3417 = vmul.f32 %v3401, 0.046875
        %v3418 = vmul.f32 %v3402, 0.046875
        %v3419 = vadd.f32 %v3371, %v3403
        %v3420 = vadd.f32 %v3372, %v3404
        %v3421 = vadd.f32 %v3373, %v3405
        %v3422 = vadd.f32 %v3374, %v3406
        %v3423 = vadd.f32 %v3375, %v3407
        %v3424 = vadd.f32 %v3376, %v3408
        %v3425 = vadd.f32 %v3377, %v3409
        %v3426 = vadd.f32 %v3378, %v3410
        %v3427 = vadd.f32 %v3379, %v3411
        %v3428 = vadd.f32 %v3380, %v3412
        %v3429 = vadd.f32 %v3381, %v3413
        %v3430 = vadd.f32 %v3382, %v3414
        %v3431 = vadd.f32 %v3383, %v3415
        %v3432 = vadd.f32 %v3384, %v3416
        %v3433 = vadd.f32 %v3385, %v3417
        %v3434 = vadd.f32 %v3386, %v3418
        %v3435 = vld [vmem:[%s3033 + $0x1] sm:$0xf]
        %v3436 = vld [vmem:[%s3033 + $0x9] sm:$0xf]
        %v3437 = vld [vmem:[%s3033 + $0x11] sm:$0xf]
        %v3438 = vld [vmem:[%s3033 + $0x19] sm:$0xf]
        %v3439 = vld [vmem:[%s3033 + $0x31] sm:$0xf]
        %v3440 = vld [vmem:[%s3033 + $0x39] sm:$0xf]
        %v3441 = vld [vmem:[%s3033 + $0x41] sm:$0xf]
        %v3442 = vld [vmem:[%s3033 + $0x49] sm:$0xf]
        %v3443 = vld [vmem:[%s3033 + $0x61] sm:$0xf]
        %v3444 = vld [vmem:[%s3033 + $0x69] sm:$0xf]
        %v3445 = vld [vmem:[%s3033 + $0x71] sm:$0xf]
        %v3446 = vld [vmem:[%s3033 + $0x79] sm:$0xf]
        %v3447 = vld [vmem:[%s3033 + $0x91] sm:$0xf]
        %v3448 = vld [vmem:[%s3033 + $0x99] sm:$0xf]
        %v3449 = vld [vmem:[%s3033 + $0xa1] sm:$0xf]
        %v3450 = vld [vmem:[%s3033 + $0xa9] sm:$0xf]
        %v3451 = vmul.f32 %v3435, 0.046875
        %v3452 = vmul.f32 %v3436, 0.046875
        %v3453 = vmul.f32 %v3437, 0.046875
        %v3454 = vmul.f32 %v3438, 0.046875
        %v3455 = vmul.f32 %v3439, 0.046875
        %v3456 = vmul.f32 %v3440, 0.046875
        %v3457 = vmul.f32 %v3441, 0.046875
        %v3458 = vmul.f32 %v3442, 0.046875
        %v3459 = vmul.f32 %v3443, 0.046875
        %v3460 = vmul.f32 %v3444, 0.046875
        %v3461 = vmul.f32 %v3445, 0.046875
        %v3462 = vmul.f32 %v3446, 0.046875
        %v3463 = vmul.f32 %v3447, 0.046875
        %v3464 = vmul.f32 %v3448, 0.046875
        %v3465 = vmul.f32 %v3449, 0.046875
        %v3466 = vmul.f32 %v3450, 0.046875
        %v3467 = vadd.f32 %v3419, %v3451
        %v3468 = vadd.f32 %v3420, %v3452
        %v3469 = vadd.f32 %v3421, %v3453
        %v3470 = vadd.f32 %v3422, %v3454
        %v3471 = vadd.f32 %v3423, %v3455
        %v3472 = vadd.f32 %v3424, %v3456
        %v3473 = vadd.f32 %v3425, %v3457
        %v3474 = vadd.f32 %v3426, %v3458
        %v3475 = vadd.f32 %v3427, %v3459
        %v3476 = vadd.f32 %v3428, %v3460
        %v3477 = vadd.f32 %v3429, %v3461
        %v3478 = vadd.f32 %v3430, %v3462
        %v3479 = vadd.f32 %v3431, %v3463
        %v3480 = vadd.f32 %v3432, %v3464
        %v3481 = vadd.f32 %v3433, %v3465
        %v3482 = vadd.f32 %v3434, %v3466
        %v3483 = vld [vmem:[%s3033 + $0x2] sm:$0xf]
        %v3484 = vld [vmem:[%s3033 + $0xa] sm:$0xf]
        %v3485 = vld [vmem:[%s3033 + $0x12] sm:$0xf]
        %v3486 = vld [vmem:[%s3033 + $0x1a] sm:$0xf]
        %v3487 = vld [vmem:[%s3033 + $0x32] sm:$0xf]
        %v3488 = vld [vmem:[%s3033 + $0x3a] sm:$0xf]
        %v3489 = vld [vmem:[%s3033 + $0x42] sm:$0xf]
        %v3490 = vld [vmem:[%s3033 + $0x4a] sm:$0xf]
        %v3491 = vld [vmem:[%s3033 + $0x62] sm:$0xf]
        %v3492 = vld [vmem:[%s3033 + $0x6a] sm:$0xf]
        %v3493 = vld [vmem:[%s3033 + $0x72] sm:$0xf]
        %v3494 = vld [vmem:[%s3033 + $0x7a] sm:$0xf]
        %v3495 = vld [vmem:[%s3033 + $0x92] sm:$0xf]
        %v3496 = vld [vmem:[%s3033 + $0x9a] sm:$0xf]
        %v3497 = vld [vmem:[%s3033 + $0xa2] sm:$0xf]
        %v3498 = vld [vmem:[%s3033 + $0xaa] sm:$0xf]
        %v3499 = vmul.f32 %v3483, 0.015625
        %v3500 = vmul.f32 %v3484, 0.015625
        %v3501 = vmul.f32 %v3485, 0.015625
        %v3502 = vmul.f32 %v3486, 0.015625
        %v3503 = vmul.f32 %v3487, 0.015625
        %v3504 = vmul.f32 %v3488, 0.015625
        %v3505 = vmul.f32 %v3489, 0.015625
        %v3506 = vmul.f32 %v3490, 0.015625
        %v3507 = vmul.f32 %v3491, 0.015625
        %v3508 = vmul.f32 %v3492, 0.015625
        %v3509 = vmul.f32 %v3493, 0.015625
        %v3510 = vmul.f32 %v3494, 0.015625
        %v3511 = vmul.f32 %v3495, 0.015625
        %v3512 = vmul.f32 %v3496, 0.015625
        %v3513 = vmul.f32 %v3497, 0.015625
        %v3514 = vmul.f32 %v3498, 0.015625
        %v3515 = vadd.f32 %v3467, %v3499
        %v3516 = vadd.f32 %v3468, %v3500
        %v3517 = vadd.f32 %v3469, %v3501
        %v3518 = vadd.f32 %v3470, %v3502
        %v3519 = vadd.f32 %v3471, %v3503
        %v3520 = vadd.f32 %v3472, %v3504
        %v3521 = vadd.f32 %v3473, %v3505
        %v3522 = vadd.f32 %v3474, %v3506
        %v3523 = vadd.f32 %v3475, %v3507
        %v3524 = vadd.f32 %v3476, %v3508
        %v3525 = vadd.f32 %v3477, %v3509
        %v3526 = vadd.f32 %v3478, %v3510
        %v3527 = vadd.f32 %v3479, %v3511
        %v3528 = vadd.f32 %v3480, %v3512
        %v3529 = vadd.f32 %v3481, %v3513
        %v3530 = vadd.f32 %v3482, %v3514
        %v3531 = vpack.c.bf16 %v3515, %v3515
        %v3532 = vpack.c.bf16 %v3516, %v3516
        %v3533 = vpack.c.bf16 %v3517, %v3517
        %v3534 = vpack.c.bf16 %v3518, %v3518
        %v3535 = vpack.c.bf16 %v3519, %v3519
        %v3536 = vpack.c.bf16 %v3520, %v3520
        %v3537 = vpack.c.bf16 %v3521, %v3521
        %v3538 = vpack.c.bf16 %v3522, %v3522
        %v3539 = vpack.c.bf16 %v3523, %v3523
        %v3540 = vpack.c.bf16 %v3524, %v3524
        %v3541 = vpack.c.bf16 %v3525, %v3525
        %v3542 = vpack.c.bf16 %v3526, %v3526
        %v3543 = vpack.c.bf16 %v3527, %v3527
        %v3544 = vpack.c.bf16 %v3528, %v3528
        %v3545 = vpack.c.bf16 %v3529, %v3529
        %v3546 = vpack.c.bf16 %v3530, %v3530
        %s3547 = scalar_lea.vmem %s134, 224 [#allocation6]
        %3548 = vst.msk [vmem:[%s3547] sm:$0x3] %vm735, %v3531
        %3549 = vst.msk [vmem:[%s3547 + $0x2] sm:$0x3] %vm735, %v3532
        %3550 = vst.msk [vmem:[%s3547 + $0x4] sm:$0x3] %vm735, %v3533
        %3551 = vst.msk [vmem:[%s3547 + $0x6] sm:$0x3] %vm735, %v3534
        %3552 = vst.msk [vmem:[%s3547 + $0x8] sm:$0x3] %vm735, %v3535
        %3553 = vst.msk [vmem:[%s3547 + $0xa] sm:$0x3] %vm735, %v3536
        %3554 = vst.msk [vmem:[%s3547 + $0xc] sm:$0x3] %vm735, %v3537
        %3555 = vst.msk [vmem:[%s3547 + $0xe] sm:$0x3] %vm735, %v3538
        %3556 = vst.msk [vmem:[%s3547 + $0x10] sm:$0x3] %vm735, %v3539
        %3557 = vst.msk [vmem:[%s3547 + $0x12] sm:$0x3] %vm735, %v3540
        %3558 = vst.msk [vmem:[%s3547 + $0x14] sm:$0x3] %vm735, %v3541
        %3559 = vst.msk [vmem:[%s3547 + $0x16] sm:$0x3] %vm735, %v3542
        %3560 = vst.msk [vmem:[%s3547 + $0x18] sm:$0x3] %vm735, %v3543
        %3561 = vst.msk [vmem:[%s3547 + $0x1a] sm:$0x3] %vm735, %v3544
        %3562 = vst.msk [vmem:[%s3547 + $0x1c] sm:$0x3] %vm735, %v3545
        %3563 = vst.msk [vmem:[%s3547 + $0x1e] sm:$0x3] %vm735, %v3546
        %s3564 = sand.u32 %s52, 1
        %s3565 = scalar_lea.sflag [#allocation5], %s3564
        %s3566 = sand.u32 %s52, 1
        %s3567 = smul.addr %s3566, 256
        %s3568 = scalar_lea.vmem [#allocation6], %s3567
        // Predicated region
        $region29: #{tpu_custom_call.1} parent=23 // pred_check
          %p3569 = pneg %p62
        $region30: #{tpu_custom_call.1} parent=23 // pred_check_branch
          %3571 = sbr.rel (%p3569) target = $region32
        $region31: #{tpu_custom_call.1} parent=23 // pred_region
          %s3573 = ssub.s32 4096, 4096
          %3574 = vsyncadd %s3565, %s3573
          %s3575 = smul.addr %s18, 128
          %s3576 = smul.addr %s3575, 32
          %s3577 = scalar_lea.hbm %s1, %s3576
          %s3578 = sshll.u32 %s3568, 4
          %s3579 = int_to_ptr.vmem [resolvable:$true] %s3578
          %3584 = dma.vmem_to_hbm [thread:$0]  %s3579, 4096, %s3577, %s3565, 32, 32, 2
        $region32: #{tpu_custom_call.1} parent=23 // pred_fallthru
          _
      $region24: #{tpu_custom_call.1} parent=5 // pred_fallthru
        _
      %p3585 = scmp.le.s32.totalorder 2, %s13
      // Predicated region
      $region33: #{tpu_custom_call.1} parent=5 // pred_check
        %p3586 = pneg %p3585
      $region34: #{tpu_custom_call.1} parent=5 // pred_check_branch
        %3588 = sbr.rel (%p3586) target = $region36
      $region35: #{tpu_custom_call.1} parent=5 // pred_region
        %s3589 = ssub.s32 %s13, 2
        // Predicated region
        $region37: #{tpu_custom_call.1} parent=35 // pred_check
          %p3590 = pneg %p68
        $region38: #{tpu_custom_call.1} parent=35 // pred_check_branch
          %3592 = sbr.rel (%p3590) target = $region40
        $region39: #{tpu_custom_call.1} parent=35 // pred_region
          %s3593 = sand.u32 %s53, 1
          %s3594 = scalar_lea.sflag [#allocation5], %s3593
          %s3595 = sand.u32 %s53, 1
          %s3596 = smul.addr %s3595, 256
          %s3597 = scalar_lea.vmem [#allocation6], %s3596
          %3598 = dma.done %s3594, 4096
        $region40: #{tpu_custom_call.1} parent=35 // pred_fallthru
          _
      $region36: #{tpu_custom_call.1} parent=5 // pred_fallthru
        _
    $region6: #{tpu_custom_call.1} parent=1 // loop_footer
      %s17 = sadd.s32 1, %s13
    $region7: #{tpu_custom_call.1} parent=1 // loop_footer_branch
      %12 = sbr.rel target = $region3
    $region8: #{tpu_custom_call.1} parent=1 // loop_exit
      _
    %3599 = vsyncpa [#allocation4], 1
    %s3600 = scalar_lea.sflag [#allocation4], 1
    %3601 = vsyncpa %s3600, 1
    %3602 = vsyncpa [#allocation5], 1
    %s3603 = scalar_lea.sflag [#allocation5], 1
    %3604 = vsyncpa %s3603, 1

</llo_original>
